<compile_context>
chip_gen: v7x
topology: tpu7x:2x2x1
jax: 0.10.0
libtpu: 0.0.40
codegen_flags: <defaults>
</compile_context>

<pallas_src>
import jax
import jax.numpy as jnp
from jax.experimental import pallas as pl
from jax.experimental.pallas import tpu as pltpu

# ------------------------------ dimensions -----------------------------------
N = 8              # nodes per graph
HIDDEN = 32        # hidden_size (D)
FFN = 32           # ffn_size (== GAT out_channels C; must equal HIDDEN)
HEADS = 2          # num_heads
B = 64             # number of graphs in the batch
GB = 16            # graphs per grid step
S = B // GB        # grid size (keep even -> balances v7x's 2 TensorCores)
GBN = GB * N       # 128 nodes per step -> lane-dense tiles
HC = HEADS * FFN   # 64
NV = 16            # packed vector-param rows
VEC_W = 128        # packed vector-param row width

EPS = 1e-5
NEG_SLOPE = 0.2
INV_SQRT2 = 0.7071067811865476

assert HIDDEN == FFN, "residual + packed FFN weights require ffn_size == hidden_size"
assert 2 * HC <= VEC_W and 9 + HEADS <= NV
assert S % 2 == 0


def _elem_dtype():
    """bf16 elementwise only where the VPU has a bf16 path (v6e / v7x)."""
    try:
        kind = jax.devices()[0].device_kind.lower()
    except Exception:
        return jnp.float32
    return jnp.bfloat16 if ("v6" in kind or "v7" in kind) else jnp.float32


ELEM_DTYPE = _elem_dtype()


# ------------------------------- Pallas kernel --------------------------------
def encoder_layer_kernel(x_ref, ew_ref, mk_ref, wlr_ref, wffn_ref, gsel_ref,
                         struct_ref, web_ref, vec_ref, o_ref, ec_ref):
    D, F, H, C = HIDDEN, FFN, HEADS, FFN
    ed = ELEM_DTYPE

    x = x_ref[...]            # [GBN, D]  f32 node features (GB graphs stacked)
    vec = vec_ref[...]        # [NV, 128] f32 packed small params
    inv_d = jnp.float32(1.0 / D)

    # ---- self_attention_norm: single-pass LayerNorm ----
    mu = jnp.sum(x, axis=-1, keepdims=True) * inv_d
    ms = jnp.sum(x * x, axis=-1, keepdims=True) * inv_d
    y = (x - mu) * jax.lax.rsqrt(ms - mu * mu + EPS) * vec[0:1, :D] + vec[1:2, :D]

    # ---- GATv2 projections: lin_l | lin_r fused into one MXU matmul ----
    xlr = jnp.dot(y.astype(jnp.bfloat16), wlr_ref[...],
                  preferred_element_type=jnp.float32) + vec[2:3, :2 * HC]   # [GBN, 2HC]
    xl = xlr[:, :HC]                        # node-major, reused by aggregation
    xlr_t = jnp.transpose(xlr)              # [2HC, GBN] channel-major (XLU)
    xl_t = xlr_t[:HC, :].astype(ed)         # [HC, GBN]
    xr_t = xlr_t[HC:, :]                    # [HC, GBN]

    # xr[dst] gathered for every (dst-local j, src s) column with one MXU matmul:
    #   xr_g[:, j*GBN + s] = xr_t[:, (s//N)*N + j]
    xr_g = jnp.dot(xr_t.astype(jnp.bfloat16), gsel_ref[...],
                   preferred_element_type=jnp.float32)          # [HC, N*GBN]

    ew = ew_ref[...]                        # [N, GBN] compact edge weights
    mk = mk_ref[...]                        # [N, GBN] additive mask (0 / -1e30)
    we_b = web_ref[...].astype(ed)          # [HC, GBN] lin_edge weight per channel
    att_m = vec[9:9 + H, :HC].astype(ed)    # [H, HC] block-diagonal att rows

    # ---- compact GATv2 pre-activation + channel contraction (no cross-graph waste)
    for j in range(N):                      # static unroll (N = 8)
        xr_j = xr_g[:, j * GBN:(j + 1) * GBN].astype(ed)        # [HC, GBN]
        ew_j = ew[j:j + 1, :].astype(ed)                        # [1, GBN]
        s_j = xl_t + xr_j + ew_j * we_b                         # [HC, GBN]
        s_j = jnp.maximum(s_j, NEG_SLOPE * s_j)                 # leaky_relu
        e_j = jnp.dot(att_m, s_j, preferred_element_type=jnp.float32)   # [H, GBN]
        for h in range(H):
            ec_ref[h * N + j:h * N + j + 1, :] = e_j[h:h + 1, :]

    # ---- per-head masked softmax on the (only-now) expanded dense plane ----
    inv_h = jnp.float32(1.0 / H)
    struct = struct_ref[...]                # [GBN, GBN] cross-graph bias (0 / -1e30)
    ec_all = ec_ref[...]                    # [H*N, GBN]
    alphas = []
    for h in range(H):
        ec = ec_all[h * N:(h + 1) * N, :] + mk                  # [N, GBN]
        dense = jnp.tile(ec, (GB, 1)) + struct                  # row d -> ec[d % N]
        m = jnp.max(dense, axis=-1, keepdims=True)
        p = jnp.exp(dense - m)
        denom = jnp.sum(p, axis=-1, keepdims=True)              # >= 1 when dst has an edge
        alphas.append(p * (pl.reciprocal(denom, approx=True) * inv_h))  # fold 1/H mean

    # ---- aggregation: heads fused into one MXU matmul [GBN, H*GBN] @ [H*GBN, C]
    alpha_cat = jnp.concatenate(alphas, axis=1).astype(jnp.bfloat16)
    xl_stack = jnp.concatenate([xl[:, h * C:(h + 1) * C] for h in range(H)],
                               axis=0).astype(jnp.bfloat16)
    gat = jnp.dot(alpha_cat, xl_stack, preferred_element_type=jnp.float32)  # [GBN, C]

    x2 = x + gat + vec[4:5, :C]             # GAT bias + residual (dropout = eval no-op)

    # ---- ffn_norm + FeedForwardNetwork: Linear -> GELU(exact) -> Linear ----
    mu2 = jnp.sum(x2, axis=-1, keepdims=True) * inv_d
    ms2 = jnp.sum(x2 * x2, axis=-1, keepdims=True) * inv_d
    y2 = (x2 - mu2) * jax.lax.rsqrt(ms2 - mu2 * mu2 + EPS) * vec[5:6, :D] + vec[6:7, :D]
    h1 = jnp.dot(y2.astype(jnp.bfloat16), wffn_ref[:, :F],
                 preferred_element_type=jnp.float32) + vec[7:8, :F]
    h1 = 0.5 * h1 * (1.0 + jax.lax.erf(h1 * INV_SQRT2))
    ffn = jnp.dot(h1.astype(jnp.bfloat16), wffn_ref[:, F:],
                  preferred_element_type=jnp.float32) + vec[8:9, :D]

    o_ref[...] = x2 + ffn                   # residual (ffn dropout = eval no-op)


# ---------------------------------- wrapper -----------------------------------
def encoder_layer(x_flat, ew_c, mask_c, wlr, wffn, gsel, struct, web, vecs):
    D = HIDDEN
    return pl.pallas_call(
        encoder_layer_kernel,
        out_shape=jax.ShapeDtypeStruct((B * N, D), jnp.float32),
        grid=(S,),
        in_specs=[
            pl.BlockSpec((GBN, D), lambda i: (i, 0)),               # node features
            pl.BlockSpec((None, N, GBN), lambda i: (i, 0, 0)),      # compact edge weights
            pl.BlockSpec((None, N, GBN), lambda i: (i, 0, 0)),      # compact additive mask
            pl.BlockSpec((D, 2 * HC), lambda i: (0, 0)),            # wlr   (resident)
            pl.BlockSpec((HIDDEN, FFN + HIDDEN), lambda i: (0, 0)),  # wffn (resident)
            pl.BlockSpec((GBN, N * GBN), lambda i: (0, 0)),         # gather selection mat
            pl.BlockSpec((GBN, GBN), lambda i: (0, 0)),             # cross-graph bias
            pl.BlockSpec((HC, GBN), lambda i: (0, 0)),              # lin_edge weight bcast
            pl.BlockSpec((NV, VEC_W), lambda i: (0, 0)),            # packed vectors
        ],
        out_specs=pl.BlockSpec((GBN, D), lambda i: (i, 0)),
        scratch_shapes=[pltpu.VMEM((HEADS * N, GBN), jnp.float32)],  # compact logits
        compiler_params=pltpu.CompilerParams(
            dimension_semantics=("parallel",),          # shard graph-groups over TCs
            vmem_limit_bytes=16 * 1024 * 1024),         # real footprint ~2 MiB
    )(x_flat, ew_c, mask_c, wlr, wffn, gsel, struct, web, vecs)


# ------------------ pure-JAX reference (PyG GATv2 semantics) ------------------
def reference_graph(x, edge_index, edge_weight, params):
    (g1, b1, wl, bl, wr, br, we, att, gb, g2, b2, w1, bb1, w2, bb2) = params
    H, C = att.shape
    src, dst = edge_index[0], edge_index[1]
    n = x.shape[0]

    def ln(v, g, b):
        mu = v.mean(-1, keepdims=True)
        var = ((v - mu) ** 2).mean(-1, keepdims=True)
        return (v - mu) / jnp.sqrt(var + EPS) * g + b

    y = ln(x, g1, b1)
    xl = (y @ wl + bl).reshape(n, H, C)
    xr = (y @ wr + br).reshape(n, H, C)
    ee = (edge_weight.reshape(-1, 1) @ we).reshape(-1, H, C)
    s = xl[src] + xr[dst] + ee
    s = jnp.where(s > 0, s, NEG_SLOPE * s)
    logit = (s * att[None]).sum(-1)                                   # [E, H]
    m = jax.ops.segment_max(logit, dst, num_segments=n)
    p = jnp.exp(logit - m[dst])
    denom = jax.ops.segment_sum(p, dst, num_segments=n)
    alpha = p / denom[dst]
    out = jax.ops.segment_sum(xl[src] * alpha[..., None], dst, num_segments=n)
    gat = out.mean(1) + gb[0]
    x2 = x + gat
    y2 = ln(x2, g2, b2)
    h1 = y2 @ w1 + bb1
    h1 = 0.5 * h1 * (1.0 + jax.lax.erf(h1 * INV_SQRT2))
    return x2 + (h1 @ w2 + bb2)


# ------------------------------------ main -------------------------------------
if __name__ == "__main__":
    key = jax.random.PRNGKey(0)
    ks = jax.random.split(key, 20)
    D, F, H, C = HIDDEN, FFN, HEADS, FFN

    # batch of graphs: node features [B, N, D]
    x_b = jax.random.normal(ks[0], (B, N, D), jnp.float32)

    # shared topology: every node has 2 incoming edges (no dups, no self loops)
    src = jnp.array([i for i in range(N)] + [(i + 2) % N for i in range(N)], jnp.int32)
    dst = jnp.array([(i + 1) % N for i in range(N)] + [i for i in range(N)], jnp.int32)
    edge_index = jnp.stack([src, dst], axis=0)                     # [2, E]
    E = edge_index.shape[1]
    edge_weight_b = jax.random.uniform(ks[1], (B, E), jnp.float32)

    # deterministic parameter init (shapes from the module's __init__)
    sc = 0.1
    g1 = 1.0 + sc * jax.random.normal(ks[2], (1, D), jnp.float32)
    b1 = sc * jax.random.normal(ks[3], (1, D), jnp.float32)
    wl = sc * jax.random.normal(ks[4], (D, H * C), jnp.float32)
    bl = sc * jax.random.normal(ks[5], (1, H * C), jnp.float32)
    wr = sc * jax.random.normal(ks[6], (D, H * C), jnp.float32)
    br = sc * jax.random.normal(ks[7], (1, H * C), jnp.float32)
    we = sc * jax.random.normal(ks[8], (1, H * C), jnp.float32)     # lin_edge (edge_dim=1)
    att = sc * jax.random.normal(ks[9], (H, C), jnp.float32)
    gb = sc * jax.random.normal(ks[10], (1, C), jnp.float32)        # GAT bias (concat=False)
    g2 = 1.0 + sc * jax.random.normal(ks[11], (1, D), jnp.float32)
    b2 = sc * jax.random.normal(ks[12], (1, D), jnp.float32)
    w1 = sc * jax.random.normal(ks[13], (D, F), jnp.float32)
    bb1 = sc * jax.random.normal(ks[14], (1, F), jnp.float32)
    w2 = sc * jax.random.normal(ks[15], (F, D), jnp.float32)
    bb2 = sc * jax.random.normal(ks[16], (1, D), jnp.float32)
    params = (g1, b1, wl, bl, wr, br, we, att, gb, g2, b2, w1, bb1, w2, bb2)

    # ---- pack parameters into resident kernel buffers ----
    wlr = jnp.concatenate([wl, wr], axis=1).astype(jnp.bfloat16)    # [32, 128]
    wffn = jnp.concatenate([w1, w2], axis=1).astype(jnp.bfloat16)   # [32, 64]
    vecs = jnp.zeros((NV, VEC_W), jnp.float32)
    vecs = vecs.at[0, :D].set(g1[0])
    vecs = vecs.at[1, :D].set(b1[0])
    vecs = vecs.at[2, :2 * HC].set(jnp.concatenate([bl[0], br[0]]))
    vecs = vecs.at[4, :C].set(gb[0])
    vecs = vecs.at[5, :D].set(g2[0])
    vecs = vecs.at[6, :D].set(b2[0])
    vecs = vecs.at[7, :F].set(bb1[0])
    vecs = vecs.at[8, :D].set(bb2[0])
    for h in range(H):                                  # block-diagonal att rows [H, HC]
        vecs = vecs.at[9 + h, h * C:(h + 1) * C].set(att[h])
    web = jnp.broadcast_to(we[0][:, None], (HC, GBN)).astype(jnp.float32)   # [64, 128]

    # ---- compact per-step edge tables [S, dst-local j, src-global s] ----
    # entry (t, j, s) refers to the edge  src = s  ->  dst = (s // N) * N + j
    adj_g = jnp.zeros((B, N, N), jnp.float32).at[:, dst, src].set(1.0)
    ew_g = jnp.zeros((B, N, N), jnp.float32).at[:, dst, src].set(edge_weight_b)
    adj_c = adj_g.reshape(S, GB, N, N).transpose(0, 2, 1, 3).reshape(S, N, GBN)
    ew_c = ew_g.reshape(S, GB, N, N).transpose(0, 2, 1, 3).reshape(S, N, GBN)
    mask_c = jnp.where(adj_c > 0, 0.0, -1e30).astype(jnp.float32)

    # resident constants: xr gather-selection matrix + cross-graph additive bias
    d_idx = jnp.arange(GBN)[:, None]
    col = jnp.arange(N * GBN)[None, :]
    jloc = col // GBN
    sglob = col % GBN
    gsel = (d_idx == (sglob // N) * N + jloc).astype(jnp.bfloat16)          # [128, 1024]
    gd = jnp.arange(GBN)[:, None] // N
    gs = jnp.arange(GBN)[None, :] // N
    struct = jnp.where(gd == gs, 0.0, -1e30).astype(jnp.float32)            # [128, 128]

    x_flat = x_b.reshape(B * N, D)

    out = encoder_layer(x_flat, ew_c, mask_c, wlr, wffn, gsel, struct, web, vecs)
    out = jax.block_until_ready(out)

    # reference: per-graph pure-JAX (f32) vmapped over the batch
    ref = jax.vmap(lambda xg, ewg: reference_graph(xg, edge_index, ewg, params))(
        x_b, edge_weight_b).reshape(B * N, D)

    assert out.shape == (B * N, D)
    assert jnp.all(jnp.isfinite(out))
    # bf16 MXU operands + bf16 elementwise attention path (v6e/v7x) + approx
    # reciprocal -> compare at a bf16-kernel tolerance
    assert jnp.allclose(out, ref, rtol=3e-2, atol=3e-2), (
        f"max abs diff {jnp.max(jnp.abs(out - ref))}")

    print("KERNEL_OK")
</pallas_src>

<mosaic_0001>
module attributes {stable_mosaic.version = 11 : i64} {
  func.func @encoder_layer_kernel(%arg0: i32, %arg1: memref<128x32xf32, #tpu.memory_space<vmem>>, %arg2: memref<1x8x128xf32, #tpu.memory_space<vmem>>, %arg3: memref<1x8x128xf32, #tpu.memory_space<vmem>>, %arg4: memref<32x128xbf16, #tpu.memory_space<vmem>>, %arg5: memref<32x64xbf16, #tpu.memory_space<vmem>>, %arg6: memref<128x1024xbf16, #tpu.memory_space<vmem>>, %arg7: memref<128x128xf32, #tpu.memory_space<vmem>>, %arg8: memref<64x128xf32, #tpu.memory_space<vmem>>, %arg9: memref<16x128xf32, #tpu.memory_space<vmem>>, %arg10: memref<128x32xf32, #tpu.memory_space<vmem>>, %arg11: memref<16x128xf32, #tpu.memory_space<vmem>>) attributes {dimension_semantics = [#tpu.dimension_semantics<parallel>], iteration_bounds = array<i64: 4>, scalar_prefetch = 0 : i64, scratch_operands = 1 : i64, tpu.core_type = #tpu.core_type<tc>, window_params = [{transform_indices = @transform_0, window_bounds = array<i64: 128, 32>}, {transform_indices = @transform_1, window_bounds = array<i64: 1, 8, 128>}, {transform_indices = @transform_2, window_bounds = array<i64: 1, 8, 128>}, {pipeline_mode = #tpu.pipeline_mode<synchronous>, transform_indices = @transform_3, window_bounds = array<i64: 32, 128>}, {pipeline_mode = #tpu.pipeline_mode<synchronous>, transform_indices = @transform_4, window_bounds = array<i64: 32, 64>}, {pipeline_mode = #tpu.pipeline_mode<synchronous>, transform_indices = @transform_5, window_bounds = array<i64: 128, 1024>}, {pipeline_mode = #tpu.pipeline_mode<synchronous>, transform_indices = @transform_6, window_bounds = array<i64: 128, 128>}, {pipeline_mode = #tpu.pipeline_mode<synchronous>, transform_indices = @transform_7, window_bounds = array<i64: 64, 128>}, {pipeline_mode = #tpu.pipeline_mode<synchronous>, transform_indices = @transform_8, window_bounds = array<i64: 16, 128>}, {transform_indices = @transform_9, window_bounds = array<i64: 128, 32>}]} {
    %c0 = arith.constant 0 : index
    %c0_0 = arith.constant 0 : index
    %0 = vector.load %arg1[%c0, %c0_0] : memref<128x32xf32, #tpu.memory_space<vmem>>, vector<128x32xf32>
    %c0_1 = arith.constant 0 : index
    %c0_2 = arith.constant 0 : index
    %1 = vector.load %arg9[%c0_1, %c0_2] : memref<16x128xf32, #tpu.memory_space<vmem>>, vector<16x128xf32>
    %cst = arith.constant dense<0.000000e+00> : vector<128xf32>
    %2 = vector.multi_reduction <add>, %0, %cst [1] : vector<128x32xf32> to vector<128xf32>
    %3 = vector.shape_cast %2 : vector<128xf32> to vector<128x1xf32>
    %cst_3 = arith.constant 3.125000e-02 : f32
    %4 = vector.broadcast %cst_3 : f32 to vector<128x1xf32>
    %5 = arith.mulf %3, %4 : vector<128x1xf32>
    %6 = arith.mulf %0, %0 : vector<128x32xf32>
    %cst_4 = arith.constant dense<0.000000e+00> : vector<128xf32>
    %7 = vector.multi_reduction <add>, %6, %cst_4 [1] : vector<128x32xf32> to vector<128xf32>
    %8 = vector.shape_cast %7 : vector<128xf32> to vector<128x1xf32>
    %cst_5 = arith.constant 3.125000e-02 : f32
    %9 = vector.broadcast %cst_5 : f32 to vector<128x1xf32>
    %10 = arith.mulf %8, %9 : vector<128x1xf32>
    %11 = vector.broadcast %5 : vector<128x1xf32> to vector<128x32xf32>
    %12 = arith.subf %0, %11 : vector<128x32xf32>
    %13 = arith.mulf %5, %5 : vector<128x1xf32>
    %14 = arith.subf %10, %13 : vector<128x1xf32>
    %cst_6 = arith.constant 9.99999974E-6 : f32
    %15 = vector.broadcast %cst_6 : f32 to vector<128x1xf32>
    %16 = arith.addf %14, %15 : vector<128x1xf32>
    %17 = math.rsqrt %16 : vector<128x1xf32>
    %18 = vector.broadcast %17 : vector<128x1xf32> to vector<128x32xf32>
    %19 = arith.mulf %12, %18 : vector<128x32xf32>
    %20 = vector.extract_strided_slice %1 {offsets = [0, 0], sizes = [1, 32], strides = [1, 1]} : vector<16x128xf32> to vector<1x32xf32>
    %21 = vector.broadcast %20 : vector<1x32xf32> to vector<128x32xf32>
    %22 = arith.mulf %19, %21 : vector<128x32xf32>
    %23 = vector.extract_strided_slice %1 {offsets = [1, 0], sizes = [1, 32], strides = [1, 1]} : vector<16x128xf32> to vector<1x32xf32>
    %24 = vector.broadcast %23 : vector<1x32xf32> to vector<128x32xf32>
    %25 = arith.addf %22, %24 : vector<128x32xf32>
    %26 = arith.truncf %25 : vector<128x32xf32> to vector<128x32xbf16>
    %c0_7 = arith.constant 0 : index
    %c0_8 = arith.constant 0 : index
    %27 = vector.load %arg4[%c0_7, %c0_8] : memref<32x128xbf16, #tpu.memory_space<vmem>>, vector<32x128xbf16>
    %cst_9 = arith.constant dense<0.000000e+00> : vector<128x128xf32>
    %28 = tpu.matmul %26, %27, %cst_9 {dimension_numbers = #tpu.dot_dimension_numbers<[1], [0], [0], [1], [0, 0, 1, 1], [], []>} : vector<128x32xbf16>, vector<32x128xbf16>, vector<128x128xf32> -> vector<128x128xf32>
    %29 = vector.extract_strided_slice %1 {offsets = [2, 0], sizes = [1, 128], strides = [1, 1]} : vector<16x128xf32> to vector<1x128xf32>
    %30 = vector.broadcast %29 : vector<1x128xf32> to vector<128x128xf32>
    %31 = arith.addf %28, %30 : vector<128x128xf32>
    %32 = vector.extract_strided_slice %31 {offsets = [0, 0], sizes = [128, 64], strides = [1, 1]} : vector<128x128xf32> to vector<128x64xf32>
    %33 = tpu.transpose %31, [1, 0] : vector<128x128xf32> -> vector<128x128xf32>
    %34 = vector.extract_strided_slice %33 {offsets = [0, 0], sizes = [64, 128], strides = [1, 1]} : vector<128x128xf32> to vector<64x128xf32>
    %35 = vector.extract_strided_slice %33 {offsets = [64, 0], sizes = [64, 128], strides = [1, 1]} : vector<128x128xf32> to vector<64x128xf32>
    %36 = arith.truncf %35 : vector<64x128xf32> to vector<64x128xbf16>
    %c0_10 = arith.constant 0 : index
    %c0_11 = arith.constant 0 : index
    %37 = vector.load %arg6[%c0_10, %c0_11] : memref<128x1024xbf16, #tpu.memory_space<vmem>>, vector<128x1024xbf16>
    %cst_12 = arith.constant dense<0.000000e+00> : vector<64x1024xf32>
    %38 = tpu.matmul %36, %37, %cst_12 {dimension_numbers = #tpu.dot_dimension_numbers<[1], [0], [0], [1], [0, 0, 1, 1], [], []>} : vector<64x128xbf16>, vector<128x1024xbf16>, vector<64x1024xf32> -> vector<64x1024xf32>
    %c0_13 = arith.constant 0 : index
    %c0_14 = arith.constant 0 : index
    %c0_15 = arith.constant 0 : index
    %39 = vector.load %arg2[%c0_13, %c0_14, %c0_15] : memref<1x8x128xf32, #tpu.memory_space<vmem>>, vector<1x8x128xf32>
    %40 = vector.shape_cast %39 : vector<1x8x128xf32> to vector<8x128xf32>
    %c0_16 = arith.constant 0 : index
    %c0_17 = arith.constant 0 : index
    %c0_18 = arith.constant 0 : index
    %41 = vector.load %arg3[%c0_16, %c0_17, %c0_18] : memref<1x8x128xf32, #tpu.memory_space<vmem>>, vector<1x8x128xf32>
    %42 = vector.shape_cast %41 : vector<1x8x128xf32> to vector<8x128xf32>
    %c0_19 = arith.constant 0 : index
    %c0_20 = arith.constant 0 : index
    %43 = vector.load %arg8[%c0_19, %c0_20] : memref<64x128xf32, #tpu.memory_space<vmem>>, vector<64x128xf32>
    %44 = vector.extract_strided_slice %1 {offsets = [9, 0], sizes = [2, 64], strides = [1, 1]} : vector<16x128xf32> to vector<2x64xf32>
    %45 = vector.extract_strided_slice %38 {offsets = [0, 0], sizes = [64, 128], strides = [1, 1]} : vector<64x1024xf32> to vector<64x128xf32>
    %46 = vector.extract_strided_slice %40 {offsets = [0, 0], sizes = [1, 128], strides = [1, 1]} : vector<8x128xf32> to vector<1x128xf32>
    %47 = arith.addf %34, %45 : vector<64x128xf32>
    %48 = vector.broadcast %46 : vector<1x128xf32> to vector<64x128xf32>
    %49 = arith.mulf %48, %43 : vector<64x128xf32>
    %50 = arith.addf %47, %49 : vector<64x128xf32>
    %cst_21 = arith.constant 2.000000e-01 : f32
    %51 = vector.broadcast %cst_21 : f32 to vector<64x128xf32>
    %52 = arith.mulf %51, %50 : vector<64x128xf32>
    %53 = arith.maximumf %50, %52 : vector<64x128xf32>
    %cst_22 = arith.constant dense<0.000000e+00> : vector<2x128xf32>
    %54 = tpu.matmul %44, %53, %cst_22 {dimension_numbers = #tpu.dot_dimension_numbers<[1], [0], [0], [1], [0, 0, 1, 1], [], []>} : vector<2x64xf32>, vector<64x128xf32>, vector<2x128xf32> -> vector<2x128xf32>
    %55 = vector.extract_strided_slice %54 {offsets = [0, 0], sizes = [1, 128], strides = [1, 1]} : vector<2x128xf32> to vector<1x128xf32>
    %c0_23 = arith.constant 0 : index
    %c0_24 = arith.constant 0 : index
    %56 = vector.load %arg11[%c0_23, %c0_24] : memref<16x128xf32, #tpu.memory_space<vmem>>, vector<1x128xf32>
    tpu.vector_store %arg11[%c0_23, %c0_24], %55 {strides = array<i32>} : memref<16x128xf32, #tpu.memory_space<vmem>>, vector<1x128xf32>,
    %57 = vector.extract_strided_slice %54 {offsets = [1, 0], sizes = [1, 128], strides = [1, 1]} : vector<2x128xf32> to vector<1x128xf32>
    %c8 = arith.constant 8 : index
    %c0_25 = arith.constant 0 : index
    %58 = vector.load %arg11[%c8, %c0_25] : memref<16x128xf32, #tpu.memory_space<vmem>>, vector<1x128xf32>
    tpu.vector_store %arg11[%c8, %c0_25], %57 {strides = array<i32>} : memref<16x128xf32, #tpu.memory_space<vmem>>, vector<1x128xf32>,
    %59 = vector.extract_strided_slice %38 {offsets = [0, 128], sizes = [64, 128], strides = [1, 1]} : vector<64x1024xf32> to vector<64x128xf32>
    %60 = vector.extract_strided_slice %40 {offsets = [1, 0], sizes = [1, 128], strides = [1, 1]} : vector<8x128xf32> to vector<1x128xf32>
    %61 = arith.addf %34, %59 : vector<64x128xf32>
    %62 = vector.broadcast %60 : vector<1x128xf32> to vector<64x128xf32>
    %63 = arith.mulf %62, %43 : vector<64x128xf32>
    %64 = arith.addf %61, %63 : vector<64x128xf32>
    %cst_26 = arith.constant 2.000000e-01 : f32
    %65 = vector.broadcast %cst_26 : f32 to vector<64x128xf32>
    %66 = arith.mulf %65, %64 : vector<64x128xf32>
    %67 = arith.maximumf %64, %66 : vector<64x128xf32>
    %cst_27 = arith.constant dense<0.000000e+00> : vector<2x128xf32>
    %68 = tpu.matmul %44, %67, %cst_27 {dimension_numbers = #tpu.dot_dimension_numbers<[1], [0], [0], [1], [0, 0, 1, 1], [], []>} : vector<2x64xf32>, vector<64x128xf32>, vector<2x128xf32> -> vector<2x128xf32>
    %69 = vector.extract_strided_slice %68 {offsets = [0, 0], sizes = [1, 128], strides = [1, 1]} : vector<2x128xf32> to vector<1x128xf32>
    %c1 = arith.constant 1 : index
    %c0_28 = arith.constant 0 : index
    %70 = vector.load %arg11[%c1, %c0_28] : memref<16x128xf32, #tpu.memory_space<vmem>>, vector<1x128xf32>
    tpu.vector_store %arg11[%c1, %c0_28], %69 {strides = array<i32>} : memref<16x128xf32, #tpu.memory_space<vmem>>, vector<1x128xf32>,
    %71 = vector.extract_strided_slice %68 {offsets = [1, 0], sizes = [1, 128], strides = [1, 1]} : vector<2x128xf32> to vector<1x128xf32>
    %c9 = arith.constant 9 : index
    %c0_29 = arith.constant 0 : index
    %72 = vector.load %arg11[%c9, %c0_29] : memref<16x128xf32, #tpu.memory_space<vmem>>, vector<1x128xf32>
    tpu.vector_store %arg11[%c9, %c0_29], %71 {strides = array<i32>} : memref<16x128xf32, #tpu.memory_space<vmem>>, vector<1x128xf32>,
    %73 = vector.extract_strided_slice %38 {offsets = [0, 256], sizes = [64, 128], strides = [1, 1]} : vector<64x1024xf32> to vector<64x128xf32>
    %74 = vector.extract_strided_slice %40 {offsets = [2, 0], sizes = [1, 128], strides = [1, 1]} : vector<8x128xf32> to vector<1x128xf32>
    %75 = arith.addf %34, %73 : vector<64x128xf32>
    %76 = vector.broadcast %74 : vector<1x128xf32> to vector<64x128xf32>
    %77 = arith.mulf %76, %43 : vector<64x128xf32>
    %78 = arith.addf %75, %77 : vector<64x128xf32>
    %cst_30 = arith.constant 2.000000e-01 : f32
    %79 = vector.broadcast %cst_30 : f32 to vector<64x128xf32>
    %80 = arith.mulf %79, %78 : vector<64x128xf32>
    %81 = arith.maximumf %78, %80 : vector<64x128xf32>
    %cst_31 = arith.constant dense<0.000000e+00> : vector<2x128xf32>
    %82 = tpu.matmul %44, %81, %cst_31 {dimension_numbers = #tpu.dot_dimension_numbers<[1], [0], [0], [1], [0, 0, 1, 1], [], []>} : vector<2x64xf32>, vector<64x128xf32>, vector<2x128xf32> -> vector<2x128xf32>
    %83 = vector.extract_strided_slice %82 {offsets = [0, 0], sizes = [1, 128], strides = [1, 1]} : vector<2x128xf32> to vector<1x128xf32>
    %c2 = arith.constant 2 : index
    %c0_32 = arith.constant 0 : index
    %84 = vector.load %arg11[%c2, %c0_32] : memref<16x128xf32, #tpu.memory_space<vmem>>, vector<1x128xf32>
    tpu.vector_store %arg11[%c2, %c0_32], %83 {strides = array<i32>} : memref<16x128xf32, #tpu.memory_space<vmem>>, vector<1x128xf32>,
    %85 = vector.extract_strided_slice %82 {offsets = [1, 0], sizes = [1, 128], strides = [1, 1]} : vector<2x128xf32> to vector<1x128xf32>
    %c10 = arith.constant 10 : index
    %c0_33 = arith.constant 0 : index
    %86 = vector.load %arg11[%c10, %c0_33] : memref<16x128xf32, #tpu.memory_space<vmem>>, vector<1x128xf32>
    tpu.vector_store %arg11[%c10, %c0_33], %85 {strides = array<i32>} : memref<16x128xf32, #tpu.memory_space<vmem>>, vector<1x128xf32>,
    %87 = vector.extract_strided_slice %38 {offsets = [0, 384], sizes = [64, 128], strides = [1, 1]} : vector<64x1024xf32> to vector<64x128xf32>
    %88 = vector.extract_strided_slice %40 {offsets = [3, 0], sizes = [1, 128], strides = [1, 1]} : vector<8x128xf32> to vector<1x128xf32>
    %89 = arith.addf %34, %87 : vector<64x128xf32>
    %90 = vector.broadcast %88 : vector<1x128xf32> to vector<64x128xf32>
    %91 = arith.mulf %90, %43 : vector<64x128xf32>
    %92 = arith.addf %89, %91 : vector<64x128xf32>
    %cst_34 = arith.constant 2.000000e-01 : f32
    %93 = vector.broadcast %cst_34 : f32 to vector<64x128xf32>
    %94 = arith.mulf %93, %92 : vector<64x128xf32>
    %95 = arith.maximumf %92, %94 : vector<64x128xf32>
    %cst_35 = arith.constant dense<0.000000e+00> : vector<2x128xf32>
    %96 = tpu.matmul %44, %95, %cst_35 {dimension_numbers = #tpu.dot_dimension_numbers<[1], [0], [0], [1], [0, 0, 1, 1], [], []>} : vector<2x64xf32>, vector<64x128xf32>, vector<2x128xf32> -> vector<2x128xf32>
    %97 = vector.extract_strided_slice %96 {offsets = [0, 0], sizes = [1, 128], strides = [1, 1]} : vector<2x128xf32> to vector<1x128xf32>
    %c3 = arith.constant 3 : index
    %c0_36 = arith.constant 0 : index
    %98 = vector.load %arg11[%c3, %c0_36] : memref<16x128xf32, #tpu.memory_space<vmem>>, vector<1x128xf32>
    tpu.vector_store %arg11[%c3, %c0_36], %97 {strides = array<i32>} : memref<16x128xf32, #tpu.memory_space<vmem>>, vector<1x128xf32>,
    %99 = vector.extract_strided_slice %96 {offsets = [1, 0], sizes = [1, 128], strides = [1, 1]} : vector<2x128xf32> to vector<1x128xf32>
    %c11 = arith.constant 11 : index
    %c0_37 = arith.constant 0 : index
    %100 = vector.load %arg11[%c11, %c0_37] : memref<16x128xf32, #tpu.memory_space<vmem>>, vector<1x128xf32>
    tpu.vector_store %arg11[%c11, %c0_37], %99 {strides = array<i32>} : memref<16x128xf32, #tpu.memory_space<vmem>>, vector<1x128xf32>,
    %101 = vector.extract_strided_slice %38 {offsets = [0, 512], sizes = [64, 128], strides = [1, 1]} : vector<64x1024xf32> to vector<64x128xf32>
    %102 = vector.extract_strided_slice %40 {offsets = [4, 0], sizes = [1, 128], strides = [1, 1]} : vector<8x128xf32> to vector<1x128xf32>
    %103 = arith.addf %34, %101 : vector<64x128xf32>
    %104 = vector.broadcast %102 : vector<1x128xf32> to vector<64x128xf32>
    %105 = arith.mulf %104, %43 : vector<64x128xf32>
    %106 = arith.addf %103, %105 : vector<64x128xf32>
    %cst_38 = arith.constant 2.000000e-01 : f32
    %107 = vector.broadcast %cst_38 : f32 to vector<64x128xf32>
    %108 = arith.mulf %107, %106 : vector<64x128xf32>
    %109 = arith.maximumf %106, %108 : vector<64x128xf32>
    %cst_39 = arith.constant dense<0.000000e+00> : vector<2x128xf32>
    %110 = tpu.matmul %44, %109, %cst_39 {dimension_numbers = #tpu.dot_dimension_numbers<[1], [0], [0], [1], [0, 0, 1, 1], [], []>} : vector<2x64xf32>, vector<64x128xf32>, vector<2x128xf32> -> vector<2x128xf32>
    %111 = vector.extract_strided_slice %110 {offsets = [0, 0], sizes = [1, 128], strides = [1, 1]} : vector<2x128xf32> to vector<1x128xf32>
    %c4 = arith.constant 4 : index
    %c0_40 = arith.constant 0 : index
    %112 = vector.load %arg11[%c4, %c0_40] : memref<16x128xf32, #tpu.memory_space<vmem>>, vector<1x128xf32>
    tpu.vector_store %arg11[%c4, %c0_40], %111 {strides = array<i32>} : memref<16x128xf32, #tpu.memory_space<vmem>>, vector<1x128xf32>,
    %113 = vector.extract_strided_slice %110 {offsets = [1, 0], sizes = [1, 128], strides = [1, 1]} : vector<2x128xf32> to vector<1x128xf32>
    %c12 = arith.constant 12 : index
    %c0_41 = arith.constant 0 : index
    %114 = vector.load %arg11[%c12, %c0_41] : memref<16x128xf32, #tpu.memory_space<vmem>>, vector<1x128xf32>
    tpu.vector_store %arg11[%c12, %c0_41], %113 {strides = array<i32>} : memref<16x128xf32, #tpu.memory_space<vmem>>, vector<1x128xf32>,
    %115 = vector.extract_strided_slice %38 {offsets = [0, 640], sizes = [64, 128], strides = [1, 1]} : vector<64x1024xf32> to vector<64x128xf32>
    %116 = vector.extract_strided_slice %40 {offsets = [5, 0], sizes = [1, 128], strides = [1, 1]} : vector<8x128xf32> to vector<1x128xf32>
    %117 = arith.addf %34, %115 : vector<64x128xf32>
    %118 = vector.broadcast %116 : vector<1x128xf32> to vector<64x128xf32>
    %119 = arith.mulf %118, %43 : vector<64x128xf32>
    %120 = arith.addf %117, %119 : vector<64x128xf32>
    %cst_42 = arith.constant 2.000000e-01 : f32
    %121 = vector.broadcast %cst_42 : f32 to vector<64x128xf32>
    %122 = arith.mulf %121, %120 : vector<64x128xf32>
    %123 = arith.maximumf %120, %122 : vector<64x128xf32>
    %cst_43 = arith.constant dense<0.000000e+00> : vector<2x128xf32>
    %124 = tpu.matmul %44, %123, %cst_43 {dimension_numbers = #tpu.dot_dimension_numbers<[1], [0], [0], [1], [0, 0, 1, 1], [], []>} : vector<2x64xf32>, vector<64x128xf32>, vector<2x128xf32> -> vector<2x128xf32>
    %125 = vector.extract_strided_slice %124 {offsets = [0, 0], sizes = [1, 128], strides = [1, 1]} : vector<2x128xf32> to vector<1x128xf32>
    %c5 = arith.constant 5 : index
    %c0_44 = arith.constant 0 : index
    %126 = vector.load %arg11[%c5, %c0_44] : memref<16x128xf32, #tpu.memory_space<vmem>>, vector<1x128xf32>
    tpu.vector_store %arg11[%c5, %c0_44], %125 {strides = array<i32>} : memref<16x128xf32, #tpu.memory_space<vmem>>, vector<1x128xf32>,
    %127 = vector.extract_strided_slice %124 {offsets = [1, 0], sizes = [1, 128], strides = [1, 1]} : vector<2x128xf32> to vector<1x128xf32>
    %c13 = arith.constant 13 : index
    %c0_45 = arith.constant 0 : index
    %128 = vector.load %arg11[%c13, %c0_45] : memref<16x128xf32, #tpu.memory_space<vmem>>, vector<1x128xf32>
    tpu.vector_store %arg11[%c13, %c0_45], %127 {strides = array<i32>} : memref<16x128xf32, #tpu.memory_space<vmem>>, vector<1x128xf32>,
    %129 = vector.extract_strided_slice %38 {offsets = [0, 768], sizes = [64, 128], strides = [1, 1]} : vector<64x1024xf32> to vector<64x128xf32>
    %130 = vector.extract_strided_slice %40 {offsets = [6, 0], sizes = [1, 128], strides = [1, 1]} : vector<8x128xf32> to vector<1x128xf32>
    %131 = arith.addf %34, %129 : vector<64x128xf32>
    %132 = vector.broadcast %130 : vector<1x128xf32> to vector<64x128xf32>
    %133 = arith.mulf %132, %43 : vector<64x128xf32>
    %134 = arith.addf %131, %133 : vector<64x128xf32>
    %cst_46 = arith.constant 2.000000e-01 : f32
    %135 = vector.broadcast %cst_46 : f32 to vector<64x128xf32>
    %136 = arith.mulf %135, %134 : vector<64x128xf32>
    %137 = arith.maximumf %134, %136 : vector<64x128xf32>
    %cst_47 = arith.constant dense<0.000000e+00> : vector<2x128xf32>
    %138 = tpu.matmul %44, %137, %cst_47 {dimension_numbers = #tpu.dot_dimension_numbers<[1], [0], [0], [1], [0, 0, 1, 1], [], []>} : vector<2x64xf32>, vector<64x128xf32>, vector<2x128xf32> -> vector<2x128xf32>
    %139 = vector.extract_strided_slice %138 {offsets = [0, 0], sizes = [1, 128], strides = [1, 1]} : vector<2x128xf32> to vector<1x128xf32>
    %c6 = arith.constant 6 : index
    %c0_48 = arith.constant 0 : index
    %140 = vector.load %arg11[%c6, %c0_48] : memref<16x128xf32, #tpu.memory_space<vmem>>, vector<1x128xf32>
    tpu.vector_store %arg11[%c6, %c0_48], %139 {strides = array<i32>} : memref<16x128xf32, #tpu.memory_space<vmem>>, vector<1x128xf32>,
    %141 = vector.extract_strided_slice %138 {offsets = [1, 0], sizes = [1, 128], strides = [1, 1]} : vector<2x128xf32> to vector<1x128xf32>
    %c14 = arith.constant 14 : index
    %c0_49 = arith.constant 0 : index
    %142 = vector.load %arg11[%c14, %c0_49] : memref<16x128xf32, #tpu.memory_space<vmem>>, vector<1x128xf32>
    tpu.vector_store %arg11[%c14, %c0_49], %141 {strides = array<i32>} : memref<16x128xf32, #tpu.memory_space<vmem>>, vector<1x128xf32>,
    %143 = vector.extract_strided_slice %38 {offsets = [0, 896], sizes = [64, 128], strides = [1, 1]} : vector<64x1024xf32> to vector<64x128xf32>
    %144 = vector.extract_strided_slice %40 {offsets = [7, 0], sizes = [1, 128], strides = [1, 1]} : vector<8x128xf32> to vector<1x128xf32>
    %145 = arith.addf %34, %143 : vector<64x128xf32>
    %146 = vector.broadcast %144 : vector<1x128xf32> to vector<64x128xf32>
    %147 = arith.mulf %146, %43 : vector<64x128xf32>
    %148 = arith.addf %145, %147 : vector<64x128xf32>
    %cst_50 = arith.constant 2.000000e-01 : f32
    %149 = vector.broadcast %cst_50 : f32 to vector<64x128xf32>
    %150 = arith.mulf %149, %148 : vector<64x128xf32>
    %151 = arith.maximumf %148, %150 : vector<64x128xf32>
    %cst_51 = arith.constant dense<0.000000e+00> : vector<2x128xf32>
    %152 = tpu.matmul %44, %151, %cst_51 {dimension_numbers = #tpu.dot_dimension_numbers<[1], [0], [0], [1], [0, 0, 1, 1], [], []>} : vector<2x64xf32>, vector<64x128xf32>, vector<2x128xf32> -> vector<2x128xf32>
    %153 = vector.extract_strided_slice %152 {offsets = [0, 0], sizes = [1, 128], strides = [1, 1]} : vector<2x128xf32> to vector<1x128xf32>
    %c7 = arith.constant 7 : index
    %c0_52 = arith.constant 0 : index
    %154 = vector.load %arg11[%c7, %c0_52] : memref<16x128xf32, #tpu.memory_space<vmem>>, vector<1x128xf32>
    tpu.vector_store %arg11[%c7, %c0_52], %153 {strides = array<i32>} : memref<16x128xf32, #tpu.memory_space<vmem>>, vector<1x128xf32>,
    %155 = vector.extract_strided_slice %152 {offsets = [1, 0], sizes = [1, 128], strides = [1, 1]} : vector<2x128xf32> to vector<1x128xf32>
    %c15 = arith.constant 15 : index
    %c0_53 = arith.constant 0 : index
    %156 = vector.load %arg11[%c15, %c0_53] : memref<16x128xf32, #tpu.memory_space<vmem>>, vector<1x128xf32>
    tpu.vector_store %arg11[%c15, %c0_53], %155 {strides = array<i32>} : memref<16x128xf32, #tpu.memory_space<vmem>>, vector<1x128xf32>,
    %c0_54 = arith.constant 0 : index
    %c0_55 = arith.constant 0 : index
    %157 = vector.load %arg7[%c0_54, %c0_55] : memref<128x128xf32, #tpu.memory_space<vmem>>, vector<128x128xf32>
    %c0_56 = arith.constant 0 : index
    %c0_57 = arith.constant 0 : index
    %158 = vector.load %arg11[%c0_56, %c0_57] : memref<16x128xf32, #tpu.memory_space<vmem>>, vector<16x128xf32>
    %159 = vector.extract_strided_slice %158 {offsets = [0, 0], sizes = [8, 128], strides = [1, 1]} : vector<16x128xf32> to vector<8x128xf32>
    %160 = arith.addf %159, %42 : vector<8x128xf32>
    %161 = tpu.concatenate %160, %160, %160, %160, %160, %160, %160, %160, %160, %160, %160, %160, %160, %160, %160, %160 in 0 : vector<8x128xf32>, vector<8x128xf32>, vector<8x128xf32>, vector<8x128xf32>, vector<8x128xf32>, vector<8x128xf32>, vector<8x128xf32>, vector<8x128xf32>, vector<8x128xf32>, vector<8x128xf32>, vector<8x128xf32>, vector<8x128xf32>, vector<8x128xf32>, vector<8x128xf32>, vector<8x128xf32>, vector<8x128xf32> -> vector<128x128xf32>
    %162 = arith.addf %161, %157 : vector<128x128xf32>
    %cst_58 = arith.constant dense<0xFF800000> : vector<128xf32>
    %163 = vector.multi_reduction <maximumf>, %162, %cst_58 [1] : vector<128x128xf32> to vector<128xf32>
    %164 = vector.shape_cast %163 : vector<128xf32> to vector<128x1xf32>
    %165 = vector.broadcast %164 : vector<128x1xf32> to vector<128x128xf32>
    %166 = arith.subf %162, %165 : vector<128x128xf32>
    %167 = math.exp %166 : vector<128x128xf32>
    %cst_59 = arith.constant dense<0.000000e+00> : vector<128xf32>
    %168 = vector.multi_reduction <add>, %167, %cst_59 [1] : vector<128x128xf32> to vector<128xf32>
    %169 = vector.shape_cast %168 : vector<128xf32> to vector<128x1xf32>
    %170 = tpu.reciprocal %169 {approx = true} : vector<128x1xf32> -> vector<128x1xf32>
    %cst_60 = arith.constant 5.000000e-01 : f32
    %171 = vector.broadcast %cst_60 : f32 to vector<128x1xf32>
    %172 = arith.mulf %170, %171 : vector<128x1xf32>
    %173 = vector.broadcast %172 : vector<128x1xf32> to vector<128x128xf32>
    %174 = arith.mulf %167, %173 : vector<128x128xf32>
    %175 = vector.extract_strided_slice %158 {offsets = [8, 0], sizes = [8, 128], strides = [1, 1]} : vector<16x128xf32> to vector<8x128xf32>
    %176 = arith.addf %175, %42 : vector<8x128xf32>
    %177 = tpu.concatenate %176, %176, %176, %176, %176, %176, %176, %176, %176, %176, %176, %176, %176, %176, %176, %176 in 0 : vector<8x128xf32>, vector<8x128xf32>, vector<8x128xf32>, vector<8x128xf32>, vector<8x128xf32>, vector<8x128xf32>, vector<8x128xf32>, vector<8x128xf32>, vector<8x128xf32>, vector<8x128xf32>, vector<8x128xf32>, vector<8x128xf32>, vector<8x128xf32>, vector<8x128xf32>, vector<8x128xf32>, vector<8x128xf32> -> vector<128x128xf32>
    %178 = arith.addf %177, %157 : vector<128x128xf32>
    %cst_61 = arith.constant dense<0xFF800000> : vector<128xf32>
    %179 = vector.multi_reduction <maximumf>, %178, %cst_61 [1] : vector<128x128xf32> to vector<128xf32>
    %180 = vector.shape_cast %179 : vector<128xf32> to vector<128x1xf32>
    %181 = vector.broadcast %180 : vector<128x1xf32> to vector<128x128xf32>
    %182 = arith.subf %178, %181 : vector<128x128xf32>
    %183 = math.exp %182 : vector<128x128xf32>
    %cst_62 = arith.constant dense<0.000000e+00> : vector<128xf32>
    %184 = vector.multi_reduction <add>, %183, %cst_62 [1] : vector<128x128xf32> to vector<128xf32>
    %185 = vector.shape_cast %184 : vector<128xf32> to vector<128x1xf32>
    %186 = tpu.reciprocal %185 {approx = true} : vector<128x1xf32> -> vector<128x1xf32>
    %cst_63 = arith.constant 5.000000e-01 : f32
    %187 = vector.broadcast %cst_63 : f32 to vector<128x1xf32>
    %188 = arith.mulf %186, %187 : vector<128x1xf32>
    %189 = vector.broadcast %188 : vector<128x1xf32> to vector<128x128xf32>
    %190 = arith.mulf %183, %189 : vector<128x128xf32>
    %191 = tpu.concatenate %174, %190 in 1 : vector<128x128xf32>, vector<128x128xf32> -> vector<128x256xf32>
    %192 = arith.truncf %191 : vector<128x256xf32> to vector<128x256xbf16>
    %193 = vector.extract_strided_slice %32 {offsets = [0, 0], sizes = [128, 32], strides = [1, 1]} : vector<128x64xf32> to vector<128x32xf32>
    %194 = vector.extract_strided_slice %32 {offsets = [0, 32], sizes = [128, 32], strides = [1, 1]} : vector<128x64xf32> to vector<128x32xf32>
    %195 = tpu.concatenate %193, %194 in 0 : vector<128x32xf32>, vector<128x32xf32> -> vector<256x32xf32>
    %196 = arith.truncf %195 : vector<256x32xf32> to vector<256x32xbf16>
    %cst_64 = arith.constant dense<0.000000e+00> : vector<128x32xf32>
    %197 = tpu.matmul %192, %196, %cst_64 {dimension_numbers = #tpu.dot_dimension_numbers<[1], [0], [0], [1], [0, 0, 1, 1], [], []>} : vector<128x256xbf16>, vector<256x32xbf16>, vector<128x32xf32> -> vector<128x32xf32>
    %198 = arith.addf %0, %197 : vector<128x32xf32>
    %199 = vector.extract_strided_slice %1 {offsets = [4, 0], sizes = [1, 32], strides = [1, 1]} : vector<16x128xf32> to vector<1x32xf32>
    %200 = vector.broadcast %199 : vector<1x32xf32> to vector<128x32xf32>
    %201 = arith.addf %198, %200 : vector<128x32xf32>
    %cst_65 = arith.constant dense<0.000000e+00> : vector<128xf32>
    %202 = vector.multi_reduction <add>, %201, %cst_65 [1] : vector<128x32xf32> to vector<128xf32>
    %203 = vector.shape_cast %202 : vector<128xf32> to vector<128x1xf32>
    %cst_66 = arith.constant 3.125000e-02 : f32
    %204 = vector.broadcast %cst_66 : f32 to vector<128x1xf32>
    %205 = arith.mulf %203, %204 : vector<128x1xf32>
    %206 = arith.mulf %201, %201 : vector<128x32xf32>
    %cst_67 = arith.constant dense<0.000000e+00> : vector<128xf32>
    %207 = vector.multi_reduction <add>, %206, %cst_67 [1] : vector<128x32xf32> to vector<128xf32>
    %208 = vector.shape_cast %207 : vector<128xf32> to vector<128x1xf32>
    %cst_68 = arith.constant 3.125000e-02 : f32
    %209 = vector.broadcast %cst_68 : f32 to vector<128x1xf32>
    %210 = arith.mulf %208, %209 : vector<128x1xf32>
    %211 = vector.broadcast %205 : vector<128x1xf32> to vector<128x32xf32>
    %212 = arith.subf %201, %211 : vector<128x32xf32>
    %213 = arith.mulf %205, %205 : vector<128x1xf32>
    %214 = arith.subf %210, %213 : vector<128x1xf32>
    %cst_69 = arith.constant 9.99999974E-6 : f32
    %215 = vector.broadcast %cst_69 : f32 to vector<128x1xf32>
    %216 = arith.addf %214, %215 : vector<128x1xf32>
    %217 = math.rsqrt %216 : vector<128x1xf32>
    %218 = vector.broadcast %217 : vector<128x1xf32> to vector<128x32xf32>
    %219 = arith.mulf %212, %218 : vector<128x32xf32>
    %220 = vector.extract_strided_slice %1 {offsets = [5, 0], sizes = [1, 32], strides = [1, 1]} : vector<16x128xf32> to vector<1x32xf32>
    %221 = vector.broadcast %220 : vector<1x32xf32> to vector<128x32xf32>
    %222 = arith.mulf %219, %221 : vector<128x32xf32>
    %223 = vector.extract_strided_slice %1 {offsets = [6, 0], sizes = [1, 32], strides = [1, 1]} : vector<16x128xf32> to vector<1x32xf32>
    %224 = vector.broadcast %223 : vector<1x32xf32> to vector<128x32xf32>
    %225 = arith.addf %222, %224 : vector<128x32xf32>
    %226 = arith.truncf %225 : vector<128x32xf32> to vector<128x32xbf16>
    %c0_70 = arith.constant 0 : index
    %c0_71 = arith.constant 0 : index
    %227 = vector.load %arg5[%c0_70, %c0_71] : memref<32x64xbf16, #tpu.memory_space<vmem>>, vector<32x32xbf16>
    %cst_72 = arith.constant dense<0.000000e+00> : vector<128x32xf32>
    %228 = tpu.matmul %226, %227, %cst_72 {dimension_numbers = #tpu.dot_dimension_numbers<[1], [0], [0], [1], [0, 0, 1, 1], [], []>} : vector<128x32xbf16>, vector<32x32xbf16>, vector<128x32xf32> -> vector<128x32xf32>
    %229 = vector.extract_strided_slice %1 {offsets = [7, 0], sizes = [1, 32], strides = [1, 1]} : vector<16x128xf32> to vector<1x32xf32>
    %230 = vector.broadcast %229 : vector<1x32xf32> to vector<128x32xf32>
    %231 = arith.addf %228, %230 : vector<128x32xf32>
    %cst_73 = arith.constant 5.000000e-01 : f32
    %232 = vector.broadcast %cst_73 : f32 to vector<128x32xf32>
    %233 = arith.mulf %232, %231 : vector<128x32xf32>
    %cst_74 = arith.constant 0.707106769 : f32
    %234 = vector.broadcast %cst_74 : f32 to vector<128x32xf32>
    %235 = arith.mulf %231, %234 : vector<128x32xf32>
    %236 = math.erf %235 : vector<128x32xf32>
    %cst_75 = arith.constant 1.000000e+00 : f32
    %237 = vector.broadcast %cst_75 : f32 to vector<128x32xf32>
    %238 = arith.addf %237, %236 : vector<128x32xf32>
    %239 = arith.mulf %233, %238 : vector<128x32xf32>
    %240 = arith.truncf %239 : vector<128x32xf32> to vector<128x32xbf16>
    %c0_76 = arith.constant 0 : index
    %c32 = arith.constant 32 : index
    %241 = vector.load %arg5[%c0_76, %c32] : memref<32x64xbf16, #tpu.memory_space<vmem>>, vector<32x32xbf16>
    %cst_77 = arith.constant dense<0.000000e+00> : vector<128x32xf32>
    %242 = tpu.matmul %240, %241, %cst_77 {dimension_numbers = #tpu.dot_dimension_numbers<[1], [0], [0], [1], [0, 0, 1, 1], [], []>} : vector<128x32xbf16>, vector<32x32xbf16>, vector<128x32xf32> -> vector<128x32xf32>
    %243 = vector.extract_strided_slice %1 {offsets = [8, 0], sizes = [1, 32], strides = [1, 1]} : vector<16x128xf32> to vector<1x32xf32>
    %244 = vector.broadcast %243 : vector<1x32xf32> to vector<128x32xf32>
    %245 = arith.addf %242, %244 : vector<128x32xf32>
    %246 = arith.addf %201, %245 : vector<128x32xf32>
    %c0_78 = arith.constant 0 : index
    %c0_79 = arith.constant 0 : index
    %247 = vector.load %arg10[%c0_78, %c0_79] : memref<128x32xf32, #tpu.memory_space<vmem>>, vector<128x32xf32>
    tpu.vector_store %arg10[%c0_78, %c0_79], %246 {strides = array<i32>} : memref<128x32xf32, #tpu.memory_space<vmem>>, vector<128x32xf32>,
    return
  }
  func.func @transform_0(%arg0: i32) -> (i32, i32) {
    %c0_i32 = arith.constant 0 : i32
    %c0_i32_0 = arith.constant 0 : i32
    return %arg0, %c0_i32 : i32, i32
  }
  func.func @transform_1(%arg0: i32) -> (i32, i32, i32) {
    %c0_i32 = arith.constant 0 : i32
    %c0_i32_0 = arith.constant 0 : i32
    %c0_i32_1 = arith.constant 0 : i32
    return %arg0, %c0_i32, %c0_i32_0 : i32, i32, i32
  }
  func.func @transform_2(%arg0: i32) -> (i32, i32, i32) {
    %c0_i32 = arith.constant 0 : i32
    %c0_i32_0 = arith.constant 0 : i32
    %c0_i32_1 = arith.constant 0 : i32
    return %arg0, %c0_i32, %c0_i32_0 : i32, i32, i32
  }
  func.func @transform_3(%arg0: i32) -> (i32, i32) {
    %c0_i32 = arith.constant 0 : i32
    %c0_i32_0 = arith.constant 0 : i32
    %c0_i32_1 = arith.constant 0 : i32
    return %c0_i32, %c0_i32_0 : i32, i32
  }
  func.func @transform_4(%arg0: i32) -> (i32, i32) {
    %c0_i32 = arith.constant 0 : i32
    %c0_i32_0 = arith.constant 0 : i32
    %c0_i32_1 = arith.constant 0 : i32
    return %c0_i32, %c0_i32_0 : i32, i32
  }
  func.func @transform_5(%arg0: i32) -> (i32, i32) {
    %c0_i32 = arith.constant 0 : i32
    %c0_i32_0 = arith.constant 0 : i32
    %c0_i32_1 = arith.constant 0 : i32
    return %c0_i32, %c0_i32_0 : i32, i32
  }
  func.func @transform_6(%arg0: i32) -> (i32, i32) {
    %c0_i32 = arith.constant 0 : i32
    %c0_i32_0 = arith.constant 0 : i32
    %c0_i32_1 = arith.constant 0 : i32
    return %c0_i32, %c0_i32_0 : i32, i32
  }
  func.func @transform_7(%arg0: i32) -> (i32, i32) {
    %c0_i32 = arith.constant 0 : i32
    %c0_i32_0 = arith.constant 0 : i32
    %c0_i32_1 = arith.constant 0 : i32
    return %c0_i32, %c0_i32_0 : i32, i32
  }
  func.func @transform_8(%arg0: i32) -> (i32, i32) {
    %c0_i32 = arith.constant 0 : i32
    %c0_i32_0 = arith.constant 0 : i32
    %c0_i32_1 = arith.constant 0 : i32
    return %c0_i32, %c0_i32_0 : i32, i32
  }
  func.func @transform_9(%arg0: i32) -> (i32, i32) {
    %c0_i32 = arith.constant 0 : i32
    %c0_i32_0 = arith.constant 0 : i32
    return %arg0, %c0_i32 : i32, i32
  }
}

</mosaic_0001>

<llo_original>
// kernel: tpu_custom_call.1
$region0: #{tpu_custom_call.1}
  #allocation0 [shape = 'u32[]', space=smem, size = 0x4, offset = 0x4, fixed_abs, tag = 'smem constant byte address 0x4 - core index']
  #allocation1 [shape = 'u32[144,128]{1,0:T(1,128)}', space=vmem, size = 0x12000, scoped, tag = 'internal scratch']
  #allocation2 [shape = 'f32[16,128]{1,0:T(8,128)}', space=vmem, size = 0x2000, scoped, tag = 'scratch operand']
  %s0 = inlined_call_operand.vmem [shape: f32[512,32], index: 0, kind: input, shape index: {}]
  %s1 = inlined_call_operand.hbm [shape: f32[4,8,128], index: 1, kind: input, shape index: {}]
  %s2 = inlined_call_operand.hbm [shape: f32[4,8,128], index: 2, kind: input, shape index: {}]
  %s3 = inlined_call_operand.vmem [shape: bf16[32,128], index: 3, kind: input, shape index: {}]
  %s4 = inlined_call_operand.hbm [shape: bf16[32,64], index: 4, kind: input, shape index: {}]
  %s5 = inlined_call_operand.vmem [shape: bf16[128,1024], index: 5, kind: input, shape index: {}]
  %s6 = inlined_call_operand.vmem [shape: f32[128,128], index: 6, kind: input, shape index: {}]
  %s7 = inlined_call_operand.hbm [shape: f32[64,128], index: 7, kind: input, shape index: {}]
  %s8 = inlined_call_operand.hbm [shape: f32[16,128], index: 8, kind: input, shape index: {}]
  %s9 = inlined_call_operand.vmem [shape: f32[512,32], index: 9, kind: output, shape index: {}]
  %s10 = sld [smem:[#allocation0]]
  $region89: #{tpu_custom_call.1} parent=0
    _
  %s12 = ssub.s32 1, %s10
  %s13 = scalar_select 0, %s12, %s10
  $region1: #{tpu_custom_call.1} parent=0
    #allocation3 [shape = 'u8[8192]{0}', space=vmem, size = 0x2000, scoped, tag = 'input window, operand 1']
    #allocation4 [shape = 's32[2]{0}', space=sflag, size = 0x8, scoped, tag = 'scoped memory for tpu_custom_call.1']
    #allocation5 [shape = 'u8[8192]{0}', space=vmem, size = 0x2000, scoped, tag = 'input window, operand 2']
    #allocation6 [shape = 's32[2]{0}', space=sflag, size = 0x8, scoped, tag = 'scoped memory for tpu_custom_call.1']
    #allocation7 [shape = 'u8[8192]{0}', space=vmem, size = 0x2000, scoped, tag = 'input window, operand 4, single buffered']
    #allocation8 [shape = 'u8[32768]{0}', space=vmem, size = 0x8000, scoped, tag = 'input window, operand 7, single buffered']
    #allocation9 [shape = 's32[1]{0}', space=sflag, size = 0x4, scoped, tag = 'scoped memory for tpu_custom_call.1']
    #allocation10 [shape = 'u8[8192]{0}', space=vmem, size = 0x2000, scoped, tag = 'input window, operand 8, single buffered']
    %14 = vsyncpa [#allocation4], 0
    %s15 = scalar_lea.sflag [#allocation4], 1
    %16 = vsyncpa %s15, 0
    %17 = vsyncpa [#allocation6], 0
    %s18 = scalar_lea.sflag [#allocation6], 1
    %19 = vsyncpa %s18, 0
    %20 = vsyncpa [#allocation9], 0
    loop: start=0, step=1, limit=6
    $region2: #{tpu_custom_call.1} parent=1 // loop_pre_header
      _
    $region3: #{tpu_custom_call.1} parent=1 // loop_header
      %s22 = sphi 0, %s26
      %p23 = scmp.ge.s32.totalorder %s22, 6
      %s32 = sphi 0, %s34
      %s35 = sphi 0, %s32
      %s36 = sphi 0, %s35
      %s52 = sphi 0, %s36
      %s58 = sphi 0, %s60
      %s61 = sphi 0, %s58
      %s62 = sphi 0, %s61
      %s78 = sphi 0, %s62
      %s84 = sphi 0, %s86
      %s87 = sphi 0, %s84
      %s88 = sphi 0, %s87
      %s104 = sphi 0, %s88
      %s108 = sphi 0, %s108
      %s110 = sphi 0, %s108
      %s111 = sphi 0, %s110
      %s125 = sphi 0, %s111
      %s129 = sphi 0, %s129
      %s131 = sphi 0, %s129
      %s132 = sphi 0, %s131
      %s146 = sphi 0, %s132
      %s150 = sphi 0, %s150
      %s152 = sphi 0, %s150
      %s153 = sphi 0, %s152
      %s167 = sphi 0, %s153
      %s171 = sphi 0, %s171
      %s173 = sphi 0, %s171
      %s174 = sphi 0, %s173
      %s188 = sphi 0, %s174
      %s192 = sphi 0, %s192
      %s194 = sphi 0, %s192
      %s195 = sphi 0, %s194
      %s209 = sphi 0, %s195
      %s213 = sphi 0, %s213
      %s215 = sphi 0, %s213
      %s216 = sphi 0, %s215
      %s230 = sphi 0, %s216
      %s236 = sphi 0, %s238
      %s239 = sphi 0, %s236
      %s240 = sphi 0, %s239
      %s256 = sphi 0, %s240
    $region4: #{tpu_custom_call.1} parent=1 // loop_header_branch
      %25 = sbr.rel (%p23) target = $region8
    $region5: #{tpu_custom_call.1} parent=1 // loop_body
      %s27 = ssub.s32 %s22, 1
      %s28 = ssub.s32 %s22, 2
      %s29 = sadd.s32 %s22, 1
      %s30 = ssub.s32 %s22, %s29
      %p31 = scmp.eq.s32.totalorder %s30, 0
      %s33 = sadd.s32 %s32, 1
      %s34 = scalar_select %p31, %s32, %s33
      %p37 = pneg %p31
      %p38 = scmp.eq.s32.totalorder %s22, 3
      %p39 = por %p37, %p38
      %p40 = scmp.ne.s32.totalorder %s32, %s35
      %p41 = scmp.eq.s32.totalorder %s22, 0
      %p42 = por %p40, %p41
      %p43 = scmp.ne.s32.totalorder %s32, %s35
      %p44 = scmp.eq.s32.totalorder %s27, 3
      %p45 = por %p43, %p44
      %p46 = scmp.ne.s32.totalorder %s35, %s36
      %p47 = scmp.eq.s32.totalorder %s27, 0
      %p48 = por %p46, %p47
      %p49 = scmp.ne.s32.totalorder %s35, %s36
      %p50 = scmp.eq.s32.totalorder %s28, 3
      %p51 = por %p49, %p50
      %p53 = scmp.ne.s32.totalorder %s36, %s52
      %p54 = scmp.eq.s32.totalorder %s28, 0
      %p55 = por %p53, %p54
      %s56 = ssub.s32 %s22, %s29
      %p57 = scmp.eq.s32.totalorder %s56, 0
      %s59 = sadd.s32 %s58, 1
      %s60 = scalar_select %p57, %s58, %s59
      %p63 = pneg %p57
      %p64 = scmp.eq.s32.totalorder %s22, 3
      %p65 = por %p63, %p64
      %p66 = scmp.ne.s32.totalorder %s58, %s61
      %p67 = scmp.eq.s32.totalorder %s22, 0
      %p68 = por %p66, %p67
      %p69 = scmp.ne.s32.totalorder %s58, %s61
      %p70 = scmp.eq.s32.totalorder %s27, 3
      %p71 = por %p69, %p70
      %p72 = scmp.ne.s32.totalorder %s61, %s62
      %p73 = scmp.eq.s32.totalorder %s27, 0
      %p74 = por %p72, %p73
      %p75 = scmp.ne.s32.totalorder %s61, %s62
      %p76 = scmp.eq.s32.totalorder %s28, 3
      %p77 = por %p75, %p76
      %p79 = scmp.ne.s32.totalorder %s62, %s78
      %p80 = scmp.eq.s32.totalorder %s28, 0
      %p81 = por %p79, %p80
      %s82 = ssub.s32 %s22, %s29
      %p83 = scmp.eq.s32.totalorder %s82, 0
      %s85 = sadd.s32 %s84, 1
      %s86 = scalar_select %p83, %s84, %s85
      %p89 = pneg %p83
      %p90 = scmp.eq.s32.totalorder %s22, 3
      %p91 = por %p89, %p90
      %p92 = scmp.ne.s32.totalorder %s84, %s87
      %p93 = scmp.eq.s32.totalorder %s22, 0
      %p94 = por %p92, %p93
      %p95 = scmp.ne.s32.totalorder %s84, %s87
      %p96 = scmp.eq.s32.totalorder %s27, 3
      %p97 = por %p95, %p96
      %p98 = scmp.ne.s32.totalorder %s87, %s88
      %p99 = scmp.eq.s32.totalorder %s27, 0
      %p100 = por %p98, %p99
      %p101 = scmp.ne.s32.totalorder %s87, %s88
      %p102 = scmp.eq.s32.totalorder %s28, 3
      %p103 = por %p101, %p102
      %p105 = scmp.ne.s32.totalorder %s88, %s104
      %p106 = scmp.eq.s32.totalorder %s28, 0
      %p107 = por %p105, %p106
      %s109 = sadd.s32 %s108, 1
      %p112 = scmp.eq.s32.totalorder %s22, 3
      %p113 = scmp.ne.s32.totalorder %s108, %s110
      %p114 = scmp.eq.s32.totalorder %s22, 0
      %p115 = por %p113, %p114
      %p116 = scmp.ne.s32.totalorder %s108, %s110
      %p117 = scmp.eq.s32.totalorder %s27, 3
      %p118 = por %p116, %p117
      %p119 = scmp.ne.s32.totalorder %s110, %s111
      %p120 = scmp.eq.s32.totalorder %s27, 0
      %p121 = por %p119, %p120
      %p122 = scmp.ne.s32.totalorder %s110, %s111
      %p123 = scmp.eq.s32.totalorder %s28, 3
      %p124 = por %p122, %p123
      %p126 = scmp.ne.s32.totalorder %s111, %s125
      %p127 = scmp.eq.s32.totalorder %s28, 0
      %p128 = por %p126, %p127
      %s130 = sadd.s32 %s129, 1
      %p133 = scmp.eq.s32.totalorder %s22, 3
      %p134 = scmp.ne.s32.totalorder %s129, %s131
      %p135 = scmp.eq.s32.totalorder %s22, 0
      %p136 = por %p134, %p135
      %p137 = scmp.ne.s32.totalorder %s129, %s131
      %p138 = scmp.eq.s32.totalorder %s27, 3
      %p139 = por %p137, %p138
      %p140 = scmp.ne.s32.totalorder %s131, %s132
      %p141 = scmp.eq.s32.totalorder %s27, 0
      %p142 = por %p140, %p141
      %p143 = scmp.ne.s32.totalorder %s131, %s132
      %p144 = scmp.eq.s32.totalorder %s28, 3
      %p145 = por %p143, %p144
      %p147 = scmp.ne.s32.totalorder %s132, %s146
      %p148 = scmp.eq.s32.totalorder %s28, 0
      %p149 = por %p147, %p148
      %s151 = sadd.s32 %s150, 1
      %p154 = scmp.eq.s32.totalorder %s22, 3
      %p155 = scmp.ne.s32.totalorder %s150, %s152
      %p156 = scmp.eq.s32.totalorder %s22, 0
      %p157 = por %p155, %p156
      %p158 = scmp.ne.s32.totalorder %s150, %s152
      %p159 = scmp.eq.s32.totalorder %s27, 3
      %p160 = por %p158, %p159
      %p161 = scmp.ne.s32.totalorder %s152, %s153
      %p162 = scmp.eq.s32.totalorder %s27, 0
      %p163 = por %p161, %p162
      %p164 = scmp.ne.s32.totalorder %s152, %s153
      %p165 = scmp.eq.s32.totalorder %s28, 3
      %p166 = por %p164, %p165
      %p168 = scmp.ne.s32.totalorder %s153, %s167
      %p169 = scmp.eq.s32.totalorder %s28, 0
      %p170 = por %p168, %p169
      %s172 = sadd.s32 %s171, 1
      %p175 = scmp.eq.s32.totalorder %s22, 3
      %p176 = scmp.ne.s32.totalorder %s171, %s173
      %p177 = scmp.eq.s32.totalorder %s22, 0
      %p178 = por %p176, %p177
      %p179 = scmp.ne.s32.totalorder %s171, %s173
      %p180 = scmp.eq.s32.totalorder %s27, 3
      %p181 = por %p179, %p180
      %p182 = scmp.ne.s32.totalorder %s173, %s174
      %p183 = scmp.eq.s32.totalorder %s27, 0
      %p184 = por %p182, %p183
      %p185 = scmp.ne.s32.totalorder %s173, %s174
      %p186 = scmp.eq.s32.totalorder %s28, 3
      %p187 = por %p185, %p186
      %p189 = scmp.ne.s32.totalorder %s174, %s188
      %p190 = scmp.eq.s32.totalorder %s28, 0
      %p191 = por %p189, %p190
      %s193 = sadd.s32 %s192, 1
      %p196 = scmp.eq.s32.totalorder %s22, 3
      %p197 = scmp.ne.s32.totalorder %s192, %s194
      %p198 = scmp.eq.s32.totalorder %s22, 0
      %p199 = por %p197, %p198
      %p200 = scmp.ne.s32.totalorder %s192, %s194
      %p201 = scmp.eq.s32.totalorder %s27, 3
      %p202 = por %p200, %p201
      %p203 = scmp.ne.s32.totalorder %s194, %s195
      %p204 = scmp.eq.s32.totalorder %s27, 0
      %p205 = por %p203, %p204
      %p206 = scmp.ne.s32.totalorder %s194, %s195
      %p207 = scmp.eq.s32.totalorder %s28, 3
      %p208 = por %p206, %p207
      %p210 = scmp.ne.s32.totalorder %s195, %s209
      %p211 = scmp.eq.s32.totalorder %s28, 0
      %p212 = por %p210, %p211
      %s214 = sadd.s32 %s213, 1
      %p217 = scmp.eq.s32.totalorder %s22, 3
      %p218 = scmp.ne.s32.totalorder %s213, %s215
      %p219 = scmp.eq.s32.totalorder %s22, 0
      %p220 = por %p218, %p219
      %p221 = scmp.ne.s32.totalorder %s213, %s215
      %p222 = scmp.eq.s32.totalorder %s27, 3
      %p223 = por %p221, %p222
      %p224 = scmp.ne.s32.totalorder %s215, %s216
      %p225 = scmp.eq.s32.totalorder %s27, 0
      %p226 = por %p224, %p225
      %p227 = scmp.ne.s32.totalorder %s215, %s216
      %p228 = scmp.eq.s32.totalorder %s28, 3
      %p229 = por %p227, %p228
      %p231 = scmp.ne.s32.totalorder %s216, %s230
      %p232 = scmp.eq.s32.totalorder %s28, 0
      %p233 = por %p231, %p232
      %s234 = ssub.s32 %s22, %s29
      %p235 = scmp.eq.s32.totalorder %s234, 0
      %s237 = sadd.s32 %s236, 1
      %s238 = scalar_select %p235, %s236, %s237
      %p241 = pneg %p235
      %p242 = scmp.eq.s32.totalorder %s22, 3
      %p243 = por %p241, %p242
      %p244 = scmp.ne.s32.totalorder %s236, %s239
      %p245 = scmp.eq.s32.totalorder %s22, 0
      %p246 = por %p244, %p245
      %p247 = scmp.ne.s32.totalorder %s236, %s239
      %p248 = scmp.eq.s32.totalorder %s27, 3
      %p249 = por %p247, %p248
      %p250 = scmp.ne.s32.totalorder %s239, %s240
      %p251 = scmp.eq.s32.totalorder %s27, 0
      %p252 = por %p250, %p251
      %p253 = scmp.ne.s32.totalorder %s239, %s240
      %p254 = scmp.eq.s32.totalorder %s28, 3
      %p255 = por %p253, %p254
      %p257 = scmp.ne.s32.totalorder %s240, %s256
      %p258 = scmp.eq.s32.totalorder %s28, 0
      %p259 = por %p257, %p258
      %p260 = scmp.le.s32.totalorder 1, %s22
      %p261 = scmp.lt.s32.totalorder %s22, 5
      %p262 = pnand %p260, %p261
      %p263 = pneg %p262
      // Predicated region
      $region9: #{tpu_custom_call.1} parent=5 // pred_check
        _
      $region10: #{tpu_custom_call.1} parent=5 // pred_check_branch
        %265 = sbr.rel (%p262) target = $region12
      $region11: #{tpu_custom_call.1} parent=5 // pred_region
        %s266 = ssub.s32 %s22, 1
        // Predicated region
        $region13: #{tpu_custom_call.1} parent=11 // pred_check
          %p267 = pneg %p121
        $region14: #{tpu_custom_call.1} parent=11 // pred_check_branch
          %269 = sbr.rel (%p267) target = $region16
        $region15: #{tpu_custom_call.1} parent=11 // pred_region
          _
        $region16: #{tpu_custom_call.1} parent=11 // pred_fallthru
          _
        // Predicated region
        $region17: #{tpu_custom_call.1} parent=11 // pred_check
          %p270 = pneg %p142
        $region18: #{tpu_custom_call.1} parent=11 // pred_check_branch
          %272 = sbr.rel (%p270) target = $region20
        $region19: #{tpu_custom_call.1} parent=11 // pred_region
          %s274 = ssub.s32 256, 256
          %275 = vsyncadd [#allocation6], %s274
          %s276 = sshll.u32 [#allocation7], 4
          %s277 = int_to_ptr.vmem [resolvable:$true] %s276
          %282 = dma.hbm_to_vmem [thread:$0]  %s4, 256, %s277, [#allocation6], 64, 64, 4
        $region20: #{tpu_custom_call.1} parent=11 // pred_fallthru
          _
        // Predicated region
        $region21: #{tpu_custom_call.1} parent=11 // pred_check
          %p283 = pneg %p163
        $region22: #{tpu_custom_call.1} parent=11 // pred_check_branch
          %285 = sbr.rel (%p283) target = $region24
        $region23: #{tpu_custom_call.1} parent=11 // pred_region
          _
        $region24: #{tpu_custom_call.1} parent=11 // pred_fallthru
          _
        // Predicated region
        $region25: #{tpu_custom_call.1} parent=11 // pred_check
          %p286 = pneg %p184
        $region26: #{tpu_custom_call.1} parent=11 // pred_check_branch
          %288 = sbr.rel (%p286) target = $region28
        $region27: #{tpu_custom_call.1} parent=11 // pred_region
          _
        $region28: #{tpu_custom_call.1} parent=11 // pred_fallthru
          _
        // Predicated region
        $region29: #{tpu_custom_call.1} parent=11 // pred_check
          %p289 = pneg %p205
        $region30: #{tpu_custom_call.1} parent=11 // pred_check_branch
          %291 = sbr.rel (%p289) target = $region32
        $region31: #{tpu_custom_call.1} parent=11 // pred_region
          %s293 = ssub.s32 1024, 1024
          %294 = vsyncadd [#allocation9], %s293
          %s295 = sshll.u32 [#allocation8], 4
          %s296 = int_to_ptr.vmem [resolvable:$true] %s295
          %301 = dma.hbm_to_vmem [thread:$0]  %s7, 1024, %s296, [#allocation9], 128, 128, 8
        $region32: #{tpu_custom_call.1} parent=11 // pred_fallthru
          _
        // Predicated region
        $region33: #{tpu_custom_call.1} parent=11 // pred_check
          %p302 = pneg %p226
        $region34: #{tpu_custom_call.1} parent=11 // pred_check_branch
          %304 = sbr.rel (%p302) target = $region36
        $region35: #{tpu_custom_call.1} parent=11 // pred_region
          %s306 = ssub.s32 256, 256
          %307 = vsyncadd [#allocation9], %s306
          %s308 = sshll.u32 [#allocation10], 4
          %s309 = int_to_ptr.vmem [resolvable:$true] %s308
          %314 = dma.hbm_to_vmem [thread:$0]  %s8, 256, %s309, [#allocation9], 128, 128, 8
        $region36: #{tpu_custom_call.1} parent=11 // pred_fallthru
          _
      $region12: #{tpu_custom_call.1} parent=5 // pred_fallthru
        _
      %p315 = scmp.lt.s32.totalorder %s22, 4
      // Predicated region
      $region37: #{tpu_custom_call.1} parent=5 // pred_check
        %p316 = pneg %p315
      $region38: #{tpu_custom_call.1} parent=5 // pred_check_branch
        %318 = sbr.rel (%p316) target = $region40
      $region39: #{tpu_custom_call.1} parent=5 // pred_region
        // Predicated region
        $region41: #{tpu_custom_call.1} parent=39 // pred_check
          %p319 = pneg %p42
        $region42: #{tpu_custom_call.1} parent=39 // pred_check_branch
          %321 = sbr.rel (%p319) target = $region44
        $region43: #{tpu_custom_call.1} parent=39 // pred_region
          %s322 = smul.u32 16, %s22
          %p323 = scmp.lt.s32.totalorder %s322, 63
          %s324 = scalar_select %p323, %s322, 63
          %s325 = smul.addr %s324, 8
          %s326 = scalar_lea.vmem %s0, %s325
          %s327 = smul.u32 16, %s22
        $region44: #{tpu_custom_call.1} parent=39 // pred_fallthru
          _
        // Predicated region
        $region45: #{tpu_custom_call.1} parent=39 // pred_check
          %p328 = pneg %p68
        $region46: #{tpu_custom_call.1} parent=39 // pred_check_branch
          %330 = sbr.rel (%p328) target = $region48
        $region47: #{tpu_custom_call.1} parent=39 // pred_region
          %s331 = sand.u32 %s58, 1
          %s332 = scalar_lea.sflag [#allocation4], %s331
          %s333 = sand.u32 %s58, 1
          %s334 = smul.addr %s333, 8
          %s335 = scalar_lea.vmem [#allocation3], %s334
          %s337 = ssub.s32 128, 128
          %338 = vsyncadd %s332, %s337
          %s339 = smul.addr %s22, 128
          %s340 = scalar_lea.hbm %s1, %s339
          %s342 = sshll.u32 %s335, 4
          %s343 = int_to_ptr.vmem [resolvable:$true] %s342
          %345 = dma.hbm_to_vmem [thread:$0]  %s340, 128, %s343, %s332
        $region48: #{tpu_custom_call.1} parent=39 // pred_fallthru
          _
        // Predicated region
        $region49: #{tpu_custom_call.1} parent=39 // pred_check
          %p346 = pneg %p94
        $region50: #{tpu_custom_call.1} parent=39 // pred_check_branch
          %348 = sbr.rel (%p346) target = $region52
        $region51: #{tpu_custom_call.1} parent=39 // pred_region
          %s349 = sand.u32 %s22, 1
          %s350 = scalar_lea.sflag [#allocation6], %s349
          %s351 = sand.u32 %s84, 1
          %s352 = smul.addr %s351, 8
          %s353 = scalar_lea.vmem [#allocation5], %s352
          %s355 = ssub.s32 128, 128
          %356 = vsyncadd %s350, %s355
          %s357 = smul.addr %s22, 128
          %s358 = scalar_lea.hbm %s2, %s357
          %s360 = sshll.u32 %s353, 4
          %s361 = int_to_ptr.vmem [resolvable:$true] %s360
          %363 = dma.hbm_to_vmem [thread:$0]  %s358, 128, %s361, %s350
        $region52: #{tpu_custom_call.1} parent=39 // pred_fallthru
          _
      $region40: #{tpu_custom_call.1} parent=5 // pred_fallthru
        _
      %p364 = scmp.le.s32.totalorder 1, %s22
      %p365 = scmp.lt.s32.totalorder %s22, 5
      %p366 = pnand %p364, %p365
      %p367 = pneg %p366
      // Predicated region
      $region53: #{tpu_custom_call.1} parent=5 // pred_check
        _
      $region54: #{tpu_custom_call.1} parent=5 // pred_check_branch
        %369 = sbr.rel (%p366) target = $region56
      $region55: #{tpu_custom_call.1} parent=5 // pred_region
        %s370 = ssub.s32 %s22, 1
        %s371 = sand.u32 %s61, 1
        %s372 = scalar_lea.sflag [#allocation4], %s371
        %s373 = sand.u32 %s61, 1
        %s374 = smul.addr %s373, 8
        %s375 = scalar_lea.vmem [#allocation3], %s374
        // Predicated region
        $region57: #{tpu_custom_call.1} parent=55 // pred_check
          %p376 = pneg %p74
        $region58: #{tpu_custom_call.1} parent=55 // pred_check_branch
          %378 = sbr.rel (%p376) target = $region60
        $region59: #{tpu_custom_call.1} parent=55 // pred_region
          %379 = dma.done %s372, 128
        $region60: #{tpu_custom_call.1} parent=55 // pred_fallthru
          _
        %s380 = sand.u32 %s27, 1
        %s381 = scalar_lea.sflag [#allocation6], %s380
        %s382 = sand.u32 %s87, 1
        %s383 = smul.addr %s382, 8
        %s384 = scalar_lea.vmem [#allocation5], %s383
        // Predicated region
        $region61: #{tpu_custom_call.1} parent=55 // pred_check
          %p385 = pneg %p100
        $region62: #{tpu_custom_call.1} parent=55 // pred_check_branch
          %387 = sbr.rel (%p385) target = $region64
        $region63: #{tpu_custom_call.1} parent=55 // pred_region
          %388 = dma.done %s381, 128
        $region64: #{tpu_custom_call.1} parent=55 // pred_fallthru
          _
        // Predicated region
        $region65: #{tpu_custom_call.1} parent=55 // pred_check
          %p389 = pneg %p142
        $region66: #{tpu_custom_call.1} parent=55 // pred_check_branch
          %391 = sbr.rel (%p389) target = $region68
        $region67: #{tpu_custom_call.1} parent=55 // pred_region
          %392 = dma.done [#allocation6], 256
        $region68: #{tpu_custom_call.1} parent=55 // pred_fallthru
          _
        // Predicated region
        $region69: #{tpu_custom_call.1} parent=55 // pred_check
          %p393 = pneg %p205
        $region70: #{tpu_custom_call.1} parent=55 // pred_check_branch
          %395 = sbr.rel (%p393) target = $region72
        $region71: #{tpu_custom_call.1} parent=55 // pred_region
          %396 = dma.done [#allocation9], 1024
        $region72: #{tpu_custom_call.1} parent=55 // pred_fallthru
          _
        // Predicated region
        $region73: #{tpu_custom_call.1} parent=55 // pred_check
          %p397 = pneg %p226
        $region74: #{tpu_custom_call.1} parent=55 // pred_check_branch
          %399 = sbr.rel (%p397) target = $region76
        $region75: #{tpu_custom_call.1} parent=55 // pred_region
          %400 = dma.done [#allocation9], 256
        $region76: #{tpu_custom_call.1} parent=55 // pred_fallthru
          _
        %s401 = smul.u32 16, %s27
        %p402 = scmp.lt.s32.totalorder %s401, 63
        %s403 = scalar_select %p402, %s401, 63
        %s404 = smul.addr %s403, 8
        %s405 = scalar_lea.vmem %s0, %s404
        %p406 = pneg %p48
        %p407 = pneg %p45
        %s408 = sand.u32 %s61, 1
        %s409 = scalar_lea.sflag [#allocation4], %s408
        %s410 = sand.u32 %s61, 1
        %s411 = smul.addr %s410, 8
        %s412 = scalar_lea.vmem [#allocation3], %s411
        %p413 = pneg %p74
        %p414 = pneg %p71
        %s415 = sand.u32 %s27, 1
        %s416 = scalar_lea.sflag [#allocation6], %s415
        %s417 = sand.u32 %s87, 1
        %s418 = smul.addr %s417, 8
        %s419 = scalar_lea.vmem [#allocation5], %s418
        %p420 = pneg %p100
        %p421 = pneg %p97
        %p422 = pneg %p121
        %p423 = pneg %p118
        %p424 = pneg %p142
        %p425 = pneg %p139
        %p426 = pneg %p163
        %p427 = pneg %p160
        %p428 = pneg %p184
        %p429 = pneg %p181
        %p430 = pneg %p205
        %p431 = pneg %p202
        %p432 = pneg %p226
        %p433 = pneg %p223
        %p434 = pneg %p252
        %p435 = pneg %p249
        %s436 = smul.u32 16, %s27
        %p437 = scmp.lt.s32.totalorder %s436, 63
        %s438 = scalar_select %p437, %s436, 63
        %s439 = smul.addr %s438, 8
        %s440 = scalar_lea.vmem %s9, %s439
        %s441 = smul.u32 16, %s27
        %p442 = scmp.lt.s32.totalorder %s441, 63
        %s443 = scalar_select %p442, %s441, 63
        %s444 = smul.addr %s443, 8
        %s445 = scalar_lea.vmem %s0, %s444
        %s446 = smul.u32 16, %s27
        %s447 = smul.u32 16, %s27
        %p448 = scmp.lt.s32.totalorder %s447, 63
        %s449 = scalar_select %p448, %s447, 63
        %s450 = smul.addr %s449, 8
        %s451 = scalar_lea.vmem %s9, %s450
        %s452 = smul.u32 16, %s27
        %v454 = vld [vmem:[%s445] sm:$0xff]
        %v455 = vld [vmem:[%s445 + $0x8] sm:$0xff]
        %v456 = vld [vmem:[%s445 + $0x10] sm:$0xff]
        %v457 = vld [vmem:[%s445 + $0x18] sm:$0xff]
        %v458 = vld [vmem:[%s445 + $0x20] sm:$0xff]
        %v459 = vld [vmem:[%s445 + $0x28] sm:$0xff]
        %v460 = vld [vmem:[%s445 + $0x30] sm:$0xff]
        %v461 = vld [vmem:[%s445 + $0x38] sm:$0xff]
        %v462 = vld [vmem:[%s445 + $0x40] sm:$0xff]
        %v463 = vld [vmem:[%s445 + $0x48] sm:$0xff]
        %v464 = vld [vmem:[%s445 + $0x50] sm:$0xff]
        %v465 = vld [vmem:[%s445 + $0x58] sm:$0xff]
        %v466 = vld [vmem:[%s445 + $0x60] sm:$0xff]
        %v467 = vld [vmem:[%s445 + $0x68] sm:$0xff]
        %v468 = vld [vmem:[%s445 + $0x70] sm:$0xff]
        %v469 = vld [vmem:[%s445 + $0x78] sm:$0xff]
        %v470 = vld [vmem:[#allocation10] sm:$0xff]
        %v471 = vld [vmem:[#allocation10 + $0x8] sm:$0xff]
        %vm472 = vcmask 261120
        %v473 = vsel %vm472, %v454, 0.0
        %474 = vadd.xlane.f32.xlu0 %v473
        %v475 = vpop.xlane.xlu0 %474
        %v476 = vsel %vm472, %v455, 0.0
        %477 = vadd.xlane.f32.xlu0 %v476
        %v478 = vpop.xlane.xlu0 %477
        %v479 = vsel %vm472, %v456, 0.0
        %480 = vadd.xlane.f32.xlu0 %v479
        %v481 = vpop.xlane.xlu0 %480
        %v482 = vsel %vm472, %v457, 0.0
        %483 = vadd.xlane.f32.xlu0 %v482
        %v484 = vpop.xlane.xlu0 %483
        %v485 = vsel %vm472, %v458, 0.0
        %486 = vadd.xlane.f32.xlu0 %v485
        %v487 = vpop.xlane.xlu0 %486
        %v488 = vsel %vm472, %v459, 0.0
        %489 = vadd.xlane.f32.xlu0 %v488
        %v490 = vpop.xlane.xlu0 %489
        %v491 = vsel %vm472, %v460, 0.0
        %492 = vadd.xlane.f32.xlu0 %v491
        %v493 = vpop.xlane.xlu0 %492
        %v494 = vsel %vm472, %v461, 0.0
        %495 = vadd.xlane.f32.xlu0 %v494
        %v496 = vpop.xlane.xlu0 %495
        %v497 = vsel %vm472, %v462, 0.0
        %498 = vadd.xlane.f32.xlu0 %v497
        %v499 = vpop.xlane.xlu0 %498
        %v500 = vsel %vm472, %v463, 0.0
        %501 = vadd.xlane.f32.xlu0 %v500
        %v502 = vpop.xlane.xlu0 %501
        %v503 = vsel %vm472, %v464, 0.0
        %504 = vadd.xlane.f32.xlu0 %v503
        %v505 = vpop.xlane.xlu0 %504
        %v506 = vsel %vm472, %v465, 0.0
        %507 = vadd.xlane.f32.xlu0 %v506
        %v508 = vpop.xlane.xlu0 %507
        %v509 = vsel %vm472, %v466, 0.0
        %510 = vadd.xlane.f32.xlu0 %v509
        %v511 = vpop.xlane.xlu0 %510
        %v512 = vsel %vm472, %v467, 0.0
        %513 = vadd.xlane.f32.xlu0 %v512
        %v514 = vpop.xlane.xlu0 %513
        %v515 = vsel %vm472, %v468, 0.0
        %516 = vadd.xlane.f32.xlu0 %v515
        %v517 = vpop.xlane.xlu0 %516
        %v518 = vsel %vm472, %v469, 0.0
        %519 = vadd.xlane.f32.xlu0 %v518
        %v520 = vpop.xlane.xlu0 %519
        %v521 = vmul.f32 %v475, 0.03125
        %v522 = vmul.f32 %v478, 0.03125
        %v523 = vmul.f32 %v481, 0.03125
        %v524 = vmul.f32 %v484, 0.03125
        %v525 = vmul.f32 %v487, 0.03125
        %v526 = vmul.f32 %v490, 0.03125
        %v527 = vmul.f32 %v493, 0.03125
        %v528 = vmul.f32 %v496, 0.03125
        %v529 = vmul.f32 %v499, 0.03125
        %v530 = vmul.f32 %v502, 0.03125
        %v531 = vmul.f32 %v505, 0.03125
        %v532 = vmul.f32 %v508, 0.03125
        %v533 = vmul.f32 %v511, 0.03125
        %v534 = vmul.f32 %v514, 0.03125
        %v535 = vmul.f32 %v517, 0.03125
        %v536 = vmul.f32 %v520, 0.03125
        %v537 = vmul.f32 %v454, %v454
        %v538 = vmul.f32 %v455, %v455
        %v539 = vmul.f32 %v456, %v456
        %v540 = vmul.f32 %v457, %v457
        %v541 = vmul.f32 %v458, %v458
        %v542 = vmul.f32 %v459, %v459
        %v543 = vmul.f32 %v460, %v460
        %v544 = vmul.f32 %v461, %v461
        %v545 = vmul.f32 %v462, %v462
        %v546 = vmul.f32 %v463, %v463
        %v547 = vmul.f32 %v464, %v464
        %v548 = vmul.f32 %v465, %v465
        %v549 = vmul.f32 %v466, %v466
        %v550 = vmul.f32 %v467, %v467
        %v551 = vmul.f32 %v468, %v468
        %v552 = vmul.f32 %v469, %v469
        %v553 = vsel %vm472, %v537, 0.0
        %554 = vadd.xlane.f32.xlu0 %v553
        %v555 = vpop.xlane.xlu0 %554
        %v556 = vsel %vm472, %v538, 0.0
        %557 = vadd.xlane.f32.xlu0 %v556
        %v558 = vpop.xlane.xlu0 %557
        %v559 = vsel %vm472, %v539, 0.0
        %560 = vadd.xlane.f32.xlu0 %v559
        %v561 = vpop.xlane.xlu0 %560
        %v562 = vsel %vm472, %v540, 0.0
        %563 = vadd.xlane.f32.xlu0 %v562
        %v564 = vpop.xlane.xlu0 %563
        %v565 = vsel %vm472, %v541, 0.0
        %566 = vadd.xlane.f32.xlu0 %v565
        %v567 = vpop.xlane.xlu0 %566
        %v568 = vsel %vm472, %v542, 0.0
        %569 = vadd.xlane.f32.xlu0 %v568
        %v570 = vpop.xlane.xlu0 %569
        %v571 = vsel %vm472, %v543, 0.0
        %572 = vadd.xlane.f32.xlu0 %v571
        %v573 = vpop.xlane.xlu0 %572
        %v574 = vsel %vm472, %v544, 0.0
        %575 = vadd.xlane.f32.xlu0 %v574
        %v576 = vpop.xlane.xlu0 %575
        %v577 = vsel %vm472, %v545, 0.0
        %578 = vadd.xlane.f32.xlu0 %v577
        %v579 = vpop.xlane.xlu0 %578
        %v580 = vsel %vm472, %v546, 0.0
        %581 = vadd.xlane.f32.xlu0 %v580
        %v582 = vpop.xlane.xlu0 %581
        %v583 = vsel %vm472, %v547, 0.0
        %584 = vadd.xlane.f32.xlu0 %v583
        %v585 = vpop.xlane.xlu0 %584
        %v586 = vsel %vm472, %v548, 0.0
        %587 = vadd.xlane.f32.xlu0 %v586
        %v588 = vpop.xlane.xlu0 %587
        %v589 = vsel %vm472, %v549, 0.0
        %590 = vadd.xlane.f32.xlu0 %v589
        %v591 = vpop.xlane.xlu0 %590
        %v592 = vsel %vm472, %v550, 0.0
        %593 = vadd.xlane.f32.xlu0 %v592
        %v594 = vpop.xlane.xlu0 %593
        %v595 = vsel %vm472, %v551, 0.0
        %596 = vadd.xlane.f32.xlu0 %v595
        %v597 = vpop.xlane.xlu0 %596
        %v598 = vsel %vm472, %v552, 0.0
        %599 = vadd.xlane.f32.xlu0 %v598
        %v600 = vpop.xlane.xlu0 %599
        %v601 = vmul.f32 %v555, 0.03125
        %v602 = vmul.f32 %v558, 0.03125
        %v603 = vmul.f32 %v561, 0.03125
        %v604 = vmul.f32 %v564, 0.03125
        %v605 = vmul.f32 %v567, 0.03125
        %v606 = vmul.f32 %v570, 0.03125
        %v607 = vmul.f32 %v573, 0.03125
        %v608 = vmul.f32 %v576, 0.03125
        %v609 = vmul.f32 %v579, 0.03125
        %v610 = vmul.f32 %v582, 0.03125
        %v611 = vmul.f32 %v585, 0.03125
        %v612 = vmul.f32 %v588, 0.03125
        %v613 = vmul.f32 %v591, 0.03125
        %v614 = vmul.f32 %v594, 0.03125
        %v615 = vmul.f32 %v597, 0.03125
        %v616 = vmul.f32 %v600, 0.03125
        %v617 = vsub.f32 %v454, %v521
        %v618 = vsub.f32 %v455, %v522
        %v619 = vsub.f32 %v456, %v523
        %v620 = vsub.f32 %v457, %v524
        %v621 = vsub.f32 %v458, %v525
        %v622 = vsub.f32 %v459, %v526
        %v623 = vsub.f32 %v460, %v527
        %v624 = vsub.f32 %v461, %v528
        %v625 = vsub.f32 %v462, %v529
        %v626 = vsub.f32 %v463, %v530
        %v627 = vsub.f32 %v464, %v531
        %v628 = vsub.f32 %v465, %v532
        %v629 = vsub.f32 %v466, %v533
        %v630 = vsub.f32 %v467, %v534
        %v631 = vsub.f32 %v468, %v535
        %v632 = vsub.f32 %v469, %v536
        %v633 = vmul.f32 %v521, %v521
        %v634 = vmul.f32 %v522, %v522
        %v635 = vmul.f32 %v523, %v523
        %v636 = vmul.f32 %v524, %v524
        %v637 = vmul.f32 %v525, %v525
        %v638 = vmul.f32 %v526, %v526
        %v639 = vmul.f32 %v527, %v527
        %v640 = vmul.f32 %v528, %v528
        %v641 = vmul.f32 %v529, %v529
        %v642 = vmul.f32 %v530, %v530
        %v643 = vmul.f32 %v531, %v531
        %v644 = vmul.f32 %v532, %v532
        %v645 = vmul.f32 %v533, %v533
        %v646 = vmul.f32 %v534, %v534
        %v647 = vmul.f32 %v535, %v535
        %v648 = vmul.f32 %v536, %v536
        %v649 = vsub.f32 %v601, %v633
        %v650 = vsub.f32 %v602, %v634
        %v651 = vsub.f32 %v603, %v635
        %v652 = vsub.f32 %v604, %v636
        %v653 = vsub.f32 %v605, %v637
        %v654 = vsub.f32 %v606, %v638
        %v655 = vsub.f32 %v607, %v639
        %v656 = vsub.f32 %v608, %v640
        %v657 = vsub.f32 %v609, %v641
        %v658 = vsub.f32 %v610, %v642
        %v659 = vsub.f32 %v611, %v643
        %v660 = vsub.f32 %v612, %v644
        %v661 = vsub.f32 %v613, %v645
        %v662 = vsub.f32 %v614, %v646
        %v663 = vsub.f32 %v615, %v647
        %v664 = vsub.f32 %v616, %v648
        %v665 = vadd.f32 %v649, 1e-05
        %v666 = vadd.f32 %v650, 1e-05
        %v667 = vadd.f32 %v651, 1e-05
        %v668 = vadd.f32 %v652, 1e-05
        %v669 = vadd.f32 %v653, 1e-05
        %v670 = vadd.f32 %v654, 1e-05
        %v671 = vadd.f32 %v655, 1e-05
        %v672 = vadd.f32 %v656, 1e-05
        %v673 = vadd.f32 %v657, 1e-05
        %v674 = vadd.f32 %v658, 1e-05
        %v675 = vadd.f32 %v659, 1e-05
        %v676 = vadd.f32 %v660, 1e-05
        %v677 = vadd.f32 %v661, 1e-05
        %v678 = vadd.f32 %v662, 1e-05
        %v679 = vadd.f32 %v663, 1e-05
        %v680 = vadd.f32 %v664, 1e-05
        %v681 = vrsqrt.pop %v665
        %v682 = vrsqrt.pop %v666
        %v683 = vrsqrt.pop %v667
        %v684 = vrsqrt.pop %v668
        %v685 = vrsqrt.pop %v669
        %v686 = vrsqrt.pop %v670
        %v687 = vrsqrt.pop %v671
        %v688 = vrsqrt.pop %v672
        %v689 = vrsqrt.pop %v673
        %v690 = vrsqrt.pop %v674
        %v691 = vrsqrt.pop %v675
        %v692 = vrsqrt.pop %v676
        %v693 = vrsqrt.pop %v677
        %v694 = vrsqrt.pop %v678
        %v695 = vrsqrt.pop %v679
        %v696 = vrsqrt.pop %v680
        %v697 = vmul.f32 %v617, %v681
        %v698 = vmul.f32 %v618, %v682
        %v699 = vmul.f32 %v619, %v683
        %v700 = vmul.f32 %v620, %v684
        %v701 = vmul.f32 %v621, %v685
        %v702 = vmul.f32 %v622, %v686
        %v703 = vmul.f32 %v623, %v687
        %v704 = vmul.f32 %v624, %v688
        %v705 = vmul.f32 %v625, %v689
        %v706 = vmul.f32 %v626, %v690
        %v707 = vmul.f32 %v627, %v691
        %v708 = vmul.f32 %v628, %v692
        %v709 = vmul.f32 %v629, %v693
        %v710 = vmul.f32 %v630, %v694
        %v711 = vmul.f32 %v631, %v695
        %v712 = vmul.f32 %v632, %v696
        %v713 = vlaneseq
        %v714 = vshrl.u32 %v713, 7
        %v715 = vsub.s32 0, %v714
        %v716 = vrot.slane %v470, %v715
        %v717 = vmul.f32 %v697, %v716
        %v718 = vmul.f32 %v698, %v716
        %v719 = vmul.f32 %v699, %v716
        %v720 = vmul.f32 %v700, %v716
        %v721 = vmul.f32 %v701, %v716
        %v722 = vmul.f32 %v702, %v716
        %v723 = vmul.f32 %v703, %v716
        %v724 = vmul.f32 %v704, %v716
        %v725 = vmul.f32 %v705, %v716
        %v726 = vmul.f32 %v706, %v716
        %v727 = vmul.f32 %v707, %v716
        %v728 = vmul.f32 %v708, %v716
        %v729 = vmul.f32 %v709, %v716
        %v730 = vmul.f32 %v710, %v716
        %v731 = vmul.f32 %v711, %v716
        %v732 = vmul.f32 %v712, %v716
        %v733 = vlaneseq
        %v734 = vshrl.u32 %v733, 7
        %v735 = vsub.s32 1, %v734
        %v736 = vrot.slane %v470, %v735
        %v737 = vadd.f32 %v717, %v736
        %v738 = vadd.f32 %v718, %v736
        %v739 = vadd.f32 %v719, %v736
        %v740 = vadd.f32 %v720, %v736
        %v741 = vadd.f32 %v721, %v736
        %v742 = vadd.f32 %v722, %v736
        %v743 = vadd.f32 %v723, %v736
        %v744 = vadd.f32 %v724, %v736
        %v745 = vadd.f32 %v725, %v736
        %v746 = vadd.f32 %v726, %v736
        %v747 = vadd.f32 %v727, %v736
        %v748 = vadd.f32 %v728, %v736
        %v749 = vadd.f32 %v729, %v736
        %v750 = vadd.f32 %v730, %v736
        %v751 = vadd.f32 %v731, %v736
        %v752 = vadd.f32 %v732, %v736
        %v753 = vpack.c.bf16 %v738, %v737
        %v754 = vpack.c.bf16 %v740, %v739
        %v755 = vpack.c.bf16 %v742, %v741
        %v756 = vpack.c.bf16 %v744, %v743
        %v757 = vpack.c.bf16 %v746, %v745
        %v758 = vpack.c.bf16 %v748, %v747
        %v759 = vpack.c.bf16 %v750, %v749
        %v760 = vpack.c.bf16 %v752, %v751
        %v761 = vld [vmem:[%s3] sm:$0xf]
        %v762 = vld [vmem:[%s3 + $0x4] sm:$0xf]
        %v763 = vld [vmem:[%s3 + $0x8] sm:$0xf]
        %v764 = vld [vmem:[%s3 + $0xc] sm:$0xf]
        %v765 = vlaneseq
        %v766 = vshrl.u32 %v765, 7
        %v767 = vsub.s32 2, %v766
        %v768 = vrot.slane %v470, %v767
        %v773 = vunpack.c.l.b16 %v761
        %v774 = vunpack.c.l.b16 %v762
        %v775 = vunpack.c.l.b16 %v763
        %v776 = vunpack.c.l.b16 %v764
        %v777 = vpack.c.b16 %v774, %v773
        %v778 = vpack.c.b16 %v776, %v775
        %v782 = vsel %vm472, %v753, 0
        %v785 = vsel %vm472, %v754, 0
        %v788 = vsel %vm472, %v755, 0
        %v791 = vsel %vm472, %v756, 0
        %v794 = vsel %vm472, %v757, 0
        %v797 = vsel %vm472, %v758, 0
        %v800 = vsel %vm472, %v759, 0
        %v803 = vsel %vm472, %v760, 0
        %805 = vmatprep.subr.bf16.mxu0 0
        %806 = vmatpush1.bf16.msra.mxu0 %v777
        %807 = vmatprep.subr.bf16.mxu0 0
        %808 = vmatpush1.bf16.msra.mxu0 %v778
        %809 = vmatprep.subr.bf16.mxu0 0
        %810 = vmatpush1.bf16.msra.mxu0 0
        %811 = vmatprep.subr.bf16.mxu0 0
        %812 = vmatpush1.bf16.msra.mxu0 0
        %813 = vmatprep.subr.bf16.mxu0 0
        %814 = vmatpush1.bf16.msra.mxu0 0
        %815 = vmatprep.subr.bf16.mxu0 0
        %816 = vmatpush1.bf16.msra.mxu0 0
        %817 = vmatprep.subr.bf16.mxu0 0
        %818 = vmatpush1.bf16.msra.mxu0 0
        %819 = vmatprep.subr.bf16.mxu0 0
        %820 = vmatpush1.bf16.msra.mxu0 0
        %821 = vmatprep.subr.bf16.mxu0 0
        %822 = vmatpush1.bf16.msra.mxu0 0
        %823 = vmatprep.subr.bf16.mxu0 0
        %824 = vmatpush1.bf16.msra.mxu0 0
        %825 = vmatprep.subr.bf16.mxu0 0
        %826 = vmatpush1.bf16.msra.mxu0 0
        %827 = vmatprep.subr.bf16.mxu0 0
        %828 = vmatpush1.bf16.msra.mxu0 0
        %829 = vmatprep.subr.bf16.mxu0 0
        %830 = vmatpush1.bf16.msra.mxu0 0
        %831 = vmatprep.subr.bf16.mxu0 0
        %832 = vmatpush1.bf16.msra.mxu0 0
        %833 = vmatprep.subr.bf16.mxu0 0
        %834 = vmatpush1.bf16.msra.mxu0 0
        %835 = vmatprep.subr.bf16.mxu0 0
        %836 = vmatpush1.bf16.msra.mxu0 0
        %837 = vmatprep.mubr.bf16.mxu0 0
        %838 = vmatmul.mubr.bf16.gmra.mrb[0].mxu0 %v782
        %v839 = vpop.f32.mrb[0].mxu0
        %v840 = vadd.f32 %v768, %v839
        %v841 = vpop.f32.mrb[0].mxu0
        %v842 = vpop.f32.mrb[0].mxu0
        %v843 = vadd.f32 %v768, %v842
        %v844 = vpop.f32.mrb[0].mxu0
        %845 = vmatprep.mubr.bf16.mxu0 0
        %846 = vmatmul.mubr.bf16.gmra.mrb[0].mxu0 %v785
        %v847 = vpop.f32.mrb[0].mxu0
        %v848 = vadd.f32 %v768, %v847
        %v849 = vpop.f32.mrb[0].mxu0
        %v850 = vpop.f32.mrb[0].mxu0
        %v851 = vadd.f32 %v768, %v850
        %v852 = vpop.f32.mrb[0].mxu0
        %853 = vmatprep.mubr.bf16.mxu0 0
        %854 = vmatmul.mubr.bf16.gmra.mrb[0].mxu0 %v788
        %v855 = vpop.f32.mrb[0].mxu0
        %v856 = vadd.f32 %v768, %v855
        %v857 = vpop.f32.mrb[0].mxu0
        %v858 = vpop.f32.mrb[0].mxu0
        %v859 = vadd.f32 %v768, %v858
        %v860 = vpop.f32.mrb[0].mxu0
        %861 = vmatprep.mubr.bf16.mxu0 0
        %862 = vmatmul.mubr.bf16.gmra.mrb[0].mxu0 %v791
        %v863 = vpop.f32.mrb[0].mxu0
        %v864 = vadd.f32 %v768, %v863
        %v865 = vpop.f32.mrb[0].mxu0
        %v866 = vpop.f32.mrb[0].mxu0
        %v867 = vadd.f32 %v768, %v866
        %v868 = vpop.f32.mrb[0].mxu0
        %869 = vmatprep.mubr.bf16.mxu0 0
        %870 = vmatmul.mubr.bf16.gmra.mrb[0].mxu0 %v794
        %v871 = vpop.f32.mrb[0].mxu0
        %v872 = vadd.f32 %v768, %v871
        %v873 = vpop.f32.mrb[0].mxu0
        %v874 = vpop.f32.mrb[0].mxu0
        %v875 = vadd.f32 %v768, %v874
        %v876 = vpop.f32.mrb[0].mxu0
        %877 = vmatprep.mubr.bf16.mxu0 0
        %878 = vmatmul.mubr.bf16.gmra.mrb[0].mxu0 %v797
        %v879 = vpop.f32.mrb[0].mxu0
        %v880 = vadd.f32 %v768, %v879
        %v881 = vpop.f32.mrb[0].mxu0
        %v882 = vpop.f32.mrb[0].mxu0
        %v883 = vadd.f32 %v768, %v882
        %v884 = vpop.f32.mrb[0].mxu0
        %885 = vmatprep.mubr.bf16.mxu0 0
        %886 = vmatmul.mubr.bf16.gmra.mrb[0].mxu0 %v800
        %v887 = vpop.f32.mrb[0].mxu0
        %v888 = vadd.f32 %v768, %v887
        %v889 = vpop.f32.mrb[0].mxu0
        %v890 = vpop.f32.mrb[0].mxu0
        %v891 = vadd.f32 %v768, %v890
        %v892 = vpop.f32.mrb[0].mxu0
        %893 = vmatprep.mubr.bf16.mxu0 0
        %894 = vmatmul.mubr.bf16.gmra.mrb[0].mxu0 %v803
        %v895 = vpop.f32.mrb[0].mxu0
        %v896 = vadd.f32 %v768, %v895
        %v897 = vpop.f32.mrb[0].mxu0
        %v898 = vpop.f32.mrb[0].mxu0
        %v899 = vadd.f32 %v768, %v898
        %v900 = vpop.f32.mrb[0].mxu0
        %901 = vdwg.mxu0
        %902 = vxpose.xlu0.b32.start [1/16] %v840, 128
        %903 = vxpose.xlu0.b32.cont [2/16] %v843, 128
        %904 = vxpose.xlu0.b32.cont [3/16] %v848, 128
        %905 = vxpose.xlu0.b32.cont [4/16] %v851, 128
        %906 = vxpose.xlu0.b32.cont [5/16] %v856, 128
        %907 = vxpose.xlu0.b32.cont [6/16] %v859, 128
        %908 = vxpose.xlu0.b32.cont [7/16] %v864, 128
        %909 = vxpose.xlu0.b32.cont [8/16] %v867, 128
        %910 = vxpose.xlu0.b32.cont [9/16] %v872, 128
        %911 = vxpose.xlu0.b32.cont [10/16] %v875, 128
        %912 = vxpose.xlu0.b32.cont [11/16] %v880, 128
        %913 = vxpose.xlu0.b32.cont [12/16] %v883, 128
        %914 = vxpose.xlu0.b32.cont [13/16] %v888, 128
        %915 = vxpose.xlu0.b32.cont [14/16] %v891, 128
        %916 = vxpose.xlu0.b32.cont [15/16] %v896, 128
        %917 = vxpose.xlu0.b32.end [16/16] %v899, 128
        %v918 = vpop.trf.xlu0
        %v919 = vpop.trf.xlu0
        %v920 = vpop.trf.xlu0
        %v921 = vpop.trf.xlu0
        %v922 = vpop.trf.xlu0
        %v923 = vpop.trf.xlu0
        %v924 = vpop.trf.xlu0
        %v925 = vpop.trf.xlu0
        %v926 = vpop.trf.xlu0
        %v927 = vpop.trf.xlu0
        %v928 = vpop.trf.xlu0
        %v929 = vpop.trf.xlu0
        %v930 = vpop.trf.xlu0
        %v931 = vpop.trf.xlu0
        %v932 = vpop.trf.xlu0
        %v933 = vpop.trf.xlu0
        %v934 = vpack.c.bf16 %v927, %v926
        %v935 = vpack.c.bf16 %v929, %v928
        %v936 = vpack.c.bf16 %v931, %v930
        %v937 = vpack.c.bf16 %v933, %v932
        %v938 = vld [vmem:[%s5] sm:$0xff]
        %v939 = vld [vmem:[%s5 + $0x8] sm:$0xff]
        %v940 = vld [vmem:[%s5 + $0x10] sm:$0xff]
        %v941 = vld [vmem:[%s5 + $0x18] sm:$0xff]
        %v942 = vld [vmem:[%s5 + $0x20] sm:$0xff]
        %v943 = vld [vmem:[%s5 + $0x28] sm:$0xff]
        %v944 = vld [vmem:[%s5 + $0x30] sm:$0xff]
        %v945 = vld [vmem:[%s5 + $0x38] sm:$0xff]
        %v946 = vld [vmem:[%s5 + $0x40] sm:$0xff]
        %v947 = vld [vmem:[%s5 + $0x48] sm:$0xff]
        %v948 = vld [vmem:[%s5 + $0x50] sm:$0xff]
        %v949 = vld [vmem:[%s5 + $0x58] sm:$0xff]
        %v950 = vld [vmem:[%s5 + $0x60] sm:$0xff]
        %v951 = vld [vmem:[%s5 + $0x68] sm:$0xff]
        %v952 = vld [vmem:[%s5 + $0x70] sm:$0xff]
        %v953 = vld [vmem:[%s5 + $0x78] sm:$0xff]
        %v954 = vld [vmem:[%s5 + $0x80] sm:$0xff]
        %v955 = vld [vmem:[%s5 + $0x88] sm:$0xff]
        %v956 = vld [vmem:[%s5 + $0x90] sm:$0xff]
        %v957 = vld [vmem:[%s5 + $0x98] sm:$0xff]
        %v958 = vld [vmem:[%s5 + $0xa0] sm:$0xff]
        %v959 = vld [vmem:[%s5 + $0xa8] sm:$0xff]
        %v960 = vld [vmem:[%s5 + $0xb0] sm:$0xff]
        %v961 = vld [vmem:[%s5 + $0xb8] sm:$0xff]
        %v962 = vld [vmem:[%s5 + $0xc0] sm:$0xff]
        %v963 = vld [vmem:[%s5 + $0xc8] sm:$0xff]
        %v964 = vld [vmem:[%s5 + $0xd0] sm:$0xff]
        %v965 = vld [vmem:[%s5 + $0xd8] sm:$0xff]
        %v966 = vld [vmem:[%s5 + $0xe0] sm:$0xff]
        %v967 = vld [vmem:[%s5 + $0xe8] sm:$0xff]
        %v968 = vld [vmem:[%s5 + $0xf0] sm:$0xff]
        %v969 = vld [vmem:[%s5 + $0xf8] sm:$0xff]
        %v970 = vld [vmem:[%s5 + $0x100] sm:$0xff]
        %v971 = vld [vmem:[%s5 + $0x108] sm:$0xff]
        %v972 = vld [vmem:[%s5 + $0x110] sm:$0xff]
        %v973 = vld [vmem:[%s5 + $0x118] sm:$0xff]
        %v974 = vld [vmem:[%s5 + $0x120] sm:$0xff]
        %v975 = vld [vmem:[%s5 + $0x128] sm:$0xff]
        %v976 = vld [vmem:[%s5 + $0x130] sm:$0xff]
        %v977 = vld [vmem:[%s5 + $0x138] sm:$0xff]
        %v978 = vld [vmem:[%s5 + $0x140] sm:$0xff]
        %v979 = vld [vmem:[%s5 + $0x148] sm:$0xff]
        %v980 = vld [vmem:[%s5 + $0x150] sm:$0xff]
        %v981 = vld [vmem:[%s5 + $0x158] sm:$0xff]
        %v982 = vld [vmem:[%s5 + $0x160] sm:$0xff]
        %v983 = vld [vmem:[%s5 + $0x168] sm:$0xff]
        %v984 = vld [vmem:[%s5 + $0x170] sm:$0xff]
        %v985 = vld [vmem:[%s5 + $0x178] sm:$0xff]
        %v986 = vld [vmem:[%s5 + $0x180] sm:$0xff]
        %v987 = vld [vmem:[%s5 + $0x188] sm:$0xff]
        %v988 = vld [vmem:[%s5 + $0x190] sm:$0xff]
        %v989 = vld [vmem:[%s5 + $0x198] sm:$0xff]
        %v990 = vld [vmem:[%s5 + $0x1a0] sm:$0xff]
        %v991 = vld [vmem:[%s5 + $0x1a8] sm:$0xff]
        %v992 = vld [vmem:[%s5 + $0x1b0] sm:$0xff]
        %v993 = vld [vmem:[%s5 + $0x1b8] sm:$0xff]
        %v994 = vld [vmem:[%s5 + $0x1c0] sm:$0xff]
        %v995 = vld [vmem:[%s5 + $0x1c8] sm:$0xff]
        %v996 = vld [vmem:[%s5 + $0x1d0] sm:$0xff]
        %v997 = vld [vmem:[%s5 + $0x1d8] sm:$0xff]
        %v998 = vld [vmem:[%s5 + $0x1e0] sm:$0xff]
        %v999 = vld [vmem:[%s5 + $0x1e8] sm:$0xff]
        %v1000 = vld [vmem:[%s5 + $0x1f0] sm:$0xff]
        %v1001 = vld [vmem:[%s5 + $0x1f8] sm:$0xff]
        %v1066 = vunpack.c.l.b16 %v938
        %v1067 = vunpack.c.h.b16 %v938
        %v1068 = vunpack.c.l.b16 %v939
        %v1069 = vunpack.c.h.b16 %v939
        %v1070 = vunpack.c.l.b16 %v940
        %v1071 = vunpack.c.h.b16 %v940
        %v1072 = vunpack.c.l.b16 %v941
        %v1073 = vunpack.c.h.b16 %v941
        %v1074 = vunpack.c.l.b16 %v942
        %v1075 = vunpack.c.h.b16 %v942
        %v1076 = vunpack.c.l.b16 %v943
        %v1077 = vunpack.c.h.b16 %v943
        %v1078 = vunpack.c.l.b16 %v944
        %v1079 = vunpack.c.h.b16 %v944
        %v1080 = vunpack.c.l.b16 %v945
        %v1081 = vunpack.c.h.b16 %v945
        %v1082 = vunpack.c.l.b16 %v946
        %v1083 = vunpack.c.h.b16 %v946
        %v1084 = vunpack.c.l.b16 %v947
        %v1085 = vunpack.c.h.b16 %v947
        %v1086 = vunpack.c.l.b16 %v948
        %v1087 = vunpack.c.h.b16 %v948
        %v1088 = vunpack.c.l.b16 %v949
        %v1089 = vunpack.c.h.b16 %v949
        %v1090 = vunpack.c.l.b16 %v950
        %v1091 = vunpack.c.h.b16 %v950
        %v1092 = vunpack.c.l.b16 %v951
        %v1093 = vunpack.c.h.b16 %v951
        %v1094 = vunpack.c.l.b16 %v952
        %v1095 = vunpack.c.h.b16 %v952
        %v1096 = vunpack.c.l.b16 %v953
        %v1097 = vunpack.c.h.b16 %v953
        %v1098 = vunpack.c.l.b16 %v954
        %v1099 = vunpack.c.h.b16 %v954
        %v1100 = vunpack.c.l.b16 %v955
        %v1101 = vunpack.c.h.b16 %v955
        %v1102 = vunpack.c.l.b16 %v956
        %v1103 = vunpack.c.h.b16 %v956
        %v1104 = vunpack.c.l.b16 %v957
        %v1105 = vunpack.c.h.b16 %v957
        %v1106 = vunpack.c.l.b16 %v958
        %v1107 = vunpack.c.h.b16 %v958
        %v1108 = vunpack.c.l.b16 %v959
        %v1109 = vunpack.c.h.b16 %v959
        %v1110 = vunpack.c.l.b16 %v960
        %v1111 = vunpack.c.h.b16 %v960
        %v1112 = vunpack.c.l.b16 %v961
        %v1113 = vunpack.c.h.b16 %v961
        %v1114 = vunpack.c.l.b16 %v962
        %v1115 = vunpack.c.h.b16 %v962
        %v1116 = vunpack.c.l.b16 %v963
        %v1117 = vunpack.c.h.b16 %v963
        %v1118 = vunpack.c.l.b16 %v964
        %v1119 = vunpack.c.h.b16 %v964
        %v1120 = vunpack.c.l.b16 %v965
        %v1121 = vunpack.c.h.b16 %v965
        %v1122 = vunpack.c.l.b16 %v966
        %v1123 = vunpack.c.h.b16 %v966
        %v1124 = vunpack.c.l.b16 %v967
        %v1125 = vunpack.c.h.b16 %v967
        %v1126 = vunpack.c.l.b16 %v968
        %v1127 = vunpack.c.h.b16 %v968
        %v1128 = vunpack.c.l.b16 %v969
        %v1129 = vunpack.c.h.b16 %v969
        %v1130 = vunpack.c.l.b16 %v970
        %v1131 = vunpack.c.h.b16 %v970
        %v1132 = vunpack.c.l.b16 %v971
        %v1133 = vunpack.c.h.b16 %v971
        %v1134 = vunpack.c.l.b16 %v972
        %v1135 = vunpack.c.h.b16 %v972
        %v1136 = vunpack.c.l.b16 %v973
        %v1137 = vunpack.c.h.b16 %v973
        %v1138 = vunpack.c.l.b16 %v974
        %v1139 = vunpack.c.h.b16 %v974
        %v1140 = vunpack.c.l.b16 %v975
        %v1141 = vunpack.c.h.b16 %v975
        %v1142 = vunpack.c.l.b16 %v976
        %v1143 = vunpack.c.h.b16 %v976
        %v1144 = vunpack.c.l.b16 %v977
        %v1145 = vunpack.c.h.b16 %v977
        %v1146 = vunpack.c.l.b16 %v978
        %v1147 = vunpack.c.h.b16 %v978
        %v1148 = vunpack.c.l.b16 %v979
        %v1149 = vunpack.c.h.b16 %v979
        %v1150 = vunpack.c.l.b16 %v980
        %v1151 = vunpack.c.h.b16 %v980
        %v1152 = vunpack.c.l.b16 %v981
        %v1153 = vunpack.c.h.b16 %v981
        %v1154 = vunpack.c.l.b16 %v982
        %v1155 = vunpack.c.h.b16 %v982
        %v1156 = vunpack.c.l.b16 %v983
        %v1157 = vunpack.c.h.b16 %v983
        %v1158 = vunpack.c.l.b16 %v984
        %v1159 = vunpack.c.h.b16 %v984
        %v1160 = vunpack.c.l.b16 %v985
        %v1161 = vunpack.c.h.b16 %v985
        %v1162 = vunpack.c.l.b16 %v986
        %v1163 = vunpack.c.h.b16 %v986
        %v1164 = vunpack.c.l.b16 %v987
        %v1165 = vunpack.c.h.b16 %v987
        %v1166 = vunpack.c.l.b16 %v988
        %v1167 = vunpack.c.h.b16 %v988
        %v1168 = vunpack.c.l.b16 %v989
        %v1169 = vunpack.c.h.b16 %v989
        %v1170 = vunpack.c.l.b16 %v990
        %v1171 = vunpack.c.h.b16 %v990
        %v1172 = vunpack.c.l.b16 %v991
        %v1173 = vunpack.c.h.b16 %v991
        %v1174 = vunpack.c.l.b16 %v992
        %v1175 = vunpack.c.h.b16 %v992
        %v1176 = vunpack.c.l.b16 %v993
        %v1177 = vunpack.c.h.b16 %v993
        %v1178 = vunpack.c.l.b16 %v994
        %v1179 = vunpack.c.h.b16 %v994
        %v1180 = vunpack.c.l.b16 %v995
        %v1181 = vunpack.c.h.b16 %v995
        %v1182 = vunpack.c.l.b16 %v996
        %v1183 = vunpack.c.h.b16 %v996
        %v1184 = vunpack.c.l.b16 %v997
        %v1185 = vunpack.c.h.b16 %v997
        %v1186 = vunpack.c.l.b16 %v998
        %v1187 = vunpack.c.h.b16 %v998
        %v1188 = vunpack.c.l.b16 %v999
        %v1189 = vunpack.c.h.b16 %v999
        %v1190 = vunpack.c.l.b16 %v1000
        %v1191 = vunpack.c.h.b16 %v1000
        %v1192 = vunpack.c.l.b16 %v1001
        %v1193 = vunpack.c.h.b16 %v1001
        %v1194 = vpack.c.b16 %v1074, %v1066
        %v1195 = vpack.c.b16 %v1075, %v1067
        %v1196 = vpack.c.b16 %v1076, %v1068
        %v1197 = vpack.c.b16 %v1077, %v1069
        %v1198 = vpack.c.b16 %v1078, %v1070
        %v1199 = vpack.c.b16 %v1079, %v1071
        %v1200 = vpack.c.b16 %v1080, %v1072
        %v1201 = vpack.c.b16 %v1081, %v1073
        %v1202 = vpack.c.b16 %v1090, %v1082
        %v1203 = vpack.c.b16 %v1091, %v1083
        %v1204 = vpack.c.b16 %v1092, %v1084
        %v1205 = vpack.c.b16 %v1093, %v1085
        %v1206 = vpack.c.b16 %v1094, %v1086
        %v1207 = vpack.c.b16 %v1095, %v1087
        %v1208 = vpack.c.b16 %v1096, %v1088
        %v1209 = vpack.c.b16 %v1097, %v1089
        %v1210 = vpack.c.b16 %v1106, %v1098
        %v1211 = vpack.c.b16 %v1107, %v1099
        %v1212 = vpack.c.b16 %v1108, %v1100
        %v1213 = vpack.c.b16 %v1109, %v1101
        %v1214 = vpack.c.b16 %v1110, %v1102
        %v1215 = vpack.c.b16 %v1111, %v1103
        %v1216 = vpack.c.b16 %v1112, %v1104
        %v1217 = vpack.c.b16 %v1113, %v1105
        %v1218 = vpack.c.b16 %v1122, %v1114
        %v1219 = vpack.c.b16 %v1123, %v1115
        %v1220 = vpack.c.b16 %v1124, %v1116
        %v1221 = vpack.c.b16 %v1125, %v1117
        %v1222 = vpack.c.b16 %v1126, %v1118
        %v1223 = vpack.c.b16 %v1127, %v1119
        %v1224 = vpack.c.b16 %v1128, %v1120
        %v1225 = vpack.c.b16 %v1129, %v1121
        %v1226 = vpack.c.b16 %v1138, %v1130
        %v1227 = vpack.c.b16 %v1139, %v1131
        %v1228 = vpack.c.b16 %v1140, %v1132
        %v1229 = vpack.c.b16 %v1141, %v1133
        %v1230 = vpack.c.b16 %v1142, %v1134
        %v1231 = vpack.c.b16 %v1143, %v1135
        %v1232 = vpack.c.b16 %v1144, %v1136
        %v1233 = vpack.c.b16 %v1145, %v1137
        %v1234 = vpack.c.b16 %v1154, %v1146
        %v1235 = vpack.c.b16 %v1155, %v1147
        %v1236 = vpack.c.b16 %v1156, %v1148
        %v1237 = vpack.c.b16 %v1157, %v1149
        %v1238 = vpack.c.b16 %v1158, %v1150
        %v1239 = vpack.c.b16 %v1159, %v1151
        %v1240 = vpack.c.b16 %v1160, %v1152
        %v1241 = vpack.c.b16 %v1161, %v1153
        %v1242 = vpack.c.b16 %v1170, %v1162
        %v1243 = vpack.c.b16 %v1171, %v1163
        %v1244 = vpack.c.b16 %v1172, %v1164
        %v1245 = vpack.c.b16 %v1173, %v1165
        %v1246 = vpack.c.b16 %v1174, %v1166
        %v1247 = vpack.c.b16 %v1175, %v1167
        %v1248 = vpack.c.b16 %v1176, %v1168
        %v1249 = vpack.c.b16 %v1177, %v1169
        %v1250 = vpack.c.b16 %v1186, %v1178
        %v1251 = vpack.c.b16 %v1187, %v1179
        %v1252 = vpack.c.b16 %v1188, %v1180
        %v1253 = vpack.c.b16 %v1189, %v1181
        %v1254 = vpack.c.b16 %v1190, %v1182
        %v1255 = vpack.c.b16 %v1191, %v1183
        %v1256 = vpack.c.b16 %v1192, %v1184
        %v1257 = vpack.c.b16 %v1193, %v1185
        %1322 = vmatprep.subr.bf16.mxu0 %v1195
        %1323 = vmatpush1.bf16.msra.mxu0 %v1194
        %1324 = vmatprep.subr.bf16.mxu0 %v1203
        %1325 = vmatpush1.bf16.msra.mxu0 %v1202
        %1326 = vmatprep.subr.bf16.mxu0 %v1211
        %1327 = vmatpush1.bf16.msra.mxu0 %v1210
        %1328 = vmatprep.subr.bf16.mxu0 %v1219
        %1329 = vmatpush1.bf16.msra.mxu0 %v1218
        %1330 = vmatprep.subr.bf16.mxu0 %v1227
        %1331 = vmatpush1.bf16.msra.mxu0 %v1226
        %1332 = vmatprep.subr.bf16.mxu0 %v1235
        %1333 = vmatpush1.bf16.msra.mxu0 %v1234
        %1334 = vmatprep.subr.bf16.mxu0 %v1243
        %1335 = vmatpush1.bf16.msra.mxu0 %v1242
        %1336 = vmatprep.subr.bf16.mxu0 %v1251
        %1337 = vmatpush1.bf16.msra.mxu0 %v1250
        %1338 = vmatprep.subr.bf16.mxu0 0
        %1339 = vmatpush1.bf16.msra.mxu0 0
        %1340 = vmatprep.subr.bf16.mxu0 0
        %1341 = vmatpush1.bf16.msra.mxu0 0
        %1342 = vmatprep.subr.bf16.mxu0 0
        %1343 = vmatpush1.bf16.msra.mxu0 0
        %1344 = vmatprep.subr.bf16.mxu0 0
        %1345 = vmatpush1.bf16.msra.mxu0 0
        %1346 = vmatprep.subr.bf16.mxu0 0
        %1347 = vmatpush1.bf16.msra.mxu0 0
        %1348 = vmatprep.subr.bf16.mxu0 0
        %1349 = vmatpush1.bf16.msra.mxu0 0
        %1350 = vmatprep.subr.bf16.mxu0 0
        %1351 = vmatpush1.bf16.msra.mxu0 0
        %1352 = vmatprep.subr.bf16.mxu0 0
        %1353 = vmatpush1.bf16.msra.mxu0 0
        %1354 = vmatprep.mubr.bf16.mxu0 0
        %1355 = vmatmul.mubr.bf16.gmra.mrb[0].mxu0 %v934
        %v1356 = vpop.f32.mrb[0].mxu0
        %v1357 = vadd.f32 0.0, %v1356
        %v1358 = vpop.f32.mrb[0].mxu0
        %v1359 = vadd.f32 0.0, %v1358
        %v1360 = vpop.f32.mrb[0].mxu0
        %v1361 = vadd.f32 0.0, %v1360
        %v1362 = vpop.f32.mrb[0].mxu0
        %v1363 = vadd.f32 0.0, %v1362
        %1364 = vmatprep.mubr.bf16.mxu0 0
        %1365 = vmatmul.mubr.bf16.gmra.mrb[0].mxu0 %v935
        %v1366 = vpop.f32.mrb[0].mxu0
        %v1367 = vadd.f32 0.0, %v1366
        %v1368 = vpop.f32.mrb[0].mxu0
        %v1369 = vadd.f32 0.0, %v1368
        %v1370 = vpop.f32.mrb[0].mxu0
        %v1371 = vadd.f32 0.0, %v1370
        %v1372 = vpop.f32.mrb[0].mxu0
        %v1373 = vadd.f32 0.0, %v1372
        %1374 = vmatprep.mubr.bf16.mxu0 0
        %1375 = vmatmul.mubr.bf16.gmra.mrb[0].mxu0 %v936
        %v1376 = vpop.f32.mrb[0].mxu0
        %v1377 = vadd.f32 0.0, %v1376
        %v1378 = vpop.f32.mrb[0].mxu0
        %v1379 = vadd.f32 0.0, %v1378
        %v1380 = vpop.f32.mrb[0].mxu0
        %v1381 = vadd.f32 0.0, %v1380
        %v1382 = vpop.f32.mrb[0].mxu0
        %v1383 = vadd.f32 0.0, %v1382
        %1384 = vmatprep.mubr.bf16.mxu0 0
        %1385 = vmatmul.mubr.bf16.gmra.mrb[0].mxu0 %v937
        %v1386 = vpop.f32.mrb[0].mxu0
        %v1387 = vadd.f32 0.0, %v1386
        %v1388 = vpop.f32.mrb[0].mxu0
        %v1389 = vadd.f32 0.0, %v1388
        %v1390 = vpop.f32.mrb[0].mxu0
        %v1391 = vadd.f32 0.0, %v1390
        %v1392 = vpop.f32.mrb[0].mxu0
        %v1393 = vadd.f32 0.0, %v1392
        %1394 = vdwg.mxu0
        %1395 = vmatprep.subr.bf16.mxu0 %v1197
        %1396 = vmatpush1.bf16.msra.mxu0 %v1196
        %1397 = vmatprep.subr.bf16.mxu0 %v1205
        %1398 = vmatpush1.bf16.msra.mxu0 %v1204
        %1399 = vmatprep.subr.bf16.mxu0 %v1213
        %1400 = vmatpush1.bf16.msra.mxu0 %v1212
        %1401 = vmatprep.subr.bf16.mxu0 %v1221
        %1402 = vmatpush1.bf16.msra.mxu0 %v1220
        %1403 = vmatprep.subr.bf16.mxu0 %v1229
        %1404 = vmatpush1.bf16.msra.mxu0 %v1228
        %1405 = vmatprep.subr.bf16.mxu0 %v1237
        %1406 = vmatpush1.bf16.msra.mxu0 %v1236
        %1407 = vmatprep.subr.bf16.mxu0 %v1245
        %1408 = vmatpush1.bf16.msra.mxu0 %v1244
        %1409 = vmatprep.subr.bf16.mxu0 %v1253
        %1410 = vmatpush1.bf16.msra.mxu0 %v1252
        %1411 = vmatprep.subr.bf16.mxu0 0
        %1412 = vmatpush1.bf16.msra.mxu0 0
        %1413 = vmatprep.subr.bf16.mxu0 0
        %1414 = vmatpush1.bf16.msra.mxu0 0
        %1415 = vmatprep.subr.bf16.mxu0 0
        %1416 = vmatpush1.bf16.msra.mxu0 0
        %1417 = vmatprep.subr.bf16.mxu0 0
        %1418 = vmatpush1.bf16.msra.mxu0 0
        %1419 = vmatprep.subr.bf16.mxu0 0
        %1420 = vmatpush1.bf16.msra.mxu0 0
        %1421 = vmatprep.subr.bf16.mxu0 0
        %1422 = vmatpush1.bf16.msra.mxu0 0
        %1423 = vmatprep.subr.bf16.mxu0 0
        %1424 = vmatpush1.bf16.msra.mxu0 0
        %1425 = vmatprep.subr.bf16.mxu0 0
        %1426 = vmatpush1.bf16.msra.mxu0 0
        %1427 = vmatprep.mubr.bf16.mxu0 0
        %1428 = vmatmul.mubr.bf16.gmra.mrb[0].mxu0 %v934
        %v1429 = vpop.f32.mrb[0].mxu0
        %v1430 = vadd.f32 0.0, %v1429
        %v1431 = vpop.f32.mrb[0].mxu0
        %v1432 = vadd.f32 0.0, %v1431
        %v1433 = vpop.f32.mrb[0].mxu0
        %v1434 = vadd.f32 0.0, %v1433
        %v1435 = vpop.f32.mrb[0].mxu0
        %v1436 = vadd.f32 0.0, %v1435
        %1437 = vmatprep.mubr.bf16.mxu0 0
        %1438 = vmatmul.mubr.bf16.gmra.mrb[0].mxu0 %v935
        %v1439 = vpop.f32.mrb[0].mxu0
        %v1440 = vadd.f32 0.0, %v1439
        %v1441 = vpop.f32.mrb[0].mxu0
        %v1442 = vadd.f32 0.0, %v1441
        %v1443 = vpop.f32.mrb[0].mxu0
        %v1444 = vadd.f32 0.0, %v1443
        %v1445 = vpop.f32.mrb[0].mxu0
        %v1446 = vadd.f32 0.0, %v1445
        %1447 = vmatprep.mubr.bf16.mxu0 0
        %1448 = vmatmul.mubr.bf16.gmra.mrb[0].mxu0 %v936
        %v1449 = vpop.f32.mrb[0].mxu0
        %v1450 = vadd.f32 0.0, %v1449
        %v1451 = vpop.f32.mrb[0].mxu0
        %v1452 = vadd.f32 0.0, %v1451
        %v1453 = vpop.f32.mrb[0].mxu0
        %v1454 = vadd.f32 0.0, %v1453
        %v1455 = vpop.f32.mrb[0].mxu0
        %v1456 = vadd.f32 0.0, %v1455
        %1457 = vmatprep.mubr.bf16.mxu0 0
        %1458 = vmatmul.mubr.bf16.gmra.mrb[0].mxu0 %v937
        %v1459 = vpop.f32.mrb[0].mxu0
        %v1460 = vadd.f32 0.0, %v1459
        %v1461 = vpop.f32.mrb[0].mxu0
        %v1462 = vadd.f32 0.0, %v1461
        %v1463 = vpop.f32.mrb[0].mxu0
        %v1464 = vadd.f32 0.0, %v1463
        %v1465 = vpop.f32.mrb[0].mxu0
        %v1466 = vadd.f32 0.0, %v1465
        %1467 = vdwg.mxu0
        %1468 = vmatprep.subr.bf16.mxu0 %v1199
        %1469 = vmatpush1.bf16.msra.mxu0 %v1198
        %1470 = vmatprep.subr.bf16.mxu0 %v1207
        %1471 = vmatpush1.bf16.msra.mxu0 %v1206
        %1472 = vmatprep.subr.bf16.mxu0 %v1215
        %1473 = vmatpush1.bf16.msra.mxu0 %v1214
        %1474 = vmatprep.subr.bf16.mxu0 %v1223
        %1475 = vmatpush1.bf16.msra.mxu0 %v1222
        %1476 = vmatprep.subr.bf16.mxu0 %v1231
        %1477 = vmatpush1.bf16.msra.mxu0 %v1230
        %1478 = vmatprep.subr.bf16.mxu0 %v1239
        %1479 = vmatpush1.bf16.msra.mxu0 %v1238
        %1480 = vmatprep.subr.bf16.mxu0 %v1247
        %1481 = vmatpush1.bf16.msra.mxu0 %v1246
        %1482 = vmatprep.subr.bf16.mxu0 %v1255
        %1483 = vmatpush1.bf16.msra.mxu0 %v1254
        %1484 = vmatprep.subr.bf16.mxu0 0
        %1485 = vmatpush1.bf16.msra.mxu0 0
        %1486 = vmatprep.subr.bf16.mxu0 0
        %1487 = vmatpush1.bf16.msra.mxu0 0
        %1488 = vmatprep.subr.bf16.mxu0 0
        %1489 = vmatpush1.bf16.msra.mxu0 0
        %1490 = vmatprep.subr.bf16.mxu0 0
        %1491 = vmatpush1.bf16.msra.mxu0 0
        %1492 = vmatprep.subr.bf16.mxu0 0
        %1493 = vmatpush1.bf16.msra.mxu0 0
        %1494 = vmatprep.subr.bf16.mxu0 0
        %1495 = vmatpush1.bf16.msra.mxu0 0
        %1496 = vmatprep.subr.bf16.mxu0 0
        %1497 = vmatpush1.bf16.msra.mxu0 0
        %1498 = vmatprep.subr.bf16.mxu0 0
        %1499 = vmatpush1.bf16.msra.mxu0 0
        %1500 = vmatprep.mubr.bf16.mxu0 0
        %1501 = vmatmul.mubr.bf16.gmra.mrb[0].mxu0 %v934
        %v1502 = vpop.f32.mrb[0].mxu0
        %v1503 = vadd.f32 0.0, %v1502
        %v1504 = vpop.f32.mrb[0].mxu0
        %v1505 = vadd.f32 0.0, %v1504
        %v1506 = vpop.f32.mrb[0].mxu0
        %v1507 = vadd.f32 0.0, %v1506
        %v1508 = vpop.f32.mrb[0].mxu0
        %v1509 = vadd.f32 0.0, %v1508
        %1510 = vmatprep.mubr.bf16.mxu0 0
        %1511 = vmatmul.mubr.bf16.gmra.mrb[0].mxu0 %v935
        %v1512 = vpop.f32.mrb[0].mxu0
        %v1513 = vadd.f32 0.0, %v1512
        %v1514 = vpop.f32.mrb[0].mxu0
        %v1515 = vadd.f32 0.0, %v1514
        %v1516 = vpop.f32.mrb[0].mxu0
        %v1517 = vadd.f32 0.0, %v1516
        %v1518 = vpop.f32.mrb[0].mxu0
        %v1519 = vadd.f32 0.0, %v1518
        %1520 = vmatprep.mubr.bf16.mxu0 0
        %1521 = vmatmul.mubr.bf16.gmra.mrb[0].mxu0 %v936
        %v1522 = vpop.f32.mrb[0].mxu0
        %v1523 = vadd.f32 0.0, %v1522
        %v1524 = vpop.f32.mrb[0].mxu0
        %v1525 = vadd.f32 0.0, %v1524
        %v1526 = vpop.f32.mrb[0].mxu0
        %v1527 = vadd.f32 0.0, %v1526
        %v1528 = vpop.f32.mrb[0].mxu0
        %v1529 = vadd.f32 0.0, %v1528
        %1530 = vmatprep.mubr.bf16.mxu0 0
        %1531 = vmatmul.mubr.bf16.gmra.mrb[0].mxu0 %v937
        %v1532 = vpop.f32.mrb[0].mxu0
        %v1533 = vadd.f32 0.0, %v1532
        %v1534 = vpop.f32.mrb[0].mxu0
        %v1535 = vadd.f32 0.0, %v1534
        %v1536 = vpop.f32.mrb[0].mxu0
        %v1537 = vadd.f32 0.0, %v1536
        %v1538 = vpop.f32.mrb[0].mxu0
        %v1539 = vadd.f32 0.0, %v1538
        %1540 = vdwg.mxu0
        %1541 = vmatprep.subr.bf16.mxu0 %v1201
        %1542 = vmatpush1.bf16.msra.mxu0 %v1200
        %1543 = vmatprep.subr.bf16.mxu0 %v1209
        %1544 = vmatpush1.bf16.msra.mxu0 %v1208
        %1545 = vmatprep.subr.bf16.mxu0 %v1217
        %1546 = vmatpush1.bf16.msra.mxu0 %v1216
        %1547 = vmatprep.subr.bf16.mxu0 %v1225
        %1548 = vmatpush1.bf16.msra.mxu0 %v1224
        %1549 = vmatprep.subr.bf16.mxu0 %v1233
        %1550 = vmatpush1.bf16.msra.mxu0 %v1232
        %1551 = vmatprep.subr.bf16.mxu0 %v1241
        %1552 = vmatpush1.bf16.msra.mxu0 %v1240
        %1553 = vmatprep.subr.bf16.mxu0 %v1249
        %1554 = vmatpush1.bf16.msra.mxu0 %v1248
        %1555 = vmatprep.subr.bf16.mxu0 %v1257
        %1556 = vmatpush1.bf16.msra.mxu0 %v1256
        %1557 = vmatprep.subr.bf16.mxu0 0
        %1558 = vmatpush1.bf16.msra.mxu0 0
        %1559 = vmatprep.subr.bf16.mxu0 0
        %1560 = vmatpush1.bf16.msra.mxu0 0
        %1561 = vmatprep.subr.bf16.mxu0 0
        %1562 = vmatpush1.bf16.msra.mxu0 0
        %1563 = vmatprep.subr.bf16.mxu0 0
        %1564 = vmatpush1.bf16.msra.mxu0 0
        %1565 = vmatprep.subr.bf16.mxu0 0
        %1566 = vmatpush1.bf16.msra.mxu0 0
        %1567 = vmatprep.subr.bf16.mxu0 0
        %1568 = vmatpush1.bf16.msra.mxu0 0
        %1569 = vmatprep.subr.bf16.mxu0 0
        %1570 = vmatpush1.bf16.msra.mxu0 0
        %1571 = vmatprep.subr.bf16.mxu0 0
        %1572 = vmatpush1.bf16.msra.mxu0 0
        %1573 = vmatprep.mubr.bf16.mxu0 0
        %1574 = vmatmul.mubr.bf16.gmra.mrb[0].mxu0 %v934
        %v1575 = vpop.f32.mrb[0].mxu0
        %v1576 = vadd.f32 0.0, %v1575
        %v1577 = vpop.f32.mrb[0].mxu0
        %v1578 = vadd.f32 0.0, %v1577
        %v1579 = vpop.f32.mrb[0].mxu0
        %v1580 = vadd.f32 0.0, %v1579
        %v1581 = vpop.f32.mrb[0].mxu0
        %v1582 = vadd.f32 0.0, %v1581
        %1583 = vmatprep.mubr.bf16.mxu0 0
        %1584 = vmatmul.mubr.bf16.gmra.mrb[0].mxu0 %v935
        %v1585 = vpop.f32.mrb[0].mxu0
        %v1586 = vadd.f32 0.0, %v1585
        %v1587 = vpop.f32.mrb[0].mxu0
        %v1588 = vadd.f32 0.0, %v1587
        %v1589 = vpop.f32.mrb[0].mxu0
        %v1590 = vadd.f32 0.0, %v1589
        %v1591 = vpop.f32.mrb[0].mxu0
        %v1592 = vadd.f32 0.0, %v1591
        %1593 = vmatprep.mubr.bf16.mxu0 0
        %1594 = vmatmul.mubr.bf16.gmra.mrb[0].mxu0 %v936
        %v1595 = vpop.f32.mrb[0].mxu0
        %v1596 = vadd.f32 0.0, %v1595
        %v1597 = vpop.f32.mrb[0].mxu0
        %v1598 = vadd.f32 0.0, %v1597
        %v1599 = vpop.f32.mrb[0].mxu0
        %v1600 = vadd.f32 0.0, %v1599
        %v1601 = vpop.f32.mrb[0].mxu0
        %v1602 = vadd.f32 0.0, %v1601
        %1603 = vmatprep.mubr.bf16.mxu0 0
        %1604 = vmatmul.mubr.bf16.gmra.mrb[0].mxu0 %v937
        %v1605 = vpop.f32.mrb[0].mxu0
        %v1606 = vadd.f32 0.0, %v1605
        %v1607 = vpop.f32.mrb[0].mxu0
        %v1608 = vadd.f32 0.0, %v1607
        %v1609 = vpop.f32.mrb[0].mxu0
        %v1610 = vadd.f32 0.0, %v1609
        %v1611 = vpop.f32.mrb[0].mxu0
        %v1612 = vadd.f32 0.0, %v1611
        %1613 = vdwg.mxu0
        %v1614 = vld [vmem:[%s375] sm:$0xff]
        %v1615 = vld [vmem:[%s384] sm:$0xff]
        %v1616 = vld [vmem:[#allocation8] sm:$0xff]
        %v1617 = vld [vmem:[#allocation8 + $0x8] sm:$0xff]
        %v1618 = vld [vmem:[#allocation8 + $0x10] sm:$0xff]
        %v1619 = vld [vmem:[#allocation8 + $0x18] sm:$0xff]
        %v1620 = vld [vmem:[#allocation8 + $0x20] sm:$0xff]
        %v1621 = vld [vmem:[#allocation8 + $0x28] sm:$0xff]
        %v1622 = vld [vmem:[#allocation8 + $0x30] sm:$0xff]
        %v1623 = vld [vmem:[#allocation8 + $0x38] sm:$0xff]
        %v1624 = vadd.f32 %v918, %v1357
        %v1625 = vadd.f32 %v919, %v1361
        %v1626 = vadd.f32 %v920, %v1367
        %v1627 = vadd.f32 %v921, %v1371
        %v1628 = vadd.f32 %v922, %v1377
        %v1629 = vadd.f32 %v923, %v1381
        %v1630 = vadd.f32 %v924, %v1387
        %v1631 = vadd.f32 %v925, %v1391
        %v1632 = vlaneseq
        %v1633 = vshrl.u32 %v1632, 7
        %v1634 = vsub.s32 0, %v1633
        %v1635 = vrot.slane %v1614, %v1634
        %v1636 = vmul.f32 %v1635, %v1616
        %v1637 = vmul.f32 %v1635, %v1617
        %v1638 = vmul.f32 %v1635, %v1618
        %v1639 = vmul.f32 %v1635, %v1619
        %v1640 = vmul.f32 %v1635, %v1620
        %v1641 = vmul.f32 %v1635, %v1621
        %v1642 = vmul.f32 %v1635, %v1622
        %v1643 = vmul.f32 %v1635, %v1623
        %v1644 = vadd.f32 %v1624, %v1636
        %v1645 = vadd.f32 %v1625, %v1637
        %v1646 = vadd.f32 %v1626, %v1638
        %v1647 = vadd.f32 %v1627, %v1639
        %v1648 = vadd.f32 %v1628, %v1640
        %v1649 = vadd.f32 %v1629, %v1641
        %v1650 = vadd.f32 %v1630, %v1642
        %v1651 = vadd.f32 %v1631, %v1643
        %v1652 = vmul.f32 %v1644, 0.2
        %v1653 = vmul.f32 %v1645, 0.2
        %v1654 = vmul.f32 %v1646, 0.2
        %v1655 = vmul.f32 %v1647, 0.2
        %v1656 = vmul.f32 %v1648, 0.2
        %v1657 = vmul.f32 %v1649, 0.2
        %v1658 = vmul.f32 %v1650, 0.2
        %v1659 = vmul.f32 %v1651, 0.2
        %v1660 = vmax.f32 %v1644, %v1652
        %v1661 = vmax.f32 %v1645, %v1653
        %v1662 = vmax.f32 %v1646, %v1654
        %v1663 = vmax.f32 %v1647, %v1655
        %v1664 = vmax.f32 %v1648, %v1656
        %v1665 = vmax.f32 %v1649, %v1657
        %v1666 = vmax.f32 %v1650, %v1658
        %v1667 = vmax.f32 %v1651, %v1659
        %v1669 = vrot.slane %v471, 1
        %vm1670 = vcmask 523264
        %v1671 = vsel %vm1670, %v1669, 0
        %1673 = vmatprep.subr.mxu0 0.0
        %1674 = vmatpush1.msra.mxu0 %v1660
        %1675 = vmatprep.subr.mxu0 0.0
        %1676 = vmatpush1.msra.mxu0 %v1661
        %1677 = vmatprep.subr.mxu0 0.0
        %1678 = vmatpush1.msra.mxu0 %v1662
        %1679 = vmatprep.subr.mxu0 0.0
        %1680 = vmatpush1.msra.mxu0 %v1663
        %1681 = vmatprep.subr.mxu0 0.0
        %1682 = vmatpush1.msra.mxu0 %v1664
        %1683 = vmatprep.subr.mxu0 0.0
        %1684 = vmatpush1.msra.mxu0 %v1665
        %1685 = vmatprep.subr.mxu0 0.0
        %1686 = vmatpush1.msra.mxu0 %v1666
        %1687 = vmatprep.subr.mxu0 0.0
        %1688 = vmatpush1.msra.mxu0 %v1667
        %1689 = vmatprep.subr.mxu0 0.0
        %1690 = vmatpush1.msra.mxu0 0.0
        %1691 = vmatprep.subr.mxu0 0.0
        %1692 = vmatpush1.msra.mxu0 0.0
        %1693 = vmatprep.subr.mxu0 0.0
        %1694 = vmatpush1.msra.mxu0 0.0
        %1695 = vmatprep.subr.mxu0 0.0
        %1696 = vmatpush1.msra.mxu0 0.0
        %1697 = vmatprep.subr.mxu0 0.0
        %1698 = vmatpush1.msra.mxu0 0.0
        %1699 = vmatprep.subr.mxu0 0.0
        %1700 = vmatpush1.msra.mxu0 0.0
        %1701 = vmatprep.subr.mxu0 0.0
        %1702 = vmatpush1.msra.mxu0 0.0
        %1703 = vmatprep.subr.mxu0 0.0
        %1704 = vmatpush1.msra.mxu0 0.0
        %1705 = vmatprep.subr.mxu0 0.0
        %1706 = vmatpush1.msra.mxu0 0.0
        %1707 = vmatprep.subr.mxu0 0.0
        %1708 = vmatpush1.msra.mxu0 0.0
        %1709 = vmatprep.subr.mxu0 0.0
        %1710 = vmatpush1.msra.mxu0 0.0
        %1711 = vmatprep.subr.mxu0 0.0
        %1712 = vmatpush1.msra.mxu0 0.0
        %1713 = vmatprep.subr.mxu0 0.0
        %1714 = vmatpush1.msra.mxu0 0.0
        %1715 = vmatprep.subr.mxu0 0.0
        %1716 = vmatpush1.msra.mxu0 0.0
        %1717 = vmatprep.subr.mxu0 0.0
        %1718 = vmatpush1.msra.mxu0 0.0
        %1719 = vmatprep.subr.mxu0 0.0
        %1720 = vmatpush1.msra.mxu0 0.0
        %1721 = vmatprep.subr.mxu0 0.0
        %1722 = vmatpush1.msra.mxu0 0.0
        %1723 = vmatprep.subr.mxu0 0.0
        %1724 = vmatpush1.msra.mxu0 0.0
        %1725 = vmatprep.subr.mxu0 0.0
        %1726 = vmatpush1.msra.mxu0 0.0
        %1727 = vmatprep.subr.mxu0 0.0
        %1728 = vmatpush1.msra.mxu0 0.0
        %1729 = vmatprep.subr.mxu0 0.0
        %1730 = vmatpush1.msra.mxu0 0.0
        %1731 = vmatprep.subr.mxu0 0.0
        %1732 = vmatpush1.msra.mxu0 0.0
        %1733 = vmatprep.subr.mxu0 0.0
        %1734 = vmatpush1.msra.mxu0 0.0
        %1735 = vmatprep.subr.mxu0 0.0
        %1736 = vmatpush1.msra.mxu0 0.0
        %1737 = vmatprep.mubr.f32.mxu0 0.0
        %1738 = vmatmul.mubr.f32.gmra.mrb[0].mxu0 %v1671
        %v1739 = vpop.f32.mrb[0].mxu0
        %v1740 = vadd.f32 0.0, %v1739
        %v1741 = vpop.f32.mrb[0].mxu0
        %1742 = vdwg.mxu0
        %1743 = vst [vmem:[#allocation2] sm:$0x1] %v1740
        %1744 = vst [vmem:[#allocation2 + $0x7] sm:$0x2] %v1740
        %v1745 = vadd.f32 %v918, %v1359
        %v1746 = vadd.f32 %v919, %v1363
        %v1747 = vadd.f32 %v920, %v1369
        %v1748 = vadd.f32 %v921, %v1373
        %v1749 = vadd.f32 %v922, %v1379
        %v1750 = vadd.f32 %v923, %v1383
        %v1751 = vadd.f32 %v924, %v1389
        %v1752 = vadd.f32 %v925, %v1393
        %v1753 = vlaneseq
        %v1754 = vshrl.u32 %v1753, 7
        %v1755 = vsub.s32 1, %v1754
        %v1756 = vrot.slane %v1614, %v1755
        %v1757 = vmul.f32 %v1756, %v1616
        %v1758 = vmul.f32 %v1756, %v1617
        %v1759 = vmul.f32 %v1756, %v1618
        %v1760 = vmul.f32 %v1756, %v1619
        %v1761 = vmul.f32 %v1756, %v1620
        %v1762 = vmul.f32 %v1756, %v1621
        %v1763 = vmul.f32 %v1756, %v1622
        %v1764 = vmul.f32 %v1756, %v1623
        %v1765 = vadd.f32 %v1745, %v1757
        %v1766 = vadd.f32 %v1746, %v1758
        %v1767 = vadd.f32 %v1747, %v1759
        %v1768 = vadd.f32 %v1748, %v1760
        %v1769 = vadd.f32 %v1749, %v1761
        %v1770 = vadd.f32 %v1750, %v1762
        %v1771 = vadd.f32 %v1751, %v1763
        %v1772 = vadd.f32 %v1752, %v1764
        %v1773 = vmul.f32 %v1765, 0.2
        %v1774 = vmul.f32 %v1766, 0.2
        %v1775 = vmul.f32 %v1767, 0.2
        %v1776 = vmul.f32 %v1768, 0.2
        %v1777 = vmul.f32 %v1769, 0.2
        %v1778 = vmul.f32 %v1770, 0.2
        %v1779 = vmul.f32 %v1771, 0.2
        %v1780 = vmul.f32 %v1772, 0.2
        %v1781 = vmax.f32 %v1765, %v1773
        %v1782 = vmax.f32 %v1766, %v1774
        %v1783 = vmax.f32 %v1767, %v1775
        %v1784 = vmax.f32 %v1768, %v1776
        %v1785 = vmax.f32 %v1769, %v1777
        %v1786 = vmax.f32 %v1770, %v1778
        %v1787 = vmax.f32 %v1771, %v1779
        %v1788 = vmax.f32 %v1772, %v1780
        %1789 = vmatprep.subr.mxu0 0.0
        %1790 = vmatpush1.msra.mxu0 %v1781
        %1791 = vmatprep.subr.mxu0 0.0
        %1792 = vmatpush1.msra.mxu0 %v1782
        %1793 = vmatprep.subr.mxu0 0.0
        %1794 = vmatpush1.msra.mxu0 %v1783
        %1795 = vmatprep.subr.mxu0 0.0
        %1796 = vmatpush1.msra.mxu0 %v1784
        %1797 = vmatprep.subr.mxu0 0.0
        %1798 = vmatpush1.msra.mxu0 %v1785
        %1799 = vmatprep.subr.mxu0 0.0
        %1800 = vmatpush1.msra.mxu0 %v1786
        %1801 = vmatprep.subr.mxu0 0.0
        %1802 = vmatpush1.msra.mxu0 %v1787
        %1803 = vmatprep.subr.mxu0 0.0
        %1804 = vmatpush1.msra.mxu0 %v1788
        %1805 = vmatprep.subr.mxu0 0.0
        %1806 = vmatpush1.msra.mxu0 0.0
        %1807 = vmatprep.subr.mxu0 0.0
        %1808 = vmatpush1.msra.mxu0 0.0
        %1809 = vmatprep.subr.mxu0 0.0
        %1810 = vmatpush1.msra.mxu0 0.0
        %1811 = vmatprep.subr.mxu0 0.0
        %1812 = vmatpush1.msra.mxu0 0.0
        %1813 = vmatprep.subr.mxu0 0.0
        %1814 = vmatpush1.msra.mxu0 0.0
        %1815 = vmatprep.subr.mxu0 0.0
        %1816 = vmatpush1.msra.mxu0 0.0
        %1817 = vmatprep.subr.mxu0 0.0
        %1818 = vmatpush1.msra.mxu0 0.0
        %1819 = vmatprep.subr.mxu0 0.0
        %1820 = vmatpush1.msra.mxu0 0.0
        %1821 = vmatprep.subr.mxu0 0.0
        %1822 = vmatpush1.msra.mxu0 0.0
        %1823 = vmatprep.subr.mxu0 0.0
        %1824 = vmatpush1.msra.mxu0 0.0
        %1825 = vmatprep.subr.mxu0 0.0
        %1826 = vmatpush1.msra.mxu0 0.0
        %1827 = vmatprep.subr.mxu0 0.0
        %1828 = vmatpush1.msra.mxu0 0.0
        %1829 = vmatprep.subr.mxu0 0.0
        %1830 = vmatpush1.msra.mxu0 0.0
        %1831 = vmatprep.subr.mxu0 0.0
        %1832 = vmatpush1.msra.mxu0 0.0
        %1833 = vmatprep.subr.mxu0 0.0
        %1834 = vmatpush1.msra.mxu0 0.0
        %1835 = vmatprep.subr.mxu0 0.0
        %1836 = vmatpush1.msra.mxu0 0.0
        %1837 = vmatprep.subr.mxu0 0.0
        %1838 = vmatpush1.msra.mxu0 0.0
        %1839 = vmatprep.subr.mxu0 0.0
        %1840 = vmatpush1.msra.mxu0 0.0
        %1841 = vmatprep.subr.mxu0 0.0
        %1842 = vmatpush1.msra.mxu0 0.0
        %1843 = vmatprep.subr.mxu0 0.0
        %1844 = vmatpush1.msra.mxu0 0.0
        %1845 = vmatprep.subr.mxu0 0.0
        %1846 = vmatpush1.msra.mxu0 0.0
        %1847 = vmatprep.subr.mxu0 0.0
        %1848 = vmatpush1.msra.mxu0 0.0
        %1849 = vmatprep.subr.mxu0 0.0
        %1850 = vmatpush1.msra.mxu0 0.0
        %1851 = vmatprep.subr.mxu0 0.0
        %1852 = vmatpush1.msra.mxu0 0.0
        %1853 = vmatprep.mubr.f32.mxu0 0.0
        %1854 = vmatmul.mubr.f32.gmra.mrb[0].mxu0 %v1671
        %v1855 = vpop.f32.mrb[0].mxu0
        %v1856 = vadd.f32 0.0, %v1855
        %v1857 = vpop.f32.mrb[0].mxu0
        %1858 = vdwg.mxu0
        %1859 = vst [vmem:[#allocation2 + $0x1] sm:$0x1] %v1856
        %1860 = vst [vmem:[#allocation2 + $0x8] sm:$0x2] %v1856
        %v1861 = vadd.f32 %v918, %v1430
        %v1862 = vadd.f32 %v919, %v1434
        %v1863 = vadd.f32 %v920, %v1440
        %v1864 = vadd.f32 %v921, %v1444
        %v1865 = vadd.f32 %v922, %v1450
        %v1866 = vadd.f32 %v923, %v1454
        %v1867 = vadd.f32 %v924, %v1460
        %v1868 = vadd.f32 %v925, %v1464
        %v1869 = vlaneseq
        %v1870 = vshrl.u32 %v1869, 7
        %v1871 = vsub.s32 2, %v1870
        %v1872 = vrot.slane %v1614, %v1871
        %v1873 = vmul.f32 %v1872, %v1616
        %v1874 = vmul.f32 %v1872, %v1617
        %v1875 = vmul.f32 %v1872, %v1618
        %v1876 = vmul.f32 %v1872, %v1619
        %v1877 = vmul.f32 %v1872, %v1620
        %v1878 = vmul.f32 %v1872, %v1621
        %v1879 = vmul.f32 %v1872, %v1622
        %v1880 = vmul.f32 %v1872, %v1623
        %v1881 = vadd.f32 %v1861, %v1873
        %v1882 = vadd.f32 %v1862, %v1874
        %v1883 = vadd.f32 %v1863, %v1875
        %v1884 = vadd.f32 %v1864, %v1876
        %v1885 = vadd.f32 %v1865, %v1877
        %v1886 = vadd.f32 %v1866, %v1878
        %v1887 = vadd.f32 %v1867, %v1879
        %v1888 = vadd.f32 %v1868, %v1880
        %v1889 = vmul.f32 %v1881, 0.2
        %v1890 = vmul.f32 %v1882, 0.2
        %v1891 = vmul.f32 %v1883, 0.2
        %v1892 = vmul.f32 %v1884, 0.2
        %v1893 = vmul.f32 %v1885, 0.2
        %v1894 = vmul.f32 %v1886, 0.2
        %v1895 = vmul.f32 %v1887, 0.2
        %v1896 = vmul.f32 %v1888, 0.2
        %v1897 = vmax.f32 %v1881, %v1889
        %v1898 = vmax.f32 %v1882, %v1890
        %v1899 = vmax.f32 %v1883, %v1891
        %v1900 = vmax.f32 %v1884, %v1892
        %v1901 = vmax.f32 %v1885, %v1893
        %v1902 = vmax.f32 %v1886, %v1894
        %v1903 = vmax.f32 %v1887, %v1895
        %v1904 = vmax.f32 %v1888, %v1896
        %1905 = vmatprep.subr.mxu0 0.0
        %1906 = vmatpush1.msra.mxu0 %v1897
        %1907 = vmatprep.subr.mxu0 0.0
        %1908 = vmatpush1.msra.mxu0 %v1898
        %1909 = vmatprep.subr.mxu0 0.0
        %1910 = vmatpush1.msra.mxu0 %v1899
        %1911 = vmatprep.subr.mxu0 0.0
        %1912 = vmatpush1.msra.mxu0 %v1900
        %1913 = vmatprep.subr.mxu0 0.0
        %1914 = vmatpush1.msra.mxu0 %v1901
        %1915 = vmatprep.subr.mxu0 0.0
        %1916 = vmatpush1.msra.mxu0 %v1902
        %1917 = vmatprep.subr.mxu0 0.0
        %1918 = vmatpush1.msra.mxu0 %v1903
        %1919 = vmatprep.subr.mxu0 0.0
        %1920 = vmatpush1.msra.mxu0 %v1904
        %1921 = vmatprep.subr.mxu0 0.0
        %1922 = vmatpush1.msra.mxu0 0.0
        %1923 = vmatprep.subr.mxu0 0.0
        %1924 = vmatpush1.msra.mxu0 0.0
        %1925 = vmatprep.subr.mxu0 0.0
        %1926 = vmatpush1.msra.mxu0 0.0
        %1927 = vmatprep.subr.mxu0 0.0
        %1928 = vmatpush1.msra.mxu0 0.0
        %1929 = vmatprep.subr.mxu0 0.0
        %1930 = vmatpush1.msra.mxu0 0.0
        %1931 = vmatprep.subr.mxu0 0.0
        %1932 = vmatpush1.msra.mxu0 0.0
        %1933 = vmatprep.subr.mxu0 0.0
        %1934 = vmatpush1.msra.mxu0 0.0
        %1935 = vmatprep.subr.mxu0 0.0
        %1936 = vmatpush1.msra.mxu0 0.0
        %1937 = vmatprep.subr.mxu0 0.0
        %1938 = vmatpush1.msra.mxu0 0.0
        %1939 = vmatprep.subr.mxu0 0.0
        %1940 = vmatpush1.msra.mxu0 0.0
        %1941 = vmatprep.subr.mxu0 0.0
        %1942 = vmatpush1.msra.mxu0 0.0
        %1943 = vmatprep.subr.mxu0 0.0
        %1944 = vmatpush1.msra.mxu0 0.0
        %1945 = vmatprep.subr.mxu0 0.0
        %1946 = vmatpush1.msra.mxu0 0.0
        %1947 = vmatprep.subr.mxu0 0.0
        %1948 = vmatpush1.msra.mxu0 0.0
        %1949 = vmatprep.subr.mxu0 0.0
        %1950 = vmatpush1.msra.mxu0 0.0
        %1951 = vmatprep.subr.mxu0 0.0
        %1952 = vmatpush1.msra.mxu0 0.0
        %1953 = vmatprep.subr.mxu0 0.0
        %1954 = vmatpush1.msra.mxu0 0.0
        %1955 = vmatprep.subr.mxu0 0.0
        %1956 = vmatpush1.msra.mxu0 0.0
        %1957 = vmatprep.subr.mxu0 0.0
        %1958 = vmatpush1.msra.mxu0 0.0
        %1959 = vmatprep.subr.mxu0 0.0
        %1960 = vmatpush1.msra.mxu0 0.0
        %1961 = vmatprep.subr.mxu0 0.0
        %1962 = vmatpush1.msra.mxu0 0.0
        %1963 = vmatprep.subr.mxu0 0.0
        %1964 = vmatpush1.msra.mxu0 0.0
        %1965 = vmatprep.subr.mxu0 0.0
        %1966 = vmatpush1.msra.mxu0 0.0
        %1967 = vmatprep.subr.mxu0 0.0
        %1968 = vmatpush1.msra.mxu0 0.0
        %1969 = vmatprep.mubr.f32.mxu0 0.0
        %1970 = vmatmul.mubr.f32.gmra.mrb[0].mxu0 %v1671
        %v1971 = vpop.f32.mrb[0].mxu0
        %v1972 = vadd.f32 0.0, %v1971
        %v1973 = vpop.f32.mrb[0].mxu0
        %1974 = vdwg.mxu0
        %1975 = vst [vmem:[#allocation2 + $0x2] sm:$0x1] %v1972
        %1976 = vst [vmem:[#allocation2 + $0x9] sm:$0x2] %v1972
        %v1977 = vadd.f32 %v918, %v1432
        %v1978 = vadd.f32 %v919, %v1436
        %v1979 = vadd.f32 %v920, %v1442
        %v1980 = vadd.f32 %v921, %v1446
        %v1981 = vadd.f32 %v922, %v1452
        %v1982 = vadd.f32 %v923, %v1456
        %v1983 = vadd.f32 %v924, %v1462
        %v1984 = vadd.f32 %v925, %v1466
        %v1985 = vlaneseq
        %v1986 = vshrl.u32 %v1985, 7
        %v1987 = vsub.s32 3, %v1986
        %v1988 = vrot.slane %v1614, %v1987
        %v1989 = vmul.f32 %v1988, %v1616
        %v1990 = vmul.f32 %v1988, %v1617
        %v1991 = vmul.f32 %v1988, %v1618
        %v1992 = vmul.f32 %v1988, %v1619
        %v1993 = vmul.f32 %v1988, %v1620
        %v1994 = vmul.f32 %v1988, %v1621
        %v1995 = vmul.f32 %v1988, %v1622
        %v1996 = vmul.f32 %v1988, %v1623
        %v1997 = vadd.f32 %v1977, %v1989
        %v1998 = vadd.f32 %v1978, %v1990
        %v1999 = vadd.f32 %v1979, %v1991
        %v2000 = vadd.f32 %v1980, %v1992
        %v2001 = vadd.f32 %v1981, %v1993
        %v2002 = vadd.f32 %v1982, %v1994
        %v2003 = vadd.f32 %v1983, %v1995
        %v2004 = vadd.f32 %v1984, %v1996
        %v2005 = vmul.f32 %v1997, 0.2
        %v2006 = vmul.f32 %v1998, 0.2
        %v2007 = vmul.f32 %v1999, 0.2
        %v2008 = vmul.f32 %v2000, 0.2
        %v2009 = vmul.f32 %v2001, 0.2
        %v2010 = vmul.f32 %v2002, 0.2
        %v2011 = vmul.f32 %v2003, 0.2
        %v2012 = vmul.f32 %v2004, 0.2
        %v2013 = vmax.f32 %v1997, %v2005
        %v2014 = vmax.f32 %v1998, %v2006
        %v2015 = vmax.f32 %v1999, %v2007
        %v2016 = vmax.f32 %v2000, %v2008
        %v2017 = vmax.f32 %v2001, %v2009
        %v2018 = vmax.f32 %v2002, %v2010
        %v2019 = vmax.f32 %v2003, %v2011
        %v2020 = vmax.f32 %v2004, %v2012
        %2021 = vmatprep.subr.mxu0 0.0
        %2022 = vmatpush1.msra.mxu0 %v2013
        %2023 = vmatprep.subr.mxu0 0.0
        %2024 = vmatpush1.msra.mxu0 %v2014
        %2025 = vmatprep.subr.mxu0 0.0
        %2026 = vmatpush1.msra.mxu0 %v2015
        %2027 = vmatprep.subr.mxu0 0.0
        %2028 = vmatpush1.msra.mxu0 %v2016
        %2029 = vmatprep.subr.mxu0 0.0
        %2030 = vmatpush1.msra.mxu0 %v2017
        %2031 = vmatprep.subr.mxu0 0.0
        %2032 = vmatpush1.msra.mxu0 %v2018
        %2033 = vmatprep.subr.mxu0 0.0
        %2034 = vmatpush1.msra.mxu0 %v2019
        %2035 = vmatprep.subr.mxu0 0.0
        %2036 = vmatpush1.msra.mxu0 %v2020
        %2037 = vmatprep.subr.mxu0 0.0
        %2038 = vmatpush1.msra.mxu0 0.0
        %2039 = vmatprep.subr.mxu0 0.0
        %2040 = vmatpush1.msra.mxu0 0.0
        %2041 = vmatprep.subr.mxu0 0.0
        %2042 = vmatpush1.msra.mxu0 0.0
        %2043 = vmatprep.subr.mxu0 0.0
        %2044 = vmatpush1.msra.mxu0 0.0
        %2045 = vmatprep.subr.mxu0 0.0
        %2046 = vmatpush1.msra.mxu0 0.0
        %2047 = vmatprep.subr.mxu0 0.0
        %2048 = vmatpush1.msra.mxu0 0.0
        %2049 = vmatprep.subr.mxu0 0.0
        %2050 = vmatpush1.msra.mxu0 0.0
        %2051 = vmatprep.subr.mxu0 0.0
        %2052 = vmatpush1.msra.mxu0 0.0
        %2053 = vmatprep.subr.mxu0 0.0
        %2054 = vmatpush1.msra.mxu0 0.0
        %2055 = vmatprep.subr.mxu0 0.0
        %2056 = vmatpush1.msra.mxu0 0.0
        %2057 = vmatprep.subr.mxu0 0.0
        %2058 = vmatpush1.msra.mxu0 0.0
        %2059 = vmatprep.subr.mxu0 0.0
        %2060 = vmatpush1.msra.mxu0 0.0
        %2061 = vmatprep.subr.mxu0 0.0
        %2062 = vmatpush1.msra.mxu0 0.0
        %2063 = vmatprep.subr.mxu0 0.0
        %2064 = vmatpush1.msra.mxu0 0.0
        %2065 = vmatprep.subr.mxu0 0.0
        %2066 = vmatpush1.msra.mxu0 0.0
        %2067 = vmatprep.subr.mxu0 0.0
        %2068 = vmatpush1.msra.mxu0 0.0
        %2069 = vmatprep.subr.mxu0 0.0
        %2070 = vmatpush1.msra.mxu0 0.0
        %2071 = vmatprep.subr.mxu0 0.0
        %2072 = vmatpush1.msra.mxu0 0.0
        %2073 = vmatprep.subr.mxu0 0.0
        %2074 = vmatpush1.msra.mxu0 0.0
        %2075 = vmatprep.subr.mxu0 0.0
        %2076 = vmatpush1.msra.mxu0 0.0
        %2077 = vmatprep.subr.mxu0 0.0
        %2078 = vmatpush1.msra.mxu0 0.0
        %2079 = vmatprep.subr.mxu0 0.0
        %2080 = vmatpush1.msra.mxu0 0.0
        %2081 = vmatprep.subr.mxu0 0.0
        %2082 = vmatpush1.msra.mxu0 0.0
        %2083 = vmatprep.subr.mxu0 0.0
        %2084 = vmatpush1.msra.mxu0 0.0
        %2085 = vmatprep.mubr.f32.mxu0 0.0
        %2086 = vmatmul.mubr.f32.gmra.mrb[0].mxu0 %v1671
        %v2087 = vpop.f32.mrb[0].mxu0
        %v2088 = vadd.f32 0.0, %v2087
        %v2089 = vpop.f32.mrb[0].mxu0
        %2090 = vdwg.mxu0
        %2091 = vst [vmem:[#allocation2 + $0x3] sm:$0x1] %v2088
        %2092 = vst [vmem:[#allocation2 + $0xa] sm:$0x2] %v2088
        %v2093 = vadd.f32 %v918, %v1503
        %v2094 = vadd.f32 %v919, %v1507
        %v2095 = vadd.f32 %v920, %v1513
        %v2096 = vadd.f32 %v921, %v1517
        %v2097 = vadd.f32 %v922, %v1523
        %v2098 = vadd.f32 %v923, %v1527
        %v2099 = vadd.f32 %v924, %v1533
        %v2100 = vadd.f32 %v925, %v1537
        %v2101 = vlaneseq
        %v2102 = vshrl.u32 %v2101, 7
        %v2103 = vsub.s32 4, %v2102
        %v2104 = vrot.slane %v1614, %v2103
        %v2105 = vmul.f32 %v2104, %v1616
        %v2106 = vmul.f32 %v2104, %v1617
        %v2107 = vmul.f32 %v2104, %v1618
        %v2108 = vmul.f32 %v2104, %v1619
        %v2109 = vmul.f32 %v2104, %v1620
        %v2110 = vmul.f32 %v2104, %v1621
        %v2111 = vmul.f32 %v2104, %v1622
        %v2112 = vmul.f32 %v2104, %v1623
        %v2113 = vadd.f32 %v2093, %v2105
        %v2114 = vadd.f32 %v2094, %v2106
        %v2115 = vadd.f32 %v2095, %v2107
        %v2116 = vadd.f32 %v2096, %v2108
        %v2117 = vadd.f32 %v2097, %v2109
        %v2118 = vadd.f32 %v2098, %v2110
        %v2119 = vadd.f32 %v2099, %v2111
        %v2120 = vadd.f32 %v2100, %v2112
        %v2121 = vmul.f32 %v2113, 0.2
        %v2122 = vmul.f32 %v2114, 0.2
        %v2123 = vmul.f32 %v2115, 0.2
        %v2124 = vmul.f32 %v2116, 0.2
        %v2125 = vmul.f32 %v2117, 0.2
        %v2126 = vmul.f32 %v2118, 0.2
        %v2127 = vmul.f32 %v2119, 0.2
        %v2128 = vmul.f32 %v2120, 0.2
        %v2129 = vmax.f32 %v2113, %v2121
        %v2130 = vmax.f32 %v2114, %v2122
        %v2131 = vmax.f32 %v2115, %v2123
        %v2132 = vmax.f32 %v2116, %v2124
        %v2133 = vmax.f32 %v2117, %v2125
        %v2134 = vmax.f32 %v2118, %v2126
        %v2135 = vmax.f32 %v2119, %v2127
        %v2136 = vmax.f32 %v2120, %v2128
        %2137 = vmatprep.subr.mxu0 0.0
        %2138 = vmatpush1.msra.mxu0 %v2129
        %2139 = vmatprep.subr.mxu0 0.0
        %2140 = vmatpush1.msra.mxu0 %v2130
        %2141 = vmatprep.subr.mxu0 0.0
        %2142 = vmatpush1.msra.mxu0 %v2131
        %2143 = vmatprep.subr.mxu0 0.0
        %2144 = vmatpush1.msra.mxu0 %v2132
        %2145 = vmatprep.subr.mxu0 0.0
        %2146 = vmatpush1.msra.mxu0 %v2133
        %2147 = vmatprep.subr.mxu0 0.0
        %2148 = vmatpush1.msra.mxu0 %v2134
        %2149 = vmatprep.subr.mxu0 0.0
        %2150 = vmatpush1.msra.mxu0 %v2135
        %2151 = vmatprep.subr.mxu0 0.0
        %2152 = vmatpush1.msra.mxu0 %v2136
        %2153 = vmatprep.subr.mxu0 0.0
        %2154 = vmatpush1.msra.mxu0 0.0
        %2155 = vmatprep.subr.mxu0 0.0
        %2156 = vmatpush1.msra.mxu0 0.0
        %2157 = vmatprep.subr.mxu0 0.0
        %2158 = vmatpush1.msra.mxu0 0.0
        %2159 = vmatprep.subr.mxu0 0.0
        %2160 = vmatpush1.msra.mxu0 0.0
        %2161 = vmatprep.subr.mxu0 0.0
        %2162 = vmatpush1.msra.mxu0 0.0
        %2163 = vmatprep.subr.mxu0 0.0
        %2164 = vmatpush1.msra.mxu0 0.0
        %2165 = vmatprep.subr.mxu0 0.0
        %2166 = vmatpush1.msra.mxu0 0.0
        %2167 = vmatprep.subr.mxu0 0.0
        %2168 = vmatpush1.msra.mxu0 0.0
        %2169 = vmatprep.subr.mxu0 0.0
        %2170 = vmatpush1.msra.mxu0 0.0
        %2171 = vmatprep.subr.mxu0 0.0
        %2172 = vmatpush1.msra.mxu0 0.0
        %2173 = vmatprep.subr.mxu0 0.0
        %2174 = vmatpush1.msra.mxu0 0.0
        %2175 = vmatprep.subr.mxu0 0.0
        %2176 = vmatpush1.msra.mxu0 0.0
        %2177 = vmatprep.subr.mxu0 0.0
        %2178 = vmatpush1.msra.mxu0 0.0
        %2179 = vmatprep.subr.mxu0 0.0
        %2180 = vmatpush1.msra.mxu0 0.0
        %2181 = vmatprep.subr.mxu0 0.0
        %2182 = vmatpush1.msra.mxu0 0.0
        %2183 = vmatprep.subr.mxu0 0.0
        %2184 = vmatpush1.msra.mxu0 0.0
        %2185 = vmatprep.subr.mxu0 0.0
        %2186 = vmatpush1.msra.mxu0 0.0
        %2187 = vmatprep.subr.mxu0 0.0
        %2188 = vmatpush1.msra.mxu0 0.0
        %2189 = vmatprep.subr.mxu0 0.0
        %2190 = vmatpush1.msra.mxu0 0.0
        %2191 = vmatprep.subr.mxu0 0.0
        %2192 = vmatpush1.msra.mxu0 0.0
        %2193 = vmatprep.subr.mxu0 0.0
        %2194 = vmatpush1.msra.mxu0 0.0
        %2195 = vmatprep.subr.mxu0 0.0
        %2196 = vmatpush1.msra.mxu0 0.0
        %2197 = vmatprep.subr.mxu0 0.0
        %2198 = vmatpush1.msra.mxu0 0.0
        %2199 = vmatprep.subr.mxu0 0.0
        %2200 = vmatpush1.msra.mxu0 0.0
        %2201 = vmatprep.mubr.f32.mxu0 0.0
        %2202 = vmatmul.mubr.f32.gmra.mrb[0].mxu0 %v1671
        %v2203 = vpop.f32.mrb[0].mxu0
        %v2204 = vadd.f32 0.0, %v2203
        %v2205 = vpop.f32.mrb[0].mxu0
        %2206 = vdwg.mxu0
        %2207 = vst [vmem:[#allocation2 + $0x4] sm:$0x1] %v2204
        %2208 = vst [vmem:[#allocation2 + $0xb] sm:$0x2] %v2204
        %v2209 = vadd.f32 %v918, %v1505
        %v2210 = vadd.f32 %v919, %v1509
        %v2211 = vadd.f32 %v920, %v1515
        %v2212 = vadd.f32 %v921, %v1519
        %v2213 = vadd.f32 %v922, %v1525
        %v2214 = vadd.f32 %v923, %v1529
        %v2215 = vadd.f32 %v924, %v1535
        %v2216 = vadd.f32 %v925, %v1539
        %v2217 = vlaneseq
        %v2218 = vshrl.u32 %v2217, 7
        %v2219 = vsub.s32 5, %v2218
        %v2220 = vrot.slane %v1614, %v2219
        %v2221 = vmul.f32 %v2220, %v1616
        %v2222 = vmul.f32 %v2220, %v1617
        %v2223 = vmul.f32 %v2220, %v1618
        %v2224 = vmul.f32 %v2220, %v1619
        %v2225 = vmul.f32 %v2220, %v1620
        %v2226 = vmul.f32 %v2220, %v1621
        %v2227 = vmul.f32 %v2220, %v1622
        %v2228 = vmul.f32 %v2220, %v1623
        %v2229 = vadd.f32 %v2209, %v2221
        %v2230 = vadd.f32 %v2210, %v2222
        %v2231 = vadd.f32 %v2211, %v2223
        %v2232 = vadd.f32 %v2212, %v2224
        %v2233 = vadd.f32 %v2213, %v2225
        %v2234 = vadd.f32 %v2214, %v2226
        %v2235 = vadd.f32 %v2215, %v2227
        %v2236 = vadd.f32 %v2216, %v2228
        %v2237 = vmul.f32 %v2229, 0.2
        %v2238 = vmul.f32 %v2230, 0.2
        %v2239 = vmul.f32 %v2231, 0.2
        %v2240 = vmul.f32 %v2232, 0.2
        %v2241 = vmul.f32 %v2233, 0.2
        %v2242 = vmul.f32 %v2234, 0.2
        %v2243 = vmul.f32 %v2235, 0.2
        %v2244 = vmul.f32 %v2236, 0.2
        %v2245 = vmax.f32 %v2229, %v2237
        %v2246 = vmax.f32 %v2230, %v2238
        %v2247 = vmax.f32 %v2231, %v2239
        %v2248 = vmax.f32 %v2232, %v2240
        %v2249 = vmax.f32 %v2233, %v2241
        %v2250 = vmax.f32 %v2234, %v2242
        %v2251 = vmax.f32 %v2235, %v2243
        %v2252 = vmax.f32 %v2236, %v2244
        %2253 = vmatprep.subr.mxu0 0.0
        %2254 = vmatpush1.msra.mxu0 %v2245
        %2255 = vmatprep.subr.mxu0 0.0
        %2256 = vmatpush1.msra.mxu0 %v2246
        %2257 = vmatprep.subr.mxu0 0.0
        %2258 = vmatpush1.msra.mxu0 %v2247
        %2259 = vmatprep.subr.mxu0 0.0
        %2260 = vmatpush1.msra.mxu0 %v2248
        %2261 = vmatprep.subr.mxu0 0.0
        %2262 = vmatpush1.msra.mxu0 %v2249
        %2263 = vmatprep.subr.mxu0 0.0
        %2264 = vmatpush1.msra.mxu0 %v2250
        %2265 = vmatprep.subr.mxu0 0.0
        %2266 = vmatpush1.msra.mxu0 %v2251
        %2267 = vmatprep.subr.mxu0 0.0
        %2268 = vmatpush1.msra.mxu0 %v2252
        %2269 = vmatprep.subr.mxu0 0.0
        %2270 = vmatpush1.msra.mxu0 0.0
        %2271 = vmatprep.subr.mxu0 0.0
        %2272 = vmatpush1.msra.mxu0 0.0
        %2273 = vmatprep.subr.mxu0 0.0
        %2274 = vmatpush1.msra.mxu0 0.0
        %2275 = vmatprep.subr.mxu0 0.0
        %2276 = vmatpush1.msra.mxu0 0.0
        %2277 = vmatprep.subr.mxu0 0.0
        %2278 = vmatpush1.msra.mxu0 0.0
        %2279 = vmatprep.subr.mxu0 0.0
        %2280 = vmatpush1.msra.mxu0 0.0
        %2281 = vmatprep.subr.mxu0 0.0
        %2282 = vmatpush1.msra.mxu0 0.0
        %2283 = vmatprep.subr.mxu0 0.0
        %2284 = vmatpush1.msra.mxu0 0.0
        %2285 = vmatprep.subr.mxu0 0.0
        %2286 = vmatpush1.msra.mxu0 0.0
        %2287 = vmatprep.subr.mxu0 0.0
        %2288 = vmatpush1.msra.mxu0 0.0
        %2289 = vmatprep.subr.mxu0 0.0
        %2290 = vmatpush1.msra.mxu0 0.0
        %2291 = vmatprep.subr.mxu0 0.0
        %2292 = vmatpush1.msra.mxu0 0.0
        %2293 = vmatprep.subr.mxu0 0.0
        %2294 = vmatpush1.msra.mxu0 0.0
        %2295 = vmatprep.subr.mxu0 0.0
        %2296 = vmatpush1.msra.mxu0 0.0
        %2297 = vmatprep.subr.mxu0 0.0
        %2298 = vmatpush1.msra.mxu0 0.0
        %2299 = vmatprep.subr.mxu0 0.0
        %2300 = vmatpush1.msra.mxu0 0.0
        %2301 = vmatprep.subr.mxu0 0.0
        %2302 = vmatpush1.msra.mxu0 0.0
        %2303 = vmatprep.subr.mxu0 0.0
        %2304 = vmatpush1.msra.mxu0 0.0
        %2305 = vmatprep.subr.mxu0 0.0
        %2306 = vmatpush1.msra.mxu0 0.0
        %2307 = vmatprep.subr.mxu0 0.0
        %2308 = vmatpush1.msra.mxu0 0.0
        %2309 = vmatprep.subr.mxu0 0.0
        %2310 = vmatpush1.msra.mxu0 0.0
        %2311 = vmatprep.subr.mxu0 0.0
        %2312 = vmatpush1.msra.mxu0 0.0
        %2313 = vmatprep.subr.mxu0 0.0
        %2314 = vmatpush1.msra.mxu0 0.0
        %2315 = vmatprep.subr.mxu0 0.0
        %2316 = vmatpush1.msra.mxu0 0.0
        %2317 = vmatprep.mubr.f32.mxu0 0.0
        %2318 = vmatmul.mubr.f32.gmra.mrb[0].mxu0 %v1671
        %v2319 = vpop.f32.mrb[0].mxu0
        %v2320 = vadd.f32 0.0, %v2319
        %v2321 = vpop.f32.mrb[0].mxu0
        %2322 = vdwg.mxu0
        %2323 = vst [vmem:[#allocation2 + $0x5] sm:$0x1] %v2320
        %2324 = vst [vmem:[#allocation2 + $0xc] sm:$0x2] %v2320
        %v2325 = vadd.f32 %v918, %v1576
        %v2326 = vadd.f32 %v919, %v1580
        %v2327 = vadd.f32 %v920, %v1586
        %v2328 = vadd.f32 %v921, %v1590
        %v2329 = vadd.f32 %v922, %v1596
        %v2330 = vadd.f32 %v923, %v1600
        %v2331 = vadd.f32 %v924, %v1606
        %v2332 = vadd.f32 %v925, %v1610
        %v2333 = vlaneseq
        %v2334 = vshrl.u32 %v2333, 7
        %v2335 = vsub.s32 6, %v2334
        %v2336 = vrot.slane %v1614, %v2335
        %v2337 = vmul.f32 %v2336, %v1616
        %v2338 = vmul.f32 %v2336, %v1617
        %v2339 = vmul.f32 %v2336, %v1618
        %v2340 = vmul.f32 %v2336, %v1619
        %v2341 = vmul.f32 %v2336, %v1620
        %v2342 = vmul.f32 %v2336, %v1621
        %v2343 = vmul.f32 %v2336, %v1622
        %v2344 = vmul.f32 %v2336, %v1623
        %v2345 = vadd.f32 %v2325, %v2337
        %v2346 = vadd.f32 %v2326, %v2338
        %v2347 = vadd.f32 %v2327, %v2339
        %v2348 = vadd.f32 %v2328, %v2340
        %v2349 = vadd.f32 %v2329, %v2341
        %v2350 = vadd.f32 %v2330, %v2342
        %v2351 = vadd.f32 %v2331, %v2343
        %v2352 = vadd.f32 %v2332, %v2344
        %v2353 = vmul.f32 %v2345, 0.2
        %v2354 = vmul.f32 %v2346, 0.2
        %v2355 = vmul.f32 %v2347, 0.2
        %v2356 = vmul.f32 %v2348, 0.2
        %v2357 = vmul.f32 %v2349, 0.2
        %v2358 = vmul.f32 %v2350, 0.2
        %v2359 = vmul.f32 %v2351, 0.2
        %v2360 = vmul.f32 %v2352, 0.2
        %v2361 = vmax.f32 %v2345, %v2353
        %v2362 = vmax.f32 %v2346, %v2354
        %v2363 = vmax.f32 %v2347, %v2355
        %v2364 = vmax.f32 %v2348, %v2356
        %v2365 = vmax.f32 %v2349, %v2357
        %v2366 = vmax.f32 %v2350, %v2358
        %v2367 = vmax.f32 %v2351, %v2359
        %v2368 = vmax.f32 %v2352, %v2360
        %2369 = vmatprep.subr.mxu0 0.0
        %2370 = vmatpush1.msra.mxu0 %v2361
        %2371 = vmatprep.subr.mxu0 0.0
        %2372 = vmatpush1.msra.mxu0 %v2362
        %2373 = vmatprep.subr.mxu0 0.0
        %2374 = vmatpush1.msra.mxu0 %v2363
        %2375 = vmatprep.subr.mxu0 0.0
        %2376 = vmatpush1.msra.mxu0 %v2364
        %2377 = vmatprep.subr.mxu0 0.0
        %2378 = vmatpush1.msra.mxu0 %v2365
        %2379 = vmatprep.subr.mxu0 0.0
        %2380 = vmatpush1.msra.mxu0 %v2366
        %2381 = vmatprep.subr.mxu0 0.0
        %2382 = vmatpush1.msra.mxu0 %v2367
        %2383 = vmatprep.subr.mxu0 0.0
        %2384 = vmatpush1.msra.mxu0 %v2368
        %2385 = vmatprep.subr.mxu0 0.0
        %2386 = vmatpush1.msra.mxu0 0.0
        %2387 = vmatprep.subr.mxu0 0.0
        %2388 = vmatpush1.msra.mxu0 0.0
        %2389 = vmatprep.subr.mxu0 0.0
        %2390 = vmatpush1.msra.mxu0 0.0
        %2391 = vmatprep.subr.mxu0 0.0
        %2392 = vmatpush1.msra.mxu0 0.0
        %2393 = vmatprep.subr.mxu0 0.0
        %2394 = vmatpush1.msra.mxu0 0.0
        %2395 = vmatprep.subr.mxu0 0.0
        %2396 = vmatpush1.msra.mxu0 0.0
        %2397 = vmatprep.subr.mxu0 0.0
        %2398 = vmatpush1.msra.mxu0 0.0
        %2399 = vmatprep.subr.mxu0 0.0
        %2400 = vmatpush1.msra.mxu0 0.0
        %2401 = vmatprep.subr.mxu0 0.0
        %2402 = vmatpush1.msra.mxu0 0.0
        %2403 = vmatprep.subr.mxu0 0.0
        %2404 = vmatpush1.msra.mxu0 0.0
        %2405 = vmatprep.subr.mxu0 0.0
        %2406 = vmatpush1.msra.mxu0 0.0
        %2407 = vmatprep.subr.mxu0 0.0
        %2408 = vmatpush1.msra.mxu0 0.0
        %2409 = vmatprep.subr.mxu0 0.0
        %2410 = vmatpush1.msra.mxu0 0.0
        %2411 = vmatprep.subr.mxu0 0.0
        %2412 = vmatpush1.msra.mxu0 0.0
        %2413 = vmatprep.subr.mxu0 0.0
        %2414 = vmatpush1.msra.mxu0 0.0
        %2415 = vmatprep.subr.mxu0 0.0
        %2416 = vmatpush1.msra.mxu0 0.0
        %2417 = vmatprep.subr.mxu0 0.0
        %2418 = vmatpush1.msra.mxu0 0.0
        %2419 = vmatprep.subr.mxu0 0.0
        %2420 = vmatpush1.msra.mxu0 0.0
        %2421 = vmatprep.subr.mxu0 0.0
        %2422 = vmatpush1.msra.mxu0 0.0
        %2423 = vmatprep.subr.mxu0 0.0
        %2424 = vmatpush1.msra.mxu0 0.0
        %2425 = vmatprep.subr.mxu0 0.0
        %2426 = vmatpush1.msra.mxu0 0.0
        %2427 = vmatprep.subr.mxu0 0.0
        %2428 = vmatpush1.msra.mxu0 0.0
        %2429 = vmatprep.subr.mxu0 0.0
        %2430 = vmatpush1.msra.mxu0 0.0
        %2431 = vmatprep.subr.mxu0 0.0
        %2432 = vmatpush1.msra.mxu0 0.0
        %2433 = vmatprep.mubr.f32.mxu0 0.0
        %2434 = vmatmul.mubr.f32.gmra.mrb[0].mxu0 %v1671
        %v2435 = vpop.f32.mrb[0].mxu0
        %v2436 = vadd.f32 0.0, %v2435
        %v2437 = vpop.f32.mrb[0].mxu0
        %2438 = vdwg.mxu0
        %2439 = vst [vmem:[#allocation2 + $0x6] sm:$0x1] %v2436
        %2440 = vst [vmem:[#allocation2 + $0xd] sm:$0x2] %v2436
        %v2441 = vadd.f32 %v918, %v1578
        %v2442 = vadd.f32 %v919, %v1582
        %v2443 = vadd.f32 %v920, %v1588
        %v2444 = vadd.f32 %v921, %v1592
        %v2445 = vadd.f32 %v922, %v1598
        %v2446 = vadd.f32 %v923, %v1602
        %v2447 = vadd.f32 %v924, %v1608
        %v2448 = vadd.f32 %v925, %v1612
        %v2449 = vlaneseq
        %v2450 = vshrl.u32 %v2449, 7
        %v2451 = vsub.s32 7, %v2450
        %v2452 = vrot.slane %v1614, %v2451
        %v2453 = vmul.f32 %v2452, %v1616
        %v2454 = vmul.f32 %v2452, %v1617
        %v2455 = vmul.f32 %v2452, %v1618
        %v2456 = vmul.f32 %v2452, %v1619
        %v2457 = vmul.f32 %v2452, %v1620
        %v2458 = vmul.f32 %v2452, %v1621
        %v2459 = vmul.f32 %v2452, %v1622
        %v2460 = vmul.f32 %v2452, %v1623
        %v2461 = vadd.f32 %v2441, %v2453
        %v2462 = vadd.f32 %v2442, %v2454
        %v2463 = vadd.f32 %v2443, %v2455
        %v2464 = vadd.f32 %v2444, %v2456
        %v2465 = vadd.f32 %v2445, %v2457
        %v2466 = vadd.f32 %v2446, %v2458
        %v2467 = vadd.f32 %v2447, %v2459
        %v2468 = vadd.f32 %v2448, %v2460
        %v2469 = vmul.f32 %v2461, 0.2
        %v2470 = vmul.f32 %v2462, 0.2
        %v2471 = vmul.f32 %v2463, 0.2
        %v2472 = vmul.f32 %v2464, 0.2
        %v2473 = vmul.f32 %v2465, 0.2
        %v2474 = vmul.f32 %v2466, 0.2
        %v2475 = vmul.f32 %v2467, 0.2
        %v2476 = vmul.f32 %v2468, 0.2
        %v2477 = vmax.f32 %v2461, %v2469
        %v2478 = vmax.f32 %v2462, %v2470
        %v2479 = vmax.f32 %v2463, %v2471
        %v2480 = vmax.f32 %v2464, %v2472
        %v2481 = vmax.f32 %v2465, %v2473
        %v2482 = vmax.f32 %v2466, %v2474
        %v2483 = vmax.f32 %v2467, %v2475
        %v2484 = vmax.f32 %v2468, %v2476
        %2485 = vmatprep.subr.mxu0 0.0
        %2486 = vmatpush1.msra.mxu0 %v2477
        %2487 = vmatprep.subr.mxu0 0.0
        %2488 = vmatpush1.msra.mxu0 %v2478
        %2489 = vmatprep.subr.mxu0 0.0
        %2490 = vmatpush1.msra.mxu0 %v2479
        %2491 = vmatprep.subr.mxu0 0.0
        %2492 = vmatpush1.msra.mxu0 %v2480
        %2493 = vmatprep.subr.mxu0 0.0
        %2494 = vmatpush1.msra.mxu0 %v2481
        %2495 = vmatprep.subr.mxu0 0.0
        %2496 = vmatpush1.msra.mxu0 %v2482
        %2497 = vmatprep.subr.mxu0 0.0
        %2498 = vmatpush1.msra.mxu0 %v2483
        %2499 = vmatprep.subr.mxu0 0.0
        %2500 = vmatpush1.msra.mxu0 %v2484
        %2501 = vmatprep.subr.mxu0 0.0
        %2502 = vmatpush1.msra.mxu0 0.0
        %2503 = vmatprep.subr.mxu0 0.0
        %2504 = vmatpush1.msra.mxu0 0.0
        %2505 = vmatprep.subr.mxu0 0.0
        %2506 = vmatpush1.msra.mxu0 0.0
        %2507 = vmatprep.subr.mxu0 0.0
        %2508 = vmatpush1.msra.mxu0 0.0
        %2509 = vmatprep.subr.mxu0 0.0
        %2510 = vmatpush1.msra.mxu0 0.0
        %2511 = vmatprep.subr.mxu0 0.0
        %2512 = vmatpush1.msra.mxu0 0.0
        %2513 = vmatprep.subr.mxu0 0.0
        %2514 = vmatpush1.msra.mxu0 0.0
        %2515 = vmatprep.subr.mxu0 0.0
        %2516 = vmatpush1.msra.mxu0 0.0
        %2517 = vmatprep.subr.mxu0 0.0
        %2518 = vmatpush1.msra.mxu0 0.0
        %2519 = vmatprep.subr.mxu0 0.0
        %2520 = vmatpush1.msra.mxu0 0.0
        %2521 = vmatprep.subr.mxu0 0.0
        %2522 = vmatpush1.msra.mxu0 0.0
        %2523 = vmatprep.subr.mxu0 0.0
        %2524 = vmatpush1.msra.mxu0 0.0
        %2525 = vmatprep.subr.mxu0 0.0
        %2526 = vmatpush1.msra.mxu0 0.0
        %2527 = vmatprep.subr.mxu0 0.0
        %2528 = vmatpush1.msra.mxu0 0.0
        %2529 = vmatprep.subr.mxu0 0.0
        %2530 = vmatpush1.msra.mxu0 0.0
        %2531 = vmatprep.subr.mxu0 0.0
        %2532 = vmatpush1.msra.mxu0 0.0
        %2533 = vmatprep.subr.mxu0 0.0
        %2534 = vmatpush1.msra.mxu0 0.0
        %2535 = vmatprep.subr.mxu0 0.0
        %2536 = vmatpush1.msra.mxu0 0.0
        %2537 = vmatprep.subr.mxu0 0.0
        %2538 = vmatpush1.msra.mxu0 0.0
        %2539 = vmatprep.subr.mxu0 0.0
        %2540 = vmatpush1.msra.mxu0 0.0
        %2541 = vmatprep.subr.mxu0 0.0
        %2542 = vmatpush1.msra.mxu0 0.0
        %2543 = vmatprep.subr.mxu0 0.0
        %2544 = vmatpush1.msra.mxu0 0.0
        %2545 = vmatprep.subr.mxu0 0.0
        %2546 = vmatpush1.msra.mxu0 0.0
        %2547 = vmatprep.subr.mxu0 0.0
        %2548 = vmatpush1.msra.mxu0 0.0
        %2549 = vmatprep.mubr.f32.mxu0 0.0
        %2550 = vmatmul.mubr.f32.gmra.mrb[0].mxu0 %v1671
        %v2551 = vpop.f32.mrb[0].mxu0
        %v2552 = vadd.f32 0.0, %v2551
        %v2553 = vpop.f32.mrb[0].mxu0
        %2554 = vdwg.mxu0
        %2555 = vst [vmem:[#allocation2 + $0x7] sm:$0x1] %v2552
        %2556 = vst [vmem:[#allocation2 + $0xe] sm:$0x2] %v2552
        %v2557 = vld [vmem:[%s6] sm:$0xff]
        %v2558 = vld [vmem:[%s6 + $0x8] sm:$0xff]
        %v2559 = vld [vmem:[%s6 + $0x10] sm:$0xff]
        %v2560 = vld [vmem:[%s6 + $0x18] sm:$0xff]
        %v2561 = vld [vmem:[%s6 + $0x20] sm:$0xff]
        %v2562 = vld [vmem:[%s6 + $0x28] sm:$0xff]
        %v2563 = vld [vmem:[%s6 + $0x30] sm:$0xff]
        %v2564 = vld [vmem:[%s6 + $0x38] sm:$0xff]
        %v2565 = vld [vmem:[%s6 + $0x40] sm:$0xff]
        %v2566 = vld [vmem:[%s6 + $0x48] sm:$0xff]
        %v2567 = vld [vmem:[%s6 + $0x50] sm:$0xff]
        %v2568 = vld [vmem:[%s6 + $0x58] sm:$0xff]
        %v2569 = vld [vmem:[%s6 + $0x60] sm:$0xff]
        %v2570 = vld [vmem:[%s6 + $0x68] sm:$0xff]
        %v2571 = vld [vmem:[%s6 + $0x70] sm:$0xff]
        %v2572 = vld [vmem:[%s6 + $0x78] sm:$0xff]
        %v2573 = vld [vmem:[#allocation2] sm:$0xff]
        %v2574 = vld [vmem:[#allocation2 + $0x8] sm:$0xff]
        %v2575 = vadd.f32 %v2573, %v1615
        %v2576 = vadd.f32 %v2575, %v2557
        %v2577 = vadd.f32 %v2575, %v2558
        %v2578 = vadd.f32 %v2575, %v2559
        %v2579 = vadd.f32 %v2575, %v2560
        %v2580 = vadd.f32 %v2575, %v2561
        %v2581 = vadd.f32 %v2575, %v2562
        %v2582 = vadd.f32 %v2575, %v2563
        %v2583 = vadd.f32 %v2575, %v2564
        %v2584 = vadd.f32 %v2575, %v2565
        %v2585 = vadd.f32 %v2575, %v2566
        %v2586 = vadd.f32 %v2575, %v2567
        %v2587 = vadd.f32 %v2575, %v2568
        %v2588 = vadd.f32 %v2575, %v2569
        %v2589 = vadd.f32 %v2575, %v2570
        %v2590 = vadd.f32 %v2575, %v2571
        %v2591 = vadd.f32 %v2575, %v2572
        %2592 = vmax.xlane.f32.xlu0 %v2576
        %v2593 = vpop.xlane.xlu0 %2592
        %2594 = vmax.xlane.f32.xlu0 %v2577
        %v2595 = vpop.xlane.xlu0 %2594
        %2596 = vmax.xlane.f32.xlu0 %v2578
        %v2597 = vpop.xlane.xlu0 %2596
        %2598 = vmax.xlane.f32.xlu0 %v2579
        %v2599 = vpop.xlane.xlu0 %2598
        %2600 = vmax.xlane.f32.xlu0 %v2580
        %v2601 = vpop.xlane.xlu0 %2600
        %2602 = vmax.xlane.f32.xlu0 %v2581
        %v2603 = vpop.xlane.xlu0 %2602
        %2604 = vmax.xlane.f32.xlu0 %v2582
        %v2605 = vpop.xlane.xlu0 %2604
        %2606 = vmax.xlane.f32.xlu0 %v2583
        %v2607 = vpop.xlane.xlu0 %2606
        %2608 = vmax.xlane.f32.xlu0 %v2584
        %v2609 = vpop.xlane.xlu0 %2608
        %2610 = vmax.xlane.f32.xlu0 %v2585
        %v2611 = vpop.xlane.xlu0 %2610
        %2612 = vmax.xlane.f32.xlu0 %v2586
        %v2613 = vpop.xlane.xlu0 %2612
        %2614 = vmax.xlane.f32.xlu0 %v2587
        %v2615 = vpop.xlane.xlu0 %2614
        %2616 = vmax.xlane.f32.xlu0 %v2588
        %v2617 = vpop.xlane.xlu0 %2616
        %2618 = vmax.xlane.f32.xlu0 %v2589
        %v2619 = vpop.xlane.xlu0 %2618
        %2620 = vmax.xlane.f32.xlu0 %v2590
        %v2621 = vpop.xlane.xlu0 %2620
        %2622 = vmax.xlane.f32.xlu0 %v2591
        %v2623 = vpop.xlane.xlu0 %2622
        %v2624 = vsub.f32 %v2576, %v2593
        %v2625 = vsub.f32 %v2577, %v2595
        %v2626 = vsub.f32 %v2578, %v2597
        %v2627 = vsub.f32 %v2579, %v2599
        %v2628 = vsub.f32 %v2580, %v2601
        %v2629 = vsub.f32 %v2581, %v2603
        %v2630 = vsub.f32 %v2582, %v2605
        %v2631 = vsub.f32 %v2583, %v2607
        %v2632 = vsub.f32 %v2584, %v2609
        %v2633 = vsub.f32 %v2585, %v2611
        %v2634 = vsub.f32 %v2586, %v2613
        %v2635 = vsub.f32 %v2587, %v2615
        %v2636 = vsub.f32 %v2588, %v2617
        %v2637 = vsub.f32 %v2589, %v2619
        %v2638 = vsub.f32 %v2590, %v2621
        %v2639 = vsub.f32 %v2591, %v2623
        %v2640 = vmul.f32 %v2624, 1.442695
        %v2641 = vpow.pop %v2640
        %v2642 = vmul.f32 %v2625, 1.442695
        %v2643 = vpow.pop %v2642
        %v2644 = vmul.f32 %v2626, 1.442695
        %v2645 = vpow.pop %v2644
        %v2646 = vmul.f32 %v2627, 1.442695
        %v2647 = vpow.pop %v2646
        %v2648 = vmul.f32 %v2628, 1.442695
        %v2649 = vpow.pop %v2648
        %v2650 = vmul.f32 %v2629, 1.442695
        %v2651 = vpow.pop %v2650
        %v2652 = vmul.f32 %v2630, 1.442695
        %v2653 = vpow.pop %v2652
        %v2654 = vmul.f32 %v2631, 1.442695
        %v2655 = vpow.pop %v2654
        %v2656 = vmul.f32 %v2632, 1.442695
        %v2657 = vpow.pop %v2656
        %v2658 = vmul.f32 %v2633, 1.442695
        %v2659 = vpow.pop %v2658
        %v2660 = vmul.f32 %v2634, 1.442695
        %v2661 = vpow.pop %v2660
        %v2662 = vmul.f32 %v2635, 1.442695
        %v2663 = vpow.pop %v2662
        %v2664 = vmul.f32 %v2636, 1.442695
        %v2665 = vpow.pop %v2664
        %v2666 = vmul.f32 %v2637, 1.442695
        %v2667 = vpow.pop %v2666
        %v2668 = vmul.f32 %v2638, 1.442695
        %v2669 = vpow.pop %v2668
        %v2670 = vmul.f32 %v2639, 1.442695
        %v2671 = vpow.pop %v2670
        %2672 = vadd.xlane.f32.xlu0 %v2641
        %v2673 = vpop.xlane.xlu0 %2672
        %2674 = vadd.xlane.f32.xlu0 %v2643
        %v2675 = vpop.xlane.xlu0 %2674
        %2676 = vadd.xlane.f32.xlu0 %v2645
        %v2677 = vpop.xlane.xlu0 %2676
        %2678 = vadd.xlane.f32.xlu0 %v2647
        %v2679 = vpop.xlane.xlu0 %2678
        %2680 = vadd.xlane.f32.xlu0 %v2649
        %v2681 = vpop.xlane.xlu0 %2680
        %2682 = vadd.xlane.f32.xlu0 %v2651
        %v2683 = vpop.xlane.xlu0 %2682
        %2684 = vadd.xlane.f32.xlu0 %v2653
        %v2685 = vpop.xlane.xlu0 %2684
        %2686 = vadd.xlane.f32.xlu0 %v2655
        %v2687 = vpop.xlane.xlu0 %2686
        %2688 = vadd.xlane.f32.xlu0 %v2657
        %v2689 = vpop.xlane.xlu0 %2688
        %2690 = vadd.xlane.f32.xlu0 %v2659
        %v2691 = vpop.xlane.xlu0 %2690
        %2692 = vadd.xlane.f32.xlu0 %v2661
        %v2693 = vpop.xlane.xlu0 %2692
        %2694 = vadd.xlane.f32.xlu0 %v2663
        %v2695 = vpop.xlane.xlu0 %2694
        %2696 = vadd.xlane.f32.xlu0 %v2665
        %v2697 = vpop.xlane.xlu0 %2696
        %2698 = vadd.xlane.f32.xlu0 %v2667
        %v2699 = vpop.xlane.xlu0 %2698
        %2700 = vadd.xlane.f32.xlu0 %v2669
        %v2701 = vpop.xlane.xlu0 %2700
        %2702 = vadd.xlane.f32.xlu0 %v2671
        %v2703 = vpop.xlane.xlu0 %2702
        %v2704 = vrcp.pop %v2673
        %v2705 = vrcp.pop %v2675
        %v2706 = vrcp.pop %v2677
        %v2707 = vrcp.pop %v2679
        %v2708 = vrcp.pop %v2681
        %v2709 = vrcp.pop %v2683
        %v2710 = vrcp.pop %v2685
        %v2711 = vrcp.pop %v2687
        %v2712 = vrcp.pop %v2689
        %v2713 = vrcp.pop %v2691
        %v2714 = vrcp.pop %v2693
        %v2715 = vrcp.pop %v2695
        %v2716 = vrcp.pop %v2697
        %v2717 = vrcp.pop %v2699
        %v2718 = vrcp.pop %v2701
        %v2719 = vrcp.pop %v2703
        %v2720 = vmul.f32 %v2704, 0.5
        %v2721 = vmul.f32 %v2705, 0.5
        %v2722 = vmul.f32 %v2706, 0.5
        %v2723 = vmul.f32 %v2707, 0.5
        %v2724 = vmul.f32 %v2708, 0.5
        %v2725 = vmul.f32 %v2709, 0.5
        %v2726 = vmul.f32 %v2710, 0.5
        %v2727 = vmul.f32 %v2711, 0.5
        %v2728 = vmul.f32 %v2712, 0.5
        %v2729 = vmul.f32 %v2713, 0.5
        %v2730 = vmul.f32 %v2714, 0.5
        %v2731 = vmul.f32 %v2715, 0.5
        %v2732 = vmul.f32 %v2716, 0.5
        %v2733 = vmul.f32 %v2717, 0.5
        %v2734 = vmul.f32 %v2718, 0.5
        %v2735 = vmul.f32 %v2719, 0.5
        %v2736 = vmul.f32 %v2641, %v2720
        %v2737 = vmul.f32 %v2643, %v2721
        %v2738 = vmul.f32 %v2645, %v2722
        %v2739 = vmul.f32 %v2647, %v2723
        %v2740 = vmul.f32 %v2649, %v2724
        %v2741 = vmul.f32 %v2651, %v2725
        %v2742 = vmul.f32 %v2653, %v2726
        %v2743 = vmul.f32 %v2655, %v2727
        %v2744 = vmul.f32 %v2657, %v2728
        %v2745 = vmul.f32 %v2659, %v2729
        %v2746 = vmul.f32 %v2661, %v2730
        %v2747 = vmul.f32 %v2663, %v2731
        %v2748 = vmul.f32 %v2665, %v2732
        %v2749 = vmul.f32 %v2667, %v2733
        %v2750 = vmul.f32 %v2669, %v2734
        %v2751 = vmul.f32 %v2671, %v2735
        %v2752 = vadd.f32 %v2574, %v1615
        %v2753 = vadd.f32 %v2752, %v2557
        %v2754 = vadd.f32 %v2752, %v2558
        %v2755 = vadd.f32 %v2752, %v2559
        %v2756 = vadd.f32 %v2752, %v2560
        %v2757 = vadd.f32 %v2752, %v2561
        %v2758 = vadd.f32 %v2752, %v2562
        %v2759 = vadd.f32 %v2752, %v2563
        %v2760 = vadd.f32 %v2752, %v2564
        %v2761 = vadd.f32 %v2752, %v2565
        %v2762 = vadd.f32 %v2752, %v2566
        %v2763 = vadd.f32 %v2752, %v2567
        %v2764 = vadd.f32 %v2752, %v2568
        %v2765 = vadd.f32 %v2752, %v2569
        %v2766 = vadd.f32 %v2752, %v2570
        %v2767 = vadd.f32 %v2752, %v2571
        %v2768 = vadd.f32 %v2752, %v2572
        %2769 = vmax.xlane.f32.xlu0 %v2753
        %v2770 = vpop.xlane.xlu0 %2769
        %2771 = vmax.xlane.f32.xlu0 %v2754
        %v2772 = vpop.xlane.xlu0 %2771
        %2773 = vmax.xlane.f32.xlu0 %v2755
        %v2774 = vpop.xlane.xlu0 %2773
        %2775 = vmax.xlane.f32.xlu0 %v2756
        %v2776 = vpop.xlane.xlu0 %2775
        %2777 = vmax.xlane.f32.xlu0 %v2757
        %v2778 = vpop.xlane.xlu0 %2777
        %2779 = vmax.xlane.f32.xlu0 %v2758
        %v2780 = vpop.xlane.xlu0 %2779
        %2781 = vmax.xlane.f32.xlu0 %v2759
        %v2782 = vpop.xlane.xlu0 %2781
        %2783 = vmax.xlane.f32.xlu0 %v2760
        %v2784 = vpop.xlane.xlu0 %2783
        %2785 = vmax.xlane.f32.xlu0 %v2761
        %v2786 = vpop.xlane.xlu0 %2785
        %2787 = vmax.xlane.f32.xlu0 %v2762
        %v2788 = vpop.xlane.xlu0 %2787
        %2789 = vmax.xlane.f32.xlu0 %v2763
        %v2790 = vpop.xlane.xlu0 %2789
        %2791 = vmax.xlane.f32.xlu0 %v2764
        %v2792 = vpop.xlane.xlu0 %2791
        %2793 = vmax.xlane.f32.xlu0 %v2765
        %v2794 = vpop.xlane.xlu0 %2793
        %2795 = vmax.xlane.f32.xlu0 %v2766
        %v2796 = vpop.xlane.xlu0 %2795
        %2797 = vmax.xlane.f32.xlu0 %v2767
        %v2798 = vpop.xlane.xlu0 %2797
        %2799 = vmax.xlane.f32.xlu0 %v2768
        %v2800 = vpop.xlane.xlu0 %2799
        %v2801 = vsub.f32 %v2753, %v2770
        %v2802 = vsub.f32 %v2754, %v2772
        %v2803 = vsub.f32 %v2755, %v2774
        %v2804 = vsub.f32 %v2756, %v2776
        %v2805 = vsub.f32 %v2757, %v2778
        %v2806 = vsub.f32 %v2758, %v2780
        %v2807 = vsub.f32 %v2759, %v2782
        %v2808 = vsub.f32 %v2760, %v2784
        %v2809 = vsub.f32 %v2761, %v2786
        %v2810 = vsub.f32 %v2762, %v2788
        %v2811 = vsub.f32 %v2763, %v2790
        %v2812 = vsub.f32 %v2764, %v2792
        %v2813 = vsub.f32 %v2765, %v2794
        %v2814 = vsub.f32 %v2766, %v2796
        %v2815 = vsub.f32 %v2767, %v2798
        %v2816 = vsub.f32 %v2768, %v2800
        %v2817 = vmul.f32 %v2801, 1.442695
        %v2818 = vpow.pop %v2817
        %v2819 = vmul.f32 %v2802, 1.442695
        %v2820 = vpow.pop %v2819
        %v2821 = vmul.f32 %v2803, 1.442695
        %v2822 = vpow.pop %v2821
        %v2823 = vmul.f32 %v2804, 1.442695
        %v2824 = vpow.pop %v2823
        %v2825 = vmul.f32 %v2805, 1.442695
        %v2826 = vpow.pop %v2825
        %v2827 = vmul.f32 %v2806, 1.442695
        %v2828 = vpow.pop %v2827
        %v2829 = vmul.f32 %v2807, 1.442695
        %v2830 = vpow.pop %v2829
        %v2831 = vmul.f32 %v2808, 1.442695
        %v2832 = vpow.pop %v2831
        %v2833 = vmul.f32 %v2809, 1.442695
        %v2834 = vpow.pop %v2833
        %v2835 = vmul.f32 %v2810, 1.442695
        %v2836 = vpow.pop %v2835
        %v2837 = vmul.f32 %v2811, 1.442695
        %v2838 = vpow.pop %v2837
        %v2839 = vmul.f32 %v2812, 1.442695
        %v2840 = vpow.pop %v2839
        %v2841 = vmul.f32 %v2813, 1.442695
        %v2842 = vpow.pop %v2841
        %v2843 = vmul.f32 %v2814, 1.442695
        %v2844 = vpow.pop %v2843
        %v2845 = vmul.f32 %v2815, 1.442695
        %v2846 = vpow.pop %v2845
        %v2847 = vmul.f32 %v2816, 1.442695
        %v2848 = vpow.pop %v2847
        %2849 = vadd.xlane.f32.xlu0 %v2818
        %v2850 = vpop.xlane.xlu0 %2849
        %2851 = vadd.xlane.f32.xlu0 %v2820
        %v2852 = vpop.xlane.xlu0 %2851
        %2853 = vadd.xlane.f32.xlu0 %v2822
        %v2854 = vpop.xlane.xlu0 %2853
        %2855 = vadd.xlane.f32.xlu0 %v2824
        %v2856 = vpop.xlane.xlu0 %2855
        %2857 = vadd.xlane.f32.xlu0 %v2826
        %v2858 = vpop.xlane.xlu0 %2857
        %2859 = vadd.xlane.f32.xlu0 %v2828
        %v2860 = vpop.xlane.xlu0 %2859
        %2861 = vadd.xlane.f32.xlu0 %v2830
        %v2862 = vpop.xlane.xlu0 %2861
        %2863 = vadd.xlane.f32.xlu0 %v2832
        %v2864 = vpop.xlane.xlu0 %2863
        %2865 = vadd.xlane.f32.xlu0 %v2834
        %v2866 = vpop.xlane.xlu0 %2865
        %2867 = vadd.xlane.f32.xlu0 %v2836
        %v2868 = vpop.xlane.xlu0 %2867
        %2869 = vadd.xlane.f32.xlu0 %v2838
        %v2870 = vpop.xlane.xlu0 %2869
        %2871 = vadd.xlane.f32.xlu0 %v2840
        %v2872 = vpop.xlane.xlu0 %2871
        %2873 = vadd.xlane.f32.xlu0 %v2842
        %v2874 = vpop.xlane.xlu0 %2873
        %2875 = vadd.xlane.f32.xlu0 %v2844
        %v2876 = vpop.xlane.xlu0 %2875
        %2877 = vadd.xlane.f32.xlu0 %v2846
        %v2878 = vpop.xlane.xlu0 %2877
        %2879 = vadd.xlane.f32.xlu0 %v2848
        %v2880 = vpop.xlane.xlu0 %2879
        %v2881 = vrcp.pop %v2850
        %v2882 = vrcp.pop %v2852
        %v2883 = vrcp.pop %v2854
        %v2884 = vrcp.pop %v2856
        %v2885 = vrcp.pop %v2858
        %v2886 = vrcp.pop %v2860
        %v2887 = vrcp.pop %v2862
        %v2888 = vrcp.pop %v2864
        %v2889 = vrcp.pop %v2866
        %v2890 = vrcp.pop %v2868
        %v2891 = vrcp.pop %v2870
        %v2892 = vrcp.pop %v2872
        %v2893 = vrcp.pop %v2874
        %v2894 = vrcp.pop %v2876
        %v2895 = vrcp.pop %v2878
        %v2896 = vrcp.pop %v2880
        %v2897 = vmul.f32 %v2881, 0.5
        %v2898 = vmul.f32 %v2882, 0.5
        %v2899 = vmul.f32 %v2883, 0.5
        %v2900 = vmul.f32 %v2884, 0.5
        %v2901 = vmul.f32 %v2885, 0.5
        %v2902 = vmul.f32 %v2886, 0.5
        %v2903 = vmul.f32 %v2887, 0.5
        %v2904 = vmul.f32 %v2888, 0.5
        %v2905 = vmul.f32 %v2889, 0.5
        %v2906 = vmul.f32 %v2890, 0.5
        %v2907 = vmul.f32 %v2891, 0.5
        %v2908 = vmul.f32 %v2892, 0.5
        %v2909 = vmul.f32 %v2893, 0.5
        %v2910 = vmul.f32 %v2894, 0.5
        %v2911 = vmul.f32 %v2895, 0.5
        %v2912 = vmul.f32 %v2896, 0.5
        %v2913 = vmul.f32 %v2818, %v2897
        %v2914 = vmul.f32 %v2820, %v2898
        %v2915 = vmul.f32 %v2822, %v2899
        %v2916 = vmul.f32 %v2824, %v2900
        %v2917 = vmul.f32 %v2826, %v2901
        %v2918 = vmul.f32 %v2828, %v2902
        %v2919 = vmul.f32 %v2830, %v2903
        %v2920 = vmul.f32 %v2832, %v2904
        %v2921 = vmul.f32 %v2834, %v2905
        %v2922 = vmul.f32 %v2836, %v2906
        %v2923 = vmul.f32 %v2838, %v2907
        %v2924 = vmul.f32 %v2840, %v2908
        %v2925 = vmul.f32 %v2842, %v2909
        %v2926 = vmul.f32 %v2844, %v2910
        %v2927 = vmul.f32 %v2846, %v2911
        %v2928 = vmul.f32 %v2848, %v2912
        %v2929 = vpack.c.bf16 %v2737, %v2736
        %v2930 = vpack.c.bf16 %v2914, %v2913
        %v2931 = vpack.c.bf16 %v2739, %v2738
        %v2932 = vpack.c.bf16 %v2916, %v2915
        %v2933 = vpack.c.bf16 %v2741, %v2740
        %v2934 = vpack.c.bf16 %v2918, %v2917
        %v2935 = vpack.c.bf16 %v2743, %v2742
        %v2936 = vpack.c.bf16 %v2920, %v2919
        %v2937 = vpack.c.bf16 %v2745, %v2744
        %v2938 = vpack.c.bf16 %v2922, %v2921
        %v2939 = vpack.c.bf16 %v2747, %v2746
        %v2940 = vpack.c.bf16 %v2924, %v2923
        %v2941 = vpack.c.bf16 %v2749, %v2748
        %v2942 = vpack.c.bf16 %v2926, %v2925
        %v2943 = vpack.c.bf16 %v2751, %v2750
        %v2944 = vpack.c.bf16 %v2928, %v2927
        %2961 = vrot.lane.b32.xlu0 %v840, 96
        %v2962 = vpop.permute.xlu0 %2961
        %2963 = vrot.lane.b32.xlu0 %v843, 96
        %v2964 = vpop.permute.xlu0 %2963
        %2965 = vrot.lane.b32.xlu0 %v848, 96
        %v2966 = vpop.permute.xlu0 %2965
        %2967 = vrot.lane.b32.xlu0 %v851, 96
        %v2968 = vpop.permute.xlu0 %2967
        %2969 = vrot.lane.b32.xlu0 %v856, 96
        %v2970 = vpop.permute.xlu0 %2969
        %2971 = vrot.lane.b32.xlu0 %v859, 96
        %v2972 = vpop.permute.xlu0 %2971
        %2973 = vrot.lane.b32.xlu0 %v864, 96
        %v2974 = vpop.permute.xlu0 %2973
        %2975 = vrot.lane.b32.xlu0 %v867, 96
        %v2976 = vpop.permute.xlu0 %2975
        %2977 = vrot.lane.b32.xlu0 %v872, 96
        %v2978 = vpop.permute.xlu0 %2977
        %2979 = vrot.lane.b32.xlu0 %v875, 96
        %v2980 = vpop.permute.xlu0 %2979
        %2981 = vrot.lane.b32.xlu0 %v880, 96
        %v2982 = vpop.permute.xlu0 %2981
        %2983 = vrot.lane.b32.xlu0 %v883, 96
        %v2984 = vpop.permute.xlu0 %2983
        %2985 = vrot.lane.b32.xlu0 %v888, 96
        %v2986 = vpop.permute.xlu0 %2985
        %2987 = vrot.lane.b32.xlu0 %v891, 96
        %v2988 = vpop.permute.xlu0 %2987
        %2989 = vrot.lane.b32.xlu0 %v896, 96
        %v2990 = vpop.permute.xlu0 %2989
        %2991 = vrot.lane.b32.xlu0 %v899, 96
        %v2992 = vpop.permute.xlu0 %2991
        %v3009 = vpack.c.bf16 %v843, %v840
        %v3010 = vpack.c.bf16 %v851, %v848
        %v3011 = vpack.c.bf16 %v859, %v856
        %v3012 = vpack.c.bf16 %v867, %v864
        %v3013 = vpack.c.bf16 %v875, %v872
        %v3014 = vpack.c.bf16 %v883, %v880
        %v3015 = vpack.c.bf16 %v891, %v888
        %v3016 = vpack.c.bf16 %v899, %v896
        %v3017 = vpack.c.bf16 %v2964, %v2962
        %v3018 = vpack.c.bf16 %v2968, %v2966
        %v3019 = vpack.c.bf16 %v2972, %v2970
        %v3020 = vpack.c.bf16 %v2976, %v2974
        %v3021 = vpack.c.bf16 %v2980, %v2978
        %v3022 = vpack.c.bf16 %v2984, %v2982
        %v3023 = vpack.c.bf16 %v2988, %v2986
        %v3024 = vpack.c.bf16 %v2992, %v2990
        %3025 = vmatprep.subr.bf16.mxu0 0
        %3026 = vmatpush1.bf16.msra.mxu0 %v3009
        %3027 = vmatprep.subr.bf16.mxu0 0
        %3028 = vmatpush1.bf16.msra.mxu0 %v3010
        %3029 = vmatprep.subr.bf16.mxu0 0
        %3030 = vmatpush1.bf16.msra.mxu0 %v3011
        %3031 = vmatprep.subr.bf16.mxu0 0
        %3032 = vmatpush1.bf16.msra.mxu0 %v3012
        %3033 = vmatprep.subr.bf16.mxu0 0
        %3034 = vmatpush1.bf16.msra.mxu0 %v3013
        %3035 = vmatprep.subr.bf16.mxu0 0
        %3036 = vmatpush1.bf16.msra.mxu0 %v3014
        %3037 = vmatprep.subr.bf16.mxu0 0
        %3038 = vmatpush1.bf16.msra.mxu0 %v3015
        %3039 = vmatprep.subr.bf16.mxu0 0
        %3040 = vmatpush1.bf16.msra.mxu0 %v3016
        %3041 = vmatprep.subr.bf16.mxu0 0
        %3042 = vmatpush1.bf16.msra.mxu0 %v3017
        %3043 = vmatprep.subr.bf16.mxu0 0
        %3044 = vmatpush1.bf16.msra.mxu0 %v3018
        %3045 = vmatprep.subr.bf16.mxu0 0
        %3046 = vmatpush1.bf16.msra.mxu0 %v3019
        %3047 = vmatprep.subr.bf16.mxu0 0
        %3048 = vmatpush1.bf16.msra.mxu0 %v3020
        %3049 = vmatprep.subr.bf16.mxu0 0
        %3050 = vmatpush1.bf16.msra.mxu0 %v3021
        %3051 = vmatprep.subr.bf16.mxu0 0
        %3052 = vmatpush1.bf16.msra.mxu0 %v3022
        %3053 = vmatprep.subr.bf16.mxu0 0
        %3054 = vmatpush1.bf16.msra.mxu0 %v3023
        %3055 = vmatprep.subr.bf16.mxu0 0
        %3056 = vmatpush1.bf16.msra.mxu0 %v3024
        %3057 = vmatprep.mubr.bf16.mxu0 %v2930
        %3058 = vmatmul.mubr.bf16.gmra.mrb[0].mxu0 %v2929
        %v3059 = vpop.f32.mrb[0].mxu0
        %v3060 = vadd.f32 0.0, %v3059
        %v3061 = vpop.f32.mrb[0].mxu0
        %v3062 = vpop.f32.mrb[0].mxu0
        %v3063 = vadd.f32 0.0, %v3062
        %v3064 = vpop.f32.mrb[0].mxu0
        %3065 = vmatprep.mubr.bf16.mxu0 %v2932
        %3066 = vmatmul.mubr.bf16.gmra.mrb[0].mxu0 %v2931
        %v3067 = vpop.f32.mrb[0].mxu0
        %v3068 = vadd.f32 0.0, %v3067
        %v3069 = vpop.f32.mrb[0].mxu0
        %v3070 = vpop.f32.mrb[0].mxu0
        %v3071 = vadd.f32 0.0, %v3070
        %v3072 = vpop.f32.mrb[0].mxu0
        %3073 = vmatprep.mubr.bf16.mxu0 %v2934
        %3074 = vmatmul.mubr.bf16.gmra.mrb[0].mxu0 %v2933
        %v3075 = vpop.f32.mrb[0].mxu0
        %v3076 = vadd.f32 0.0, %v3075
        %v3077 = vpop.f32.mrb[0].mxu0
        %v3078 = vpop.f32.mrb[0].mxu0
        %v3079 = vadd.f32 0.0, %v3078
        %v3080 = vpop.f32.mrb[0].mxu0
        %3081 = vmatprep.mubr.bf16.mxu0 %v2936
        %3082 = vmatmul.mubr.bf16.gmra.mrb[0].mxu0 %v2935
        %v3083 = vpop.f32.mrb[0].mxu0
        %v3084 = vadd.f32 0.0, %v3083
        %v3085 = vpop.f32.mrb[0].mxu0
        %v3086 = vpop.f32.mrb[0].mxu0
        %v3087 = vadd.f32 0.0, %v3086
        %v3088 = vpop.f32.mrb[0].mxu0
        %3089 = vmatprep.mubr.bf16.mxu0 %v2938
        %3090 = vmatmul.mubr.bf16.gmra.mrb[0].mxu0 %v2937
        %v3091 = vpop.f32.mrb[0].mxu0
        %v3092 = vadd.f32 0.0, %v3091
        %v3093 = vpop.f32.mrb[0].mxu0
        %v3094 = vpop.f32.mrb[0].mxu0
        %v3095 = vadd.f32 0.0, %v3094
        %v3096 = vpop.f32.mrb[0].mxu0
        %3097 = vmatprep.mubr.bf16.mxu0 %v2940
        %3098 = vmatmul.mubr.bf16.gmra.mrb[0].mxu0 %v2939
        %v3099 = vpop.f32.mrb[0].mxu0
        %v3100 = vadd.f32 0.0, %v3099
        %v3101 = vpop.f32.mrb[0].mxu0
        %v3102 = vpop.f32.mrb[0].mxu0
        %v3103 = vadd.f32 0.0, %v3102
        %v3104 = vpop.f32.mrb[0].mxu0
        %3105 = vmatprep.mubr.bf16.mxu0 %v2942
        %3106 = vmatmul.mubr.bf16.gmra.mrb[0].mxu0 %v2941
        %v3107 = vpop.f32.mrb[0].mxu0
        %v3108 = vadd.f32 0.0, %v3107
        %v3109 = vpop.f32.mrb[0].mxu0
        %v3110 = vpop.f32.mrb[0].mxu0
        %v3111 = vadd.f32 0.0, %v3110
        %v3112 = vpop.f32.mrb[0].mxu0
        %3113 = vmatprep.mubr.bf16.mxu0 %v2944
        %3114 = vmatmul.mubr.bf16.gmra.mrb[0].mxu0 %v2943
        %v3115 = vpop.f32.mrb[0].mxu0
        %v3116 = vadd.f32 0.0, %v3115
        %v3117 = vpop.f32.mrb[0].mxu0
        %v3118 = vpop.f32.mrb[0].mxu0
        %v3119 = vadd.f32 0.0, %v3118
        %v3120 = vpop.f32.mrb[0].mxu0
        %3121 = vdwg.mxu0
        %v3122 = vadd.f32 %v454, %v3060
        %v3123 = vadd.f32 %v455, %v3063
        %v3124 = vadd.f32 %v456, %v3068
        %v3125 = vadd.f32 %v457, %v3071
        %v3126 = vadd.f32 %v458, %v3076
        %v3127 = vadd.f32 %v459, %v3079
        %v3128 = vadd.f32 %v460, %v3084
        %v3129 = vadd.f32 %v461, %v3087
        %v3130 = vadd.f32 %v462, %v3092
        %v3131 = vadd.f32 %v463, %v3095
        %v3132 = vadd.f32 %v464, %v3100
        %v3133 = vadd.f32 %v465, %v3103
        %v3134 = vadd.f32 %v466, %v3108
        %v3135 = vadd.f32 %v467, %v3111
        %v3136 = vadd.f32 %v468, %v3116
        %v3137 = vadd.f32 %v469, %v3119
        %v3138 = vlaneseq
        %v3139 = vshrl.u32 %v3138, 7
        %v3140 = vsub.s32 4, %v3139
        %v3141 = vrot.slane %v470, %v3140
        %v3142 = vadd.f32 %v3122, %v3141
        %v3143 = vadd.f32 %v3123, %v3141
        %v3144 = vadd.f32 %v3124, %v3141
        %v3145 = vadd.f32 %v3125, %v3141
        %v3146 = vadd.f32 %v3126, %v3141
        %v3147 = vadd.f32 %v3127, %v3141
        %v3148 = vadd.f32 %v3128, %v3141
        %v3149 = vadd.f32 %v3129, %v3141
        %v3150 = vadd.f32 %v3130, %v3141
        %v3151 = vadd.f32 %v3131, %v3141
        %v3152 = vadd.f32 %v3132, %v3141
        %v3153 = vadd.f32 %v3133, %v3141
        %v3154 = vadd.f32 %v3134, %v3141
        %v3155 = vadd.f32 %v3135, %v3141
        %v3156 = vadd.f32 %v3136, %v3141
        %v3157 = vadd.f32 %v3137, %v3141
        %v3158 = vsel %vm472, %v3142, 0.0
        %3159 = vadd.xlane.f32.xlu0 %v3158
        %v3160 = vpop.xlane.xlu0 %3159
        %v3161 = vsel %vm472, %v3143, 0.0
        %3162 = vadd.xlane.f32.xlu0 %v3161
        %v3163 = vpop.xlane.xlu0 %3162
        %v3164 = vsel %vm472, %v3144, 0.0
        %3165 = vadd.xlane.f32.xlu0 %v3164
        %v3166 = vpop.xlane.xlu0 %3165
        %v3167 = vsel %vm472, %v3145, 0.0
        %3168 = vadd.xlane.f32.xlu0 %v3167
        %v3169 = vpop.xlane.xlu0 %3168
        %v3170 = vsel %vm472, %v3146, 0.0
        %3171 = vadd.xlane.f32.xlu0 %v3170
        %v3172 = vpop.xlane.xlu0 %3171
        %v3173 = vsel %vm472, %v3147, 0.0
        %3174 = vadd.xlane.f32.xlu0 %v3173
        %v3175 = vpop.xlane.xlu0 %3174
        %v3176 = vsel %vm472, %v3148, 0.0
        %3177 = vadd.xlane.f32.xlu0 %v3176
        %v3178 = vpop.xlane.xlu0 %3177
        %v3179 = vsel %vm472, %v3149, 0.0
        %3180 = vadd.xlane.f32.xlu0 %v3179
        %v3181 = vpop.xlane.xlu0 %3180
        %v3182 = vsel %vm472, %v3150, 0.0
        %3183 = vadd.xlane.f32.xlu0 %v3182
        %v3184 = vpop.xlane.xlu0 %3183
        %v3185 = vsel %vm472, %v3151, 0.0
        %3186 = vadd.xlane.f32.xlu0 %v3185
        %v3187 = vpop.xlane.xlu0 %3186
        %v3188 = vsel %vm472, %v3152, 0.0
        %3189 = vadd.xlane.f32.xlu0 %v3188
        %v3190 = vpop.xlane.xlu0 %3189
        %v3191 = vsel %vm472, %v3153, 0.0
        %3192 = vadd.xlane.f32.xlu0 %v3191
        %v3193 = vpop.xlane.xlu0 %3192
        %v3194 = vsel %vm472, %v3154, 0.0
        %3195 = vadd.xlane.f32.xlu0 %v3194
        %v3196 = vpop.xlane.xlu0 %3195
        %v3197 = vsel %vm472, %v3155, 0.0
        %3198 = vadd.xlane.f32.xlu0 %v3197
        %v3199 = vpop.xlane.xlu0 %3198
        %v3200 = vsel %vm472, %v3156, 0.0
        %3201 = vadd.xlane.f32.xlu0 %v3200
        %v3202 = vpop.xlane.xlu0 %3201
        %v3203 = vsel %vm472, %v3157, 0.0
        %3204 = vadd.xlane.f32.xlu0 %v3203
        %v3205 = vpop.xlane.xlu0 %3204
        %v3206 = vmul.f32 %v3160, 0.03125
        %v3207 = vmul.f32 %v3163, 0.03125
        %v3208 = vmul.f32 %v3166, 0.03125
        %v3209 = vmul.f32 %v3169, 0.03125
        %v3210 = vmul.f32 %v3172, 0.03125
        %v3211 = vmul.f32 %v3175, 0.03125
        %v3212 = vmul.f32 %v3178, 0.03125
        %v3213 = vmul.f32 %v3181, 0.03125
        %v3214 = vmul.f32 %v3184, 0.03125
        %v3215 = vmul.f32 %v3187, 0.03125
        %v3216 = vmul.f32 %v3190, 0.03125
        %v3217 = vmul.f32 %v3193, 0.03125
        %v3218 = vmul.f32 %v3196, 0.03125
        %v3219 = vmul.f32 %v3199, 0.03125
        %v3220 = vmul.f32 %v3202, 0.03125
        %v3221 = vmul.f32 %v3205, 0.03125
        %v3222 = vmul.f32 %v3142, %v3142
        %v3223 = vmul.f32 %v3143, %v3143
        %v3224 = vmul.f32 %v3144, %v3144
        %v3225 = vmul.f32 %v3145, %v3145
        %v3226 = vmul.f32 %v3146, %v3146
        %v3227 = vmul.f32 %v3147, %v3147
        %v3228 = vmul.f32 %v3148, %v3148
        %v3229 = vmul.f32 %v3149, %v3149
        %v3230 = vmul.f32 %v3150, %v3150
        %v3231 = vmul.f32 %v3151, %v3151
        %v3232 = vmul.f32 %v3152, %v3152
        %v3233 = vmul.f32 %v3153, %v3153
        %v3234 = vmul.f32 %v3154, %v3154
        %v3235 = vmul.f32 %v3155, %v3155
        %v3236 = vmul.f32 %v3156, %v3156
        %v3237 = vmul.f32 %v3157, %v3157
        %v3238 = vsel %vm472, %v3222, 0.0
        %3239 = vadd.xlane.f32.xlu0 %v3238
        %v3240 = vpop.xlane.xlu0 %3239
        %v3241 = vsel %vm472, %v3223, 0.0
        %3242 = vadd.xlane.f32.xlu0 %v3241
        %v3243 = vpop.xlane.xlu0 %3242
        %v3244 = vsel %vm472, %v3224, 0.0
        %3245 = vadd.xlane.f32.xlu0 %v3244
        %v3246 = vpop.xlane.xlu0 %3245
        %v3247 = vsel %vm472, %v3225, 0.0
        %3248 = vadd.xlane.f32.xlu0 %v3247
        %v3249 = vpop.xlane.xlu0 %3248
        %v3250 = vsel %vm472, %v3226, 0.0
        %3251 = vadd.xlane.f32.xlu0 %v3250
        %v3252 = vpop.xlane.xlu0 %3251
        %v3253 = vsel %vm472, %v3227, 0.0
        %3254 = vadd.xlane.f32.xlu0 %v3253
        %v3255 = vpop.xlane.xlu0 %3254
        %v3256 = vsel %vm472, %v3228, 0.0
        %3257 = vadd.xlane.f32.xlu0 %v3256
        %v3258 = vpop.xlane.xlu0 %3257
        %v3259 = vsel %vm472, %v3229, 0.0
        %3260 = vadd.xlane.f32.xlu0 %v3259
        %v3261 = vpop.xlane.xlu0 %3260
        %v3262 = vsel %vm472, %v3230, 0.0
        %3263 = vadd.xlane.f32.xlu0 %v3262
        %v3264 = vpop.xlane.xlu0 %3263
        %v3265 = vsel %vm472, %v3231, 0.0
        %3266 = vadd.xlane.f32.xlu0 %v3265
        %v3267 = vpop.xlane.xlu0 %3266
        %v3268 = vsel %vm472, %v3232, 0.0
        %3269 = vadd.xlane.f32.xlu0 %v3268
        %v3270 = vpop.xlane.xlu0 %3269
        %v3271 = vsel %vm472, %v3233, 0.0
        %3272 = vadd.xlane.f32.xlu0 %v3271
        %v3273 = vpop.xlane.xlu0 %3272
        %v3274 = vsel %vm472, %v3234, 0.0
        %3275 = vadd.xlane.f32.xlu0 %v3274
        %v3276 = vpop.xlane.xlu0 %3275
        %v3277 = vsel %vm472, %v3235, 0.0
        %3278 = vadd.xlane.f32.xlu0 %v3277
        %v3279 = vpop.xlane.xlu0 %3278
        %v3280 = vsel %vm472, %v3236, 0.0
        %3281 = vadd.xlane.f32.xlu0 %v3280
        %v3282 = vpop.xlane.xlu0 %3281
        %v3283 = vsel %vm472, %v3237, 0.0
        %3284 = vadd.xlane.f32.xlu0 %v3283
        %v3285 = vpop.xlane.xlu0 %3284
        %v3286 = vmul.f32 %v3240, 0.03125
        %v3287 = vmul.f32 %v3243, 0.03125
        %v3288 = vmul.f32 %v3246, 0.03125
        %v3289 = vmul.f32 %v3249, 0.03125
        %v3290 = vmul.f32 %v3252, 0.03125
        %v3291 = vmul.f32 %v3255, 0.03125
        %v3292 = vmul.f32 %v3258, 0.03125
        %v3293 = vmul.f32 %v3261, 0.03125
        %v3294 = vmul.f32 %v3264, 0.03125
        %v3295 = vmul.f32 %v3267, 0.03125
        %v3296 = vmul.f32 %v3270, 0.03125
        %v3297 = vmul.f32 %v3273, 0.03125
        %v3298 = vmul.f32 %v3276, 0.03125
        %v3299 = vmul.f32 %v3279, 0.03125
        %v3300 = vmul.f32 %v3282, 0.03125
        %v3301 = vmul.f32 %v3285, 0.03125
        %v3302 = vsub.f32 %v3142, %v3206
        %v3303 = vsub.f32 %v3143, %v3207
        %v3304 = vsub.f32 %v3144, %v3208
        %v3305 = vsub.f32 %v3145, %v3209
        %v3306 = vsub.f32 %v3146, %v3210
        %v3307 = vsub.f32 %v3147, %v3211
        %v3308 = vsub.f32 %v3148, %v3212
        %v3309 = vsub.f32 %v3149, %v3213
        %v3310 = vsub.f32 %v3150, %v3214
        %v3311 = vsub.f32 %v3151, %v3215
        %v3312 = vsub.f32 %v3152, %v3216
        %v3313 = vsub.f32 %v3153, %v3217
        %v3314 = vsub.f32 %v3154, %v3218
        %v3315 = vsub.f32 %v3155, %v3219
        %v3316 = vsub.f32 %v3156, %v3220
        %v3317 = vsub.f32 %v3157, %v3221
        %v3318 = vmul.f32 %v3206, %v3206
        %v3319 = vmul.f32 %v3207, %v3207
        %v3320 = vmul.f32 %v3208, %v3208
        %v3321 = vmul.f32 %v3209, %v3209
        %v3322 = vmul.f32 %v3210, %v3210
        %v3323 = vmul.f32 %v3211, %v3211
        %v3324 = vmul.f32 %v3212, %v3212
        %v3325 = vmul.f32 %v3213, %v3213
        %v3326 = vmul.f32 %v3214, %v3214
        %v3327 = vmul.f32 %v3215, %v3215
        %v3328 = vmul.f32 %v3216, %v3216
        %v3329 = vmul.f32 %v3217, %v3217
        %v3330 = vmul.f32 %v3218, %v3218
        %v3331 = vmul.f32 %v3219, %v3219
        %v3332 = vmul.f32 %v3220, %v3220
        %v3333 = vmul.f32 %v3221, %v3221
        %v3334 = vsub.f32 %v3286, %v3318
        %v3335 = vsub.f32 %v3287, %v3319
        %v3336 = vsub.f32 %v3288, %v3320
        %v3337 = vsub.f32 %v3289, %v3321
        %v3338 = vsub.f32 %v3290, %v3322
        %v3339 = vsub.f32 %v3291, %v3323
        %v3340 = vsub.f32 %v3292, %v3324
        %v3341 = vsub.f32 %v3293, %v3325
        %v3342 = vsub.f32 %v3294, %v3326
        %v3343 = vsub.f32 %v3295, %v3327
        %v3344 = vsub.f32 %v3296, %v3328
        %v3345 = vsub.f32 %v3297, %v3329
        %v3346 = vsub.f32 %v3298, %v3330
        %v3347 = vsub.f32 %v3299, %v3331
        %v3348 = vsub.f32 %v3300, %v3332
        %v3349 = vsub.f32 %v3301, %v3333
        %v3350 = vadd.f32 %v3334, 1e-05
        %v3351 = vadd.f32 %v3335, 1e-05
        %v3352 = vadd.f32 %v3336, 1e-05
        %v3353 = vadd.f32 %v3337, 1e-05
        %v3354 = vadd.f32 %v3338, 1e-05
        %v3355 = vadd.f32 %v3339, 1e-05
        %v3356 = vadd.f32 %v3340, 1e-05
        %v3357 = vadd.f32 %v3341, 1e-05
        %v3358 = vadd.f32 %v3342, 1e-05
        %v3359 = vadd.f32 %v3343, 1e-05
        %v3360 = vadd.f32 %v3344, 1e-05
        %v3361 = vadd.f32 %v3345, 1e-05
        %v3362 = vadd.f32 %v3346, 1e-05
        %v3363 = vadd.f32 %v3347, 1e-05
        %v3364 = vadd.f32 %v3348, 1e-05
        %v3365 = vadd.f32 %v3349, 1e-05
        %v3366 = vrsqrt.pop %v3350
        %v3367 = vrsqrt.pop %v3351
        %v3368 = vrsqrt.pop %v3352
        %v3369 = vrsqrt.pop %v3353
        %v3370 = vrsqrt.pop %v3354
        %v3371 = vrsqrt.pop %v3355
        %v3372 = vrsqrt.pop %v3356
        %v3373 = vrsqrt.pop %v3357
        %v3374 = vrsqrt.pop %v3358
        %v3375 = vrsqrt.pop %v3359
        %v3376 = vrsqrt.pop %v3360
        %v3377 = vrsqrt.pop %v3361
        %v3378 = vrsqrt.pop %v3362
        %v3379 = vrsqrt.pop %v3363
        %v3380 = vrsqrt.pop %v3364
        %v3381 = vrsqrt.pop %v3365
        %v3382 = vmul.f32 %v3302, %v3366
        %v3383 = vmul.f32 %v3303, %v3367
        %v3384 = vmul.f32 %v3304, %v3368
        %v3385 = vmul.f32 %v3305, %v3369
        %v3386 = vmul.f32 %v3306, %v3370
        %v3387 = vmul.f32 %v3307, %v3371
        %v3388 = vmul.f32 %v3308, %v3372
        %v3389 = vmul.f32 %v3309, %v3373
        %v3390 = vmul.f32 %v3310, %v3374
        %v3391 = vmul.f32 %v3311, %v3375
        %v3392 = vmul.f32 %v3312, %v3376
        %v3393 = vmul.f32 %v3313, %v3377
        %v3394 = vmul.f32 %v3314, %v3378
        %v3395 = vmul.f32 %v3315, %v3379
        %v3396 = vmul.f32 %v3316, %v3380
        %v3397 = vmul.f32 %v3317, %v3381
        %v3398 = vlaneseq
        %v3399 = vshrl.u32 %v3398, 7
        %v3400 = vsub.s32 5, %v3399
        %v3401 = vrot.slane %v470, %v3400
        %v3402 = vmul.f32 %v3382, %v3401
        %v3403 = vmul.f32 %v3383, %v3401
        %v3404 = vmul.f32 %v3384, %v3401
        %v3405 = vmul.f32 %v3385, %v3401
        %v3406 = vmul.f32 %v3386, %v3401
        %v3407 = vmul.f32 %v3387, %v3401
        %v3408 = vmul.f32 %v3388, %v3401
        %v3409 = vmul.f32 %v3389, %v3401
        %v3410 = vmul.f32 %v3390, %v3401
        %v3411 = vmul.f32 %v3391, %v3401
        %v3412 = vmul.f32 %v3392, %v3401
        %v3413 = vmul.f32 %v3393, %v3401
        %v3414 = vmul.f32 %v3394, %v3401
        %v3415 = vmul.f32 %v3395, %v3401
        %v3416 = vmul.f32 %v3396, %v3401
        %v3417 = vmul.f32 %v3397, %v3401
        %v3418 = vlaneseq
        %v3419 = vshrl.u32 %v3418, 7
        %v3420 = vsub.s32 6, %v3419
        %v3421 = vrot.slane %v470, %v3420
        %v3422 = vadd.f32 %v3402, %v3421
        %v3423 = vadd.f32 %v3403, %v3421
        %v3424 = vadd.f32 %v3404, %v3421
        %v3425 = vadd.f32 %v3405, %v3421
        %v3426 = vadd.f32 %v3406, %v3421
        %v3427 = vadd.f32 %v3407, %v3421
        %v3428 = vadd.f32 %v3408, %v3421
        %v3429 = vadd.f32 %v3409, %v3421
        %v3430 = vadd.f32 %v3410, %v3421
        %v3431 = vadd.f32 %v3411, %v3421
        %v3432 = vadd.f32 %v3412, %v3421
        %v3433 = vadd.f32 %v3413, %v3421
        %v3434 = vadd.f32 %v3414, %v3421
        %v3435 = vadd.f32 %v3415, %v3421
        %v3436 = vadd.f32 %v3416, %v3421
        %v3437 = vadd.f32 %v3417, %v3421
        %v3438 = vpack.c.bf16 %v3423, %v3422
        %v3439 = vpack.c.bf16 %v3425, %v3424
        %v3440 = vpack.c.bf16 %v3427, %v3426
        %v3441 = vpack.c.bf16 %v3429, %v3428
        %v3442 = vpack.c.bf16 %v3431, %v3430
        %v3443 = vpack.c.bf16 %v3433, %v3432
        %v3444 = vpack.c.bf16 %v3435, %v3434
        %v3445 = vpack.c.bf16 %v3437, %v3436
        %v3446 = vld [vmem:[#allocation7] sm:$0xf]
        %v3447 = vld [vmem:[#allocation7 + $0x4] sm:$0xf]
        %v3448 = vld [vmem:[#allocation7 + $0x8] sm:$0xf]
        %v3449 = vld [vmem:[#allocation7 + $0xc] sm:$0xf]
        %v3450 = vlaneseq
        %v3451 = vshrl.u32 %v3450, 7
        %v3452 = vsub.s32 7, %v3451
        %v3453 = vrot.slane %v470, %v3452
        %v3458 = vunpack.c.l.b16 %v3446
        %v3459 = vunpack.c.l.b16 %v3447
        %v3460 = vunpack.c.l.b16 %v3448
        %v3461 = vunpack.c.l.b16 %v3449
        %v3462 = vpack.c.b16 %v3459, %v3458
        %v3463 = vpack.c.b16 %v3461, %v3460
        %v3467 = vsel %vm472, %v3438, 0
        %v3470 = vsel %vm472, %v3439, 0
        %v3473 = vsel %vm472, %v3440, 0
        %v3476 = vsel %vm472, %v3441, 0
        %v3479 = vsel %vm472, %v3442, 0
        %v3482 = vsel %vm472, %v3443, 0
        %v3485 = vsel %vm472, %v3444, 0
        %v3488 = vsel %vm472, %v3445, 0
        %3490 = vmatprep.subr.bf16.mxu0 0
        %3491 = vmatpush1.bf16.msra.mxu0 %v3462
        %3492 = vmatprep.subr.bf16.mxu0 0
        %3493 = vmatpush1.bf16.msra.mxu0 %v3463
        %3494 = vmatprep.subr.bf16.mxu0 0
        %3495 = vmatpush1.bf16.msra.mxu0 0
        %3496 = vmatprep.subr.bf16.mxu0 0
        %3497 = vmatpush1.bf16.msra.mxu0 0
        %3498 = vmatprep.subr.bf16.mxu0 0
        %3499 = vmatpush1.bf16.msra.mxu0 0
        %3500 = vmatprep.subr.bf16.mxu0 0
        %3501 = vmatpush1.bf16.msra.mxu0 0
        %3502 = vmatprep.subr.bf16.mxu0 0
        %3503 = vmatpush1.bf16.msra.mxu0 0
        %3504 = vmatprep.subr.bf16.mxu0 0
        %3505 = vmatpush1.bf16.msra.mxu0 0
        %3506 = vmatprep.subr.bf16.mxu0 0
        %3507 = vmatpush1.bf16.msra.mxu0 0
        %3508 = vmatprep.subr.bf16.mxu0 0
        %3509 = vmatpush1.bf16.msra.mxu0 0
        %3510 = vmatprep.subr.bf16.mxu0 0
        %3511 = vmatpush1.bf16.msra.mxu0 0
        %3512 = vmatprep.subr.bf16.mxu0 0
        %3513 = vmatpush1.bf16.msra.mxu0 0
        %3514 = vmatprep.subr.bf16.mxu0 0
        %3515 = vmatpush1.bf16.msra.mxu0 0
        %3516 = vmatprep.subr.bf16.mxu0 0
        %3517 = vmatpush1.bf16.msra.mxu0 0
        %3518 = vmatprep.subr.bf16.mxu0 0
        %3519 = vmatpush1.bf16.msra.mxu0 0
        %3520 = vmatprep.subr.bf16.mxu0 0
        %3521 = vmatpush1.bf16.msra.mxu0 0
        %3522 = vmatprep.mubr.bf16.mxu0 0
        %3523 = vmatmul.mubr.bf16.gmra.mrb[0].mxu0 %v3467
        %v3524 = vpop.f32.mrb[0].mxu0
        %v3525 = vadd.f32 %v3453, %v3524
        %v3526 = vpop.f32.mrb[0].mxu0
        %v3527 = vpop.f32.mrb[0].mxu0
        %v3528 = vadd.f32 %v3453, %v3527
        %v3529 = vpop.f32.mrb[0].mxu0
        %3530 = vmatprep.mubr.bf16.mxu0 0
        %3531 = vmatmul.mubr.bf16.gmra.mrb[0].mxu0 %v3470
        %v3532 = vpop.f32.mrb[0].mxu0
        %v3533 = vadd.f32 %v3453, %v3532
        %v3534 = vpop.f32.mrb[0].mxu0
        %v3535 = vpop.f32.mrb[0].mxu0
        %v3536 = vadd.f32 %v3453, %v3535
        %v3537 = vpop.f32.mrb[0].mxu0
        %3538 = vmatprep.mubr.bf16.mxu0 0
        %3539 = vmatmul.mubr.bf16.gmra.mrb[0].mxu0 %v3473
        %v3540 = vpop.f32.mrb[0].mxu0
        %v3541 = vadd.f32 %v3453, %v3540
        %v3542 = vpop.f32.mrb[0].mxu0
        %v3543 = vpop.f32.mrb[0].mxu0
        %v3544 = vadd.f32 %v3453, %v3543
        %v3545 = vpop.f32.mrb[0].mxu0
        %3546 = vmatprep.mubr.bf16.mxu0 0
        %3547 = vmatmul.mubr.bf16.gmra.mrb[0].mxu0 %v3476
        %v3548 = vpop.f32.mrb[0].mxu0
        %v3549 = vadd.f32 %v3453, %v3548
        %v3550 = vpop.f32.mrb[0].mxu0
        %v3551 = vpop.f32.mrb[0].mxu0
        %v3552 = vadd.f32 %v3453, %v3551
        %v3553 = vpop.f32.mrb[0].mxu0
        %3554 = vmatprep.mubr.bf16.mxu0 0
        %3555 = vmatmul.mubr.bf16.gmra.mrb[0].mxu0 %v3479
        %v3556 = vpop.f32.mrb[0].mxu0
        %v3557 = vadd.f32 %v3453, %v3556
        %v3558 = vpop.f32.mrb[0].mxu0
        %v3559 = vpop.f32.mrb[0].mxu0
        %v3560 = vadd.f32 %v3453, %v3559
        %v3561 = vpop.f32.mrb[0].mxu0
        %3562 = vmatprep.mubr.bf16.mxu0 0
        %3563 = vmatmul.mubr.bf16.gmra.mrb[0].mxu0 %v3482
        %v3564 = vpop.f32.mrb[0].mxu0
        %v3565 = vadd.f32 %v3453, %v3564
        %v3566 = vpop.f32.mrb[0].mxu0
        %v3567 = vpop.f32.mrb[0].mxu0
        %v3568 = vadd.f32 %v3453, %v3567
        %v3569 = vpop.f32.mrb[0].mxu0
        %3570 = vmatprep.mubr.bf16.mxu0 0
        %3571 = vmatmul.mubr.bf16.gmra.mrb[0].mxu0 %v3485
        %v3572 = vpop.f32.mrb[0].mxu0
        %v3573 = vadd.f32 %v3453, %v3572
        %v3574 = vpop.f32.mrb[0].mxu0
        %v3575 = vpop.f32.mrb[0].mxu0
        %v3576 = vadd.f32 %v3453, %v3575
        %v3577 = vpop.f32.mrb[0].mxu0
        %3578 = vmatprep.mubr.bf16.mxu0 0
        %3579 = vmatmul.mubr.bf16.gmra.mrb[0].mxu0 %v3488
        %v3580 = vpop.f32.mrb[0].mxu0
        %v3581 = vadd.f32 %v3453, %v3580
        %v3582 = vpop.f32.mrb[0].mxu0
        %v3583 = vpop.f32.mrb[0].mxu0
        %v3584 = vadd.f32 %v3453, %v3583
        %v3585 = vpop.f32.mrb[0].mxu0
        %3586 = vdwg.mxu0
        %v3587 = vmul.f32 %v3525, 0.5
        %v3588 = vmul.f32 %v3528, 0.5
        %v3589 = vmul.f32 %v3533, 0.5
        %v3590 = vmul.f32 %v3536, 0.5
        %v3591 = vmul.f32 %v3541, 0.5
        %v3592 = vmul.f32 %v3544, 0.5
        %v3593 = vmul.f32 %v3549, 0.5
        %v3594 = vmul.f32 %v3552, 0.5
        %v3595 = vmul.f32 %v3557, 0.5
        %v3596 = vmul.f32 %v3560, 0.5
        %v3597 = vmul.f32 %v3565, 0.5
        %v3598 = vmul.f32 %v3568, 0.5
        %v3599 = vmul.f32 %v3573, 0.5
        %v3600 = vmul.f32 %v3576, 0.5
        %v3601 = vmul.f32 %v3581, 0.5
        %v3602 = vmul.f32 %v3584, 0.5
        %v3603 = vmul.f32 %v3525, 0.70710677
        %v3604 = vmul.f32 %v3528, 0.70710677
        %v3605 = vmul.f32 %v3533, 0.70710677
        %v3606 = vmul.f32 %v3536, 0.70710677
        %v3607 = vmul.f32 %v3541, 0.70710677
        %v3608 = vmul.f32 %v3544, 0.70710677
        %v3609 = vmul.f32 %v3549, 0.70710677
        %v3610 = vmul.f32 %v3552, 0.70710677
        %v3611 = vmul.f32 %v3557, 0.70710677
        %v3612 = vmul.f32 %v3560, 0.70710677
        %v3613 = vmul.f32 %v3565, 0.70710677
        %v3614 = vmul.f32 %v3568, 0.70710677
        %v3615 = vmul.f32 %v3573, 0.70710677
        %v3616 = vmul.f32 %v3576, 0.70710677
        %v3617 = vmul.f32 %v3581, 0.70710677
        %v3618 = vmul.f32 %v3584, 0.70710677
        %v3619 = verf.f32.pop %v3603
        %v3620 = verf.f32.pop %v3604
        %v3621 = verf.f32.pop %v3605
        %v3622 = verf.f32.pop %v3606
        %v3623 = verf.f32.pop %v3607
        %v3624 = verf.f32.pop %v3608
        %v3625 = verf.f32.pop %v3609
        %v3626 = verf.f32.pop %v3610
        %v3627 = verf.f32.pop %v3611
        %v3628 = verf.f32.pop %v3612
        %v3629 = verf.f32.pop %v3613
        %v3630 = verf.f32.pop %v3614
        %v3631 = verf.f32.pop %v3615
        %v3632 = verf.f32.pop %v3616
        %v3633 = verf.f32.pop %v3617
        %v3634 = verf.f32.pop %v3618
        %v3635 = vadd.f32 %v3619, 1.0
        %v3636 = vadd.f32 %v3620, 1.0
        %v3637 = vadd.f32 %v3621, 1.0
        %v3638 = vadd.f32 %v3622, 1.0
        %v3639 = vadd.f32 %v3623, 1.0
        %v3640 = vadd.f32 %v3624, 1.0
        %v3641 = vadd.f32 %v3625, 1.0
        %v3642 = vadd.f32 %v3626, 1.0
        %v3643 = vadd.f32 %v3627, 1.0
        %v3644 = vadd.f32 %v3628, 1.0
        %v3645 = vadd.f32 %v3629, 1.0
        %v3646 = vadd.f32 %v3630, 1.0
        %v3647 = vadd.f32 %v3631, 1.0
        %v3648 = vadd.f32 %v3632, 1.0
        %v3649 = vadd.f32 %v3633, 1.0
        %v3650 = vadd.f32 %v3634, 1.0
        %v3651 = vmul.f32 %v3587, %v3635
        %v3652 = vmul.f32 %v3588, %v3636
        %v3653 = vmul.f32 %v3589, %v3637
        %v3654 = vmul.f32 %v3590, %v3638
        %v3655 = vmul.f32 %v3591, %v3639
        %v3656 = vmul.f32 %v3592, %v3640
        %v3657 = vmul.f32 %v3593, %v3641
        %v3658 = vmul.f32 %v3594, %v3642
        %v3659 = vmul.f32 %v3595, %v3643
        %v3660 = vmul.f32 %v3596, %v3644
        %v3661 = vmul.f32 %v3597, %v3645
        %v3662 = vmul.f32 %v3598, %v3646
        %v3663 = vmul.f32 %v3599, %v3647
        %v3664 = vmul.f32 %v3600, %v3648
        %v3665 = vmul.f32 %v3601, %v3649
        %v3666 = vmul.f32 %v3602, %v3650
        %v3667 = vpack.c.bf16 %v3652, %v3651
        %v3668 = vpack.c.bf16 %v3654, %v3653
        %v3669 = vpack.c.bf16 %v3656, %v3655
        %v3670 = vpack.c.bf16 %v3658, %v3657
        %v3671 = vpack.c.bf16 %v3660, %v3659
        %v3672 = vpack.c.bf16 %v3662, %v3661
        %v3673 = vpack.c.bf16 %v3664, %v3663
        %v3674 = vpack.c.bf16 %v3666, %v3665
        %v3675 = vlaneseq
        %v3676 = vshrl.u32 %v3675, 7
        %v3677 = vsub.s32 0, %v3676
        %v3678 = vrot.slane %v471, %v3677
        %3679 = vrot.lane.b32.xlu0 %v3462, 96
        %v3680 = vpop.permute.xlu0 %3679
        %3681 = vrot.lane.b32.xlu0 %v3463, 96
        %v3682 = vpop.permute.xlu0 %3681
        %v3686 = vsel %vm472, %v3667, 0
        %v3689 = vsel %vm472, %v3668, 0
        %v3692 = vsel %vm472, %v3669, 0
        %v3695 = vsel %vm472, %v3670, 0
        %v3698 = vsel %vm472, %v3671, 0
        %v3701 = vsel %vm472, %v3672, 0
        %v3704 = vsel %vm472, %v3673, 0
        %v3707 = vsel %vm472, %v3674, 0
        %3709 = vmatprep.subr.bf16.mxu0 0
        %3710 = vmatpush1.bf16.msra.mxu0 %v3680
        %3711 = vmatprep.subr.bf16.mxu0 0
        %3712 = vmatpush1.bf16.msra.mxu0 %v3682
        %3713 = vmatprep.subr.bf16.mxu0 0
        %3714 = vmatpush1.bf16.msra.mxu0 0
        %3715 = vmatprep.subr.bf16.mxu0 0
        %3716 = vmatpush1.bf16.msra.mxu0 0
        %3717 = vmatprep.subr.bf16.mxu0 0
        %3718 = vmatpush1.bf16.msra.mxu0 0
        %3719 = vmatprep.subr.bf16.mxu0 0
        %3720 = vmatpush1.bf16.msra.mxu0 0
        %3721 = vmatprep.subr.bf16.mxu0 0
        %3722 = vmatpush1.bf16.msra.mxu0 0
        %3723 = vmatprep.subr.bf16.mxu0 0
        %3724 = vmatpush1.bf16.msra.mxu0 0
        %3725 = vmatprep.subr.bf16.mxu0 0
        %3726 = vmatpush1.bf16.msra.mxu0 0
        %3727 = vmatprep.subr.bf16.mxu0 0
        %3728 = vmatpush1.bf16.msra.mxu0 0
        %3729 = vmatprep.subr.bf16.mxu0 0
        %3730 = vmatpush1.bf16.msra.mxu0 0
        %3731 = vmatprep.subr.bf16.mxu0 0
        %3732 = vmatpush1.bf16.msra.mxu0 0
        %3733 = vmatprep.subr.bf16.mxu0 0
        %3734 = vmatpush1.bf16.msra.mxu0 0
        %3735 = vmatprep.subr.bf16.mxu0 0
        %3736 = vmatpush1.bf16.msra.mxu0 0
        %3737 = vmatprep.subr.bf16.mxu0 0
        %3738 = vmatpush1.bf16.msra.mxu0 0
        %3739 = vmatprep.subr.bf16.mxu0 0
        %3740 = vmatpush1.bf16.msra.mxu0 0
        %3741 = vmatprep.mubr.bf16.mxu0 0
        %3742 = vmatmul.mubr.bf16.gmra.mrb[0].mxu0 %v3686
        %v3743 = vpop.f32.mrb[0].mxu0
        %v3744 = vadd.f32 %v3678, %v3743
        %v3745 = vpop.f32.mrb[0].mxu0
        %v3746 = vpop.f32.mrb[0].mxu0
        %v3747 = vadd.f32 %v3678, %v3746
        %v3748 = vpop.f32.mrb[0].mxu0
        %3749 = vmatprep.mubr.bf16.mxu0 0
        %3750 = vmatmul.mubr.bf16.gmra.mrb[0].mxu0 %v3689
        %v3751 = vpop.f32.mrb[0].mxu0
        %v3752 = vadd.f32 %v3678, %v3751
        %v3753 = vpop.f32.mrb[0].mxu0
        %v3754 = vpop.f32.mrb[0].mxu0
        %v3755 = vadd.f32 %v3678, %v3754
        %v3756 = vpop.f32.mrb[0].mxu0
        %3757 = vmatprep.mubr.bf16.mxu0 0
        %3758 = vmatmul.mubr.bf16.gmra.mrb[0].mxu0 %v3692
        %v3759 = vpop.f32.mrb[0].mxu0
        %v3760 = vadd.f32 %v3678, %v3759
        %v3761 = vpop.f32.mrb[0].mxu0
        %v3762 = vpop.f32.mrb[0].mxu0
        %v3763 = vadd.f32 %v3678, %v3762
        %v3764 = vpop.f32.mrb[0].mxu0
        %3765 = vmatprep.mubr.bf16.mxu0 0
        %3766 = vmatmul.mubr.bf16.gmra.mrb[0].mxu0 %v3695
        %v3767 = vpop.f32.mrb[0].mxu0
        %v3768 = vadd.f32 %v3678, %v3767
        %v3769 = vpop.f32.mrb[0].mxu0
        %v3770 = vpop.f32.mrb[0].mxu0
        %v3771 = vadd.f32 %v3678, %v3770
        %v3772 = vpop.f32.mrb[0].mxu0
        %3773 = vmatprep.mubr.bf16.mxu0 0
        %3774 = vmatmul.mubr.bf16.gmra.mrb[0].mxu0 %v3698
        %v3775 = vpop.f32.mrb[0].mxu0
        %v3776 = vadd.f32 %v3678, %v3775
        %v3777 = vpop.f32.mrb[0].mxu0
        %v3778 = vpop.f32.mrb[0].mxu0
        %v3779 = vadd.f32 %v3678, %v3778
        %v3780 = vpop.f32.mrb[0].mxu0
        %3781 = vmatprep.mubr.bf16.mxu0 0
        %3782 = vmatmul.mubr.bf16.gmra.mrb[0].mxu0 %v3701
        %v3783 = vpop.f32.mrb[0].mxu0
        %v3784 = vadd.f32 %v3678, %v3783
        %v3785 = vpop.f32.mrb[0].mxu0
        %v3786 = vpop.f32.mrb[0].mxu0
        %v3787 = vadd.f32 %v3678, %v3786
        %v3788 = vpop.f32.mrb[0].mxu0
        %3789 = vmatprep.mubr.bf16.mxu0 0
        %3790 = vmatmul.mubr.bf16.gmra.mrb[0].mxu0 %v3704
        %v3791 = vpop.f32.mrb[0].mxu0
        %v3792 = vadd.f32 %v3678, %v3791
        %v3793 = vpop.f32.mrb[0].mxu0
        %v3794 = vpop.f32.mrb[0].mxu0
        %v3795 = vadd.f32 %v3678, %v3794
        %v3796 = vpop.f32.mrb[0].mxu0
        %3797 = vmatprep.mubr.bf16.mxu0 0
        %3798 = vmatmul.mubr.bf16.gmra.mrb[0].mxu0 %v3707
        %v3799 = vpop.f32.mrb[0].mxu0
        %v3800 = vadd.f32 %v3678, %v3799
        %v3801 = vpop.f32.mrb[0].mxu0
        %v3802 = vpop.f32.mrb[0].mxu0
        %v3803 = vadd.f32 %v3678, %v3802
        %v3804 = vpop.f32.mrb[0].mxu0
        %3805 = vdwg.mxu0
        %v3806 = vadd.f32 %v3142, %v3744
        %v3807 = vadd.f32 %v3143, %v3747
        %v3808 = vadd.f32 %v3144, %v3752
        %v3809 = vadd.f32 %v3145, %v3755
        %v3810 = vadd.f32 %v3146, %v3760
        %v3811 = vadd.f32 %v3147, %v3763
        %v3812 = vadd.f32 %v3148, %v3768
        %v3813 = vadd.f32 %v3149, %v3771
        %v3814 = vadd.f32 %v3150, %v3776
        %v3815 = vadd.f32 %v3151, %v3779
        %v3816 = vadd.f32 %v3152, %v3784
        %v3817 = vadd.f32 %v3153, %v3787
        %v3818 = vadd.f32 %v3154, %v3792
        %v3819 = vadd.f32 %v3155, %v3795
        %v3820 = vadd.f32 %v3156, %v3800
        %v3821 = vadd.f32 %v3157, %v3803
        %3822 = vst.msk [vmem:[%s451] sm:$0xff] %vm472, %v3806
        %3823 = vst.msk [vmem:[%s451 + $0x8] sm:$0xff] %vm472, %v3807
        %3824 = vst.msk [vmem:[%s451 + $0x10] sm:$0xff] %vm472, %v3808
        %3825 = vst.msk [vmem:[%s451 + $0x18] sm:$0xff] %vm472, %v3809
        %3826 = vst.msk [vmem:[%s451 + $0x20] sm:$0xff] %vm472, %v3810
        %3827 = vst.msk [vmem:[%s451 + $0x28] sm:$0xff] %vm472, %v3811
        %3828 = vst.msk [vmem:[%s451 + $0x30] sm:$0xff] %vm472, %v3812
        %3829 = vst.msk [vmem:[%s451 + $0x38] sm:$0xff] %vm472, %v3813
        %3830 = vst.msk [vmem:[%s451 + $0x40] sm:$0xff] %vm472, %v3814
        %3831 = vst.msk [vmem:[%s451 + $0x48] sm:$0xff] %vm472, %v3815
        %3832 = vst.msk [vmem:[%s451 + $0x50] sm:$0xff] %vm472, %v3816
        %3833 = vst.msk [vmem:[%s451 + $0x58] sm:$0xff] %vm472, %v3817
        %3834 = vst.msk [vmem:[%s451 + $0x60] sm:$0xff] %vm472, %v3818
        %3835 = vst.msk [vmem:[%s451 + $0x68] sm:$0xff] %vm472, %v3819
        %3836 = vst.msk [vmem:[%s451 + $0x70] sm:$0xff] %vm472, %v3820
        %3837 = vst.msk [vmem:[%s451 + $0x78] sm:$0xff] %vm472, %v3821
        %s3838 = smul.u32 16, %s27
        %p3839 = scmp.lt.s32.totalorder %s3838, 63
        %s3840 = scalar_select %p3839, %s3838, 63
        %s3841 = smul.addr %s3840, 8
        %s3842 = scalar_lea.vmem %s9, %s3841
        // Predicated region
        $region77: #{tpu_custom_call.1} parent=55 // pred_check
          %p3843 = pneg %p249
        $region78: #{tpu_custom_call.1} parent=55 // pred_check_branch
          %3845 = sbr.rel (%p3843) target = $region80
        $region79: #{tpu_custom_call.1} parent=55 // pred_region
          %s3846 = smul.u32 16, %s27
        $region80: #{tpu_custom_call.1} parent=55 // pred_fallthru
          _
      $region56: #{tpu_custom_call.1} parent=5 // pred_fallthru
        _
      %p3847 = scmp.le.s32.totalorder 2, %s22
      // Predicated region
      $region81: #{tpu_custom_call.1} parent=5 // pred_check
        %p3848 = pneg %p3847
      $region82: #{tpu_custom_call.1} parent=5 // pred_check_branch
        %3850 = sbr.rel (%p3848) target = $region84
      $region83: #{tpu_custom_call.1} parent=5 // pred_region
        %s3851 = ssub.s32 %s22, 2
        // Predicated region
        $region85: #{tpu_custom_call.1} parent=83 // pred_check
          %p3852 = pneg %p255
        $region86: #{tpu_custom_call.1} parent=83 // pred_check_branch
          %3854 = sbr.rel (%p3852) target = $region88
        $region87: #{tpu_custom_call.1} parent=83 // pred_region
          %s3855 = smul.u32 16, %s28
          %p3856 = scmp.lt.s32.totalorder %s3855, 63
          %s3857 = scalar_select %p3856, %s3855, 63
          %s3858 = smul.addr %s3857, 8
          %s3859 = scalar_lea.vmem %s9, %s3858
        $region88: #{tpu_custom_call.1} parent=83 // pred_fallthru
          _
      $region84: #{tpu_custom_call.1} parent=5 // pred_fallthru
        _
    $region6: #{tpu_custom_call.1} parent=1 // loop_footer
      %s26 = sadd.s32 1, %s22
    $region7: #{tpu_custom_call.1} parent=1 // loop_footer_branch
      %21 = sbr.rel target = $region3
    $region8: #{tpu_custom_call.1} parent=1 // loop_exit
      _
    %3860 = vsyncpa [#allocation4], 1
    %s3861 = scalar_lea.sflag [#allocation4], 1
    %3862 = vsyncpa %s3861, 1
    %3863 = vsyncpa [#allocation6], 1
    %s3864 = scalar_lea.sflag [#allocation6], 1
    %3865 = vsyncpa %s3864, 1
    %3866 = vsyncpa [#allocation9], 1

</llo_original>
